<compile_context>
chip_gen: v6e
topology: v6e:2x2x1
jax: 0.10.0
libtpu: 0.0.40
codegen_flags: <defaults>
</compile_context>

<pallas_src>
import functools

import jax
import jax.numpy as jnp
from jax.experimental import pallas as pl
from jax.experimental.pallas import tpu as pltpu

EPS = 1e-5


def _round_up(x, m):
    return (x + m - 1) // m * m


def _double_conv_kernel(idx_ref, x_ref, w1_ref, s1_ref, b1_ref, w2_ref, s2_ref,
                        b2_ref, o_ref, col1_ref, col2_ref, *, D, H, W):
    """Fused (conv3d 3x3x3 + BN(eval) + ReLU) x 2 for one batch item.

    Layouts (all channels-first, lane-dense, P = D*H*W):
      idx_ref:  (3, P) int32        rows = [d_idx, h_idx, w_idx] per flat pos
      x_ref:    (1, Cp, P)          input, channels zero-padded to Cp (8k)
      w1_ref:   (C1p, 27*Cp)        conv1 weights, tap-major / channel-minor K
      s1_ref:   (C1p, 1) f32        BN1 scale  (gamma / sqrt(var + eps))
      b1_ref:   (C1p, 1) f32        BN1 folded bias
      w2_ref:   (C2p, 27*C1p)
      s2_ref:   (C2p, 1) f32
      b2_ref:   (C2p, 1) f32
      o_ref:    (1, C2p, P)         lane-dense output
      col1_ref: (27*Cp,  P)         VMEM im2col scratch, stage 1
      col2_ref: (27*C1p, P)         VMEM im2col scratch, stage 2
    """
    P = D * H * W
    HW = H * W
    Cp = x_ref.shape[1]
    C1p = w1_ref.shape[0]

    # Per-axis boundary-validity masks over the flat spatial index (None means
    # "always valid" for the centered tap along that axis).
    d_idx = idx_ref[0:1, :]
    h_idx = idx_ref[1:2, :]
    w_idx = idx_ref[2:3, :]
    m_d = (d_idx > 0, None, d_idx < D - 1)   # kd = 0, 1, 2
    m_h = (h_idx > 0, None, h_idx < H - 1)
    m_w = (w_idx > 0, None, w_idx < W - 1)

    def _and(a, b):
        if a is None:
            return b
        if b is None:
            return a
        return jnp.logical_and(a, b)

    def fill_cols(col_ref, src, c):
        """Write 27 shifted+masked taps of src (c, P) into col_ref (27*c, P)."""
        zero = jnp.zeros_like(src)
        t = 0
        for kd in range(3):
            for kh in range(3):
                for kw in range(3):
                    s = (kd - 1) * HW + (kh - 1) * W + (kw - 1)
                    rolled = src if s == 0 else pltpu.roll(src, (-s) % P, 1)
                    mask = _and(_and(m_d[kd], m_h[kh]), m_w[kw])
                    tap = rolled if mask is None else jnp.where(mask, rolled, zero)
                    col_ref[t * c:(t + 1) * c, :] = tap
                    t += 1

    # ---------------- stage 1: conv1 + BN1 + ReLU (stays in VMEM) -----------
    fill_cols(col1_ref, x_ref[0], Cp)
    acc1 = jnp.dot(w1_ref[...], col1_ref[...],
                   preferred_element_type=jnp.float32)            # (C1p, P) f32
    y1 = jnp.maximum(acc1 * s1_ref[...] + b1_ref[...], 0.0)

    # ---------------- stage 2: conv2 + BN2 + ReLU, lane-dense output --------
    fill_cols(col2_ref, y1.astype(col2_ref.dtype), C1p)
    acc2 = jnp.dot(w2_ref[...], col2_ref[...],
                   preferred_element_type=jnp.float32)            # (C2p, P) f32
    y2 = jnp.maximum(acc2 * s2_ref[...] + b2_ref[...], 0.0)
    o_ref[0] = y2.astype(o_ref.dtype)


def _fold_bn(conv_bias, gamma, beta, mean, var):
    scale = gamma / jnp.sqrt(var + EPS)
    bias = beta + (conv_bias - mean) * scale
    return scale, bias


def _prep_w(w, cin_p, cout_p, dtype):
    """(O, I, 3, 3, 3) -> (cout_p, 27*cin_p): tap-major, channel-minor K."""
    O, I = w.shape[0], w.shape[1]
    wt = jnp.transpose(w, (0, 2, 3, 4, 1)).reshape(O, 27, I)
    wt = jnp.pad(wt, ((0, cout_p - O), (0, 0), (0, cin_p - I)))
    return wt.reshape(cout_p, 27 * cin_p).astype(dtype)


def _prep_sb(vec, cout_p):
    return jnp.pad(vec, (0, cout_p - vec.shape[0])).reshape(cout_p, 1).astype(
        jnp.float32)


def double_conv(x_ncdhw, p, *, compute_dtype=jnp.bfloat16):
    """Forward of DoubleConv (eval-mode BN). Input/output in PyTorch NCDHW."""
    N, Cin, D, H, W = x_ncdhw.shape
    C1 = p["w1"].shape[0]
    C2 = p["w2"].shape[0]
    P = D * H * W

    Cp = _round_up(Cin, 8)
    C1p = _round_up(C1, 8)
    C2p = _round_up(C2, 8)

    s1, b1 = _fold_bn(p["b1"], p["g1"], p["be1"], p["m1"], p["v1"])
    s2, b2 = _fold_bn(p["b2"], p["g2"], p["be2"], p["m2"], p["v2"])

    w1t = _prep_w(p["w1"], Cp, C1p, compute_dtype)    # (C1p, 27*Cp)
    w2t = _prep_w(p["w2"], C1p, C2p, compute_dtype)   # (C2p, 27*C1p)
    s1 = _prep_sb(s1, C1p)
    b1 = _prep_sb(b1, C1p)
    s2 = _prep_sb(s2, C2p)
    b2 = _prep_sb(b2, C2p)

    # NCDHW -> (N, C, P) is a free reshape (no transpose HBM pass); the channel
    # zero-pad + compute-dtype cast is one tiny fused wrapper op.
    x_prep = x_ncdhw.reshape(N, Cin, P)
    if Cp != Cin:
        x_prep = jnp.pad(x_prep, ((0, 0), (0, Cp - Cin), (0, 0)))
    x_prep = x_prep.astype(compute_dtype)

    # Flat-position -> (d, h, w) index table, computed once outside the kernel.
    pos = jnp.arange(P, dtype=jnp.int32)
    spatial_idx = jnp.stack(
        [pos // (H * W), (pos // W) % H, pos % W]).astype(jnp.int32)   # (3, P)

    kernel = functools.partial(_double_conv_kernel, D=D, H=H, W=W)
    itemsize = jnp.dtype(compute_dtype).itemsize
    cost = pl.CostEstimate(
        flops=2 * N * P * 27 * (Cp * C1p + C1p * C2p),
        transcendentals=0,
        bytes_accessed=int(x_prep.size * itemsize
                           + (w1t.size + w2t.size) * itemsize
                           + N * C2p * P * jnp.dtype(x_ncdhw.dtype).itemsize))

    out = pl.pallas_call(
        kernel,
        out_shape=jax.ShapeDtypeStruct((N, C2p, P), x_ncdhw.dtype),
        grid_spec=pltpu.PrefetchScalarGridSpec(
            num_scalar_prefetch=0,
            grid=(N,),
            in_specs=[
                pl.BlockSpec((3, P), lambda n: (0, 0)),
                pl.BlockSpec((1, Cp, P), lambda n: (n, 0, 0)),
                pl.BlockSpec((C1p, 27 * Cp), lambda n: (0, 0)),
                pl.BlockSpec((C1p, 1), lambda n: (0, 0)),
                pl.BlockSpec((C1p, 1), lambda n: (0, 0)),
                pl.BlockSpec((C2p, 27 * C1p), lambda n: (0, 0)),
                pl.BlockSpec((C2p, 1), lambda n: (0, 0)),
                pl.BlockSpec((C2p, 1), lambda n: (0, 0)),
            ],
            out_specs=pl.BlockSpec((1, C2p, P), lambda n: (n, 0, 0)),
            scratch_shapes=[
                pltpu.VMEM((27 * Cp, P), compute_dtype),
                pltpu.VMEM((27 * C1p, P), compute_dtype),
            ],
        ),
        compiler_params=pltpu.CompilerParams(
            dimension_semantics=("parallel",),
            vmem_limit_bytes=32 * 1024 * 1024),
        cost_estimate=cost,
    )(spatial_idx, x_prep, w1t, s1, b1, w2t, s2, b2)

    if C2p != C2:
        out = out[:, :C2, :]
    return out.reshape(N, C2, D, H, W)        # free reshape back to NCDHW


# ------------------------- pure-JAX reference -------------------------------
def _ref_block(x, w, b, g, be, m, v):
    y = jax.lax.conv_general_dilated(
        x, w, window_strides=(1, 1, 1),
        padding=((1, 1), (1, 1), (1, 1)),
        dimension_numbers=("NCDHW", "OIDHW", "NCDHW"))
    y = y + b[None, :, None, None, None]
    y = (y - m[None, :, None, None, None]) / jnp.sqrt(
        v[None, :, None, None, None] + EPS)
    y = y * g[None, :, None, None, None] + be[None, :, None, None, None]
    return jnp.maximum(y, 0.0)


def double_conv_ref(x_ncdhw, p):
    y = _ref_block(x_ncdhw, p["w1"], p["b1"], p["g1"], p["be1"], p["m1"], p["v1"])
    return _ref_block(y, p["w2"], p["b2"], p["g2"], p["be2"], p["m2"], p["v2"])


# ------------------------------- main ----------------------------------------
if __name__ == "__main__":
    N, inc, outc = 2, 4, 8
    midc = outc
    D = H = W = 8

    keys = jax.random.split(jax.random.PRNGKey(0), 14)
    x = jax.random.normal(keys[0], (N, inc, D, H, W), jnp.float32)

    params = dict(
        # Conv3d(inc, midc, 3,3,3) + BatchNorm3d(midc)
        w1=0.1 * jax.random.normal(keys[1], (midc, inc, 3, 3, 3), jnp.float32),
        b1=0.1 * jax.random.normal(keys[2], (midc,), jnp.float32),
        g1=1.0 + 0.1 * jax.random.normal(keys[3], (midc,), jnp.float32),
        be1=0.1 * jax.random.normal(keys[4], (midc,), jnp.float32),
        m1=0.1 * jax.random.normal(keys[5], (midc,), jnp.float32),
        v1=0.5 + jnp.abs(jax.random.normal(keys[6], (midc,), jnp.float32)),
        # Conv3d(midc, outc, 3,3,3) + BatchNorm3d(outc)
        w2=0.1 * jax.random.normal(keys[7], (outc, midc, 3, 3, 3), jnp.float32),
        b2=0.1 * jax.random.normal(keys[8], (outc,), jnp.float32),
        g2=1.0 + 0.1 * jax.random.normal(keys[9], (outc,), jnp.float32),
        be2=0.1 * jax.random.normal(keys[10], (outc,), jnp.float32),
        m2=0.1 * jax.random.normal(keys[11], (outc,), jnp.float32),
        v2=0.5 + jnp.abs(jax.random.normal(keys[12], (outc,), jnp.float32)),
    )

    ref = jax.block_until_ready(double_conv_ref(x, params))

    # f32-operand path: strict check of the kernel's math.
    out_f32 = jax.block_until_ready(
        double_conv(x, params, compute_dtype=jnp.float32))
    assert out_f32.shape == (N, outc, D, H, W), out_f32.shape
    err_f32 = float(jnp.max(jnp.abs(out_f32 - ref)))
    assert err_f32 < 1e-3, err_f32

    # Default bf16-operand path (f32 MXU accumulation, f32 BN epilogue): loose
    # tolerance for bf16 rounding of activations/weights.
    out_bf16 = jax.block_until_ready(double_conv(x, params))
    assert out_bf16.shape == (N, outc, D, H, W), out_bf16.shape
    err_bf16 = float(jnp.max(jnp.abs(out_bf16 - ref)))
    assert err_bf16 < 1e-1, err_bf16

    print("KERNEL_OK")
</pallas_src>

<mosaic_0001>
module attributes {stable_mosaic.version = 11 : i64} {
  func.func @_double_conv_kernel(%arg0: i32, %arg1: memref<3x512xi32, #tpu.memory_space<vmem>>, %arg2: memref<1x8x512xf32, #tpu.memory_space<vmem>>, %arg3: memref<8x216xf32, #tpu.memory_space<vmem>>, %arg4: memref<8x1xf32, #tpu.memory_space<vmem>>, %arg5: memref<8x1xf32, #tpu.memory_space<vmem>>, %arg6: memref<8x216xf32, #tpu.memory_space<vmem>>, %arg7: memref<8x1xf32, #tpu.memory_space<vmem>>, %arg8: memref<8x1xf32, #tpu.memory_space<vmem>>, %arg9: memref<1x8x512xf32, #tpu.memory_space<vmem>>, %arg10: memref<216x512xf32, #tpu.memory_space<vmem>>, %arg11: memref<216x512xf32, #tpu.memory_space<vmem>>) attributes {dimension_semantics = [#tpu.dimension_semantics<parallel>], iteration_bounds = array<i64: 2>, scalar_prefetch = 0 : i64, scratch_operands = 2 : i64, tpu.core_type = #tpu.core_type<tc>, window_params = [{pipeline_mode = #tpu.pipeline_mode<synchronous>, transform_indices = @transform_0, window_bounds = array<i64: 3, 512>}, {transform_indices = @transform_1, window_bounds = array<i64: 1, 8, 512>}, {pipeline_mode = #tpu.pipeline_mode<synchronous>, transform_indices = @transform_2, window_bounds = array<i64: 8, 216>}, {pipeline_mode = #tpu.pipeline_mode<synchronous>, transform_indices = @transform_3, window_bounds = array<i64: 8, 1>}, {pipeline_mode = #tpu.pipeline_mode<synchronous>, transform_indices = @transform_4, window_bounds = array<i64: 8, 1>}, {pipeline_mode = #tpu.pipeline_mode<synchronous>, transform_indices = @transform_5, window_bounds = array<i64: 8, 216>}, {pipeline_mode = #tpu.pipeline_mode<synchronous>, transform_indices = @transform_6, window_bounds = array<i64: 8, 1>}, {pipeline_mode = #tpu.pipeline_mode<synchronous>, transform_indices = @transform_7, window_bounds = array<i64: 8, 1>}, {transform_indices = @transform_8, window_bounds = array<i64: 1, 8, 512>}]} {
    %c0 = arith.constant 0 : index
    %c0_0 = arith.constant 0 : index
    %0 = vector.load %arg1[%c0, %c0_0] : memref<3x512xi32, #tpu.memory_space<vmem>>, vector<1x512xi32>
    %c1 = arith.constant 1 : index
    %c0_1 = arith.constant 0 : index
    %1 = vector.load %arg1[%c1, %c0_1] : memref<3x512xi32, #tpu.memory_space<vmem>>, vector<1x512xi32>
    %c2 = arith.constant 2 : index
    %c0_2 = arith.constant 0 : index
    %2 = vector.load %arg1[%c2, %c0_2] : memref<3x512xi32, #tpu.memory_space<vmem>>, vector<1x512xi32>
    %c0_i32 = arith.constant 0 : i32
    %3 = vector.broadcast %c0_i32 : i32 to vector<1x512xi32>
    %4 = arith.cmpi sgt, %0, %3 : vector<1x512xi32>
    %c7_i32 = arith.constant 7 : i32
    %5 = vector.broadcast %c7_i32 : i32 to vector<1x512xi32>
    %6 = arith.cmpi slt, %0, %5 : vector<1x512xi32>
    %c0_i32_3 = arith.constant 0 : i32
    %7 = vector.broadcast %c0_i32_3 : i32 to vector<1x512xi32>
    %8 = arith.cmpi sgt, %1, %7 : vector<1x512xi32>
    %c7_i32_4 = arith.constant 7 : i32
    %9 = vector.broadcast %c7_i32_4 : i32 to vector<1x512xi32>
    %10 = arith.cmpi slt, %1, %9 : vector<1x512xi32>
    %c0_i32_5 = arith.constant 0 : i32
    %11 = vector.broadcast %c0_i32_5 : i32 to vector<1x512xi32>
    %12 = arith.cmpi sgt, %2, %11 : vector<1x512xi32>
    %c7_i32_6 = arith.constant 7 : i32
    %13 = vector.broadcast %c7_i32_6 : i32 to vector<1x512xi32>
    %14 = arith.cmpi slt, %2, %13 : vector<1x512xi32>
    %c0_7 = arith.constant 0 : index
    %c0_8 = arith.constant 0 : index
    %c0_9 = arith.constant 0 : index
    %15 = vector.load %arg2[%c0_7, %c0_8, %c0_9] : memref<1x8x512xf32, #tpu.memory_space<vmem>>, vector<1x8x512xf32>
    %16 = vector.shape_cast %15 : vector<1x8x512xf32> to vector<8x512xf32>
    %cst = arith.constant 0.000000e+00 : f32
    %17 = vector.broadcast %cst : f32 to vector<8x512xf32>
    %c73_i32 = arith.constant 73 : i32
    %18 = tpu.dynamic_rotate %16 by %c73_i32 dim 1 : vector<8x512xf32>, i32 -> vector<8x512xf32>
    %19 = arith.andi %4, %8 : vector<1x512xi1>
    %20 = arith.andi %19, %12 : vector<1x512xi1>
    %21 = vector.shape_cast %20 : vector<1x512xi1> to vector<1x512xi1>
    %22 = vector.broadcast %21 : vector<1x512xi1> to vector<8x512xi1>
    %23 = arith.select %22, %18, %17 : vector<8x512xi1>, vector<8x512xf32>
    %c0_10 = arith.constant 0 : index
    %c0_11 = arith.constant 0 : index
    %24 = vector.load %arg10[%c0_10, %c0_11] : memref<216x512xf32, #tpu.memory_space<vmem>>, vector<8x512xf32>
    tpu.vector_store %arg10[%c0_10, %c0_11], %23 {strides = array<i32>} : memref<216x512xf32, #tpu.memory_space<vmem>>, vector<8x512xf32>,
    %c72_i32 = arith.constant 72 : i32
    %25 = tpu.dynamic_rotate %16 by %c72_i32 dim 1 : vector<8x512xf32>, i32 -> vector<8x512xf32>
    %26 = arith.andi %4, %8 : vector<1x512xi1>
    %27 = vector.shape_cast %26 : vector<1x512xi1> to vector<1x512xi1>
    %28 = vector.broadcast %27 : vector<1x512xi1> to vector<8x512xi1>
    %29 = arith.select %28, %25, %17 : vector<8x512xi1>, vector<8x512xf32>
    %c8 = arith.constant 8 : index
    %c0_12 = arith.constant 0 : index
    %30 = vector.load %arg10[%c8, %c0_12] : memref<216x512xf32, #tpu.memory_space<vmem>>, vector<8x512xf32>
    tpu.vector_store %arg10[%c8, %c0_12], %29 {strides = array<i32>} : memref<216x512xf32, #tpu.memory_space<vmem>>, vector<8x512xf32>,
    %c71_i32 = arith.constant 71 : i32
    %31 = tpu.dynamic_rotate %16 by %c71_i32 dim 1 : vector<8x512xf32>, i32 -> vector<8x512xf32>
    %32 = arith.andi %4, %8 : vector<1x512xi1>
    %33 = arith.andi %32, %14 : vector<1x512xi1>
    %34 = vector.shape_cast %33 : vector<1x512xi1> to vector<1x512xi1>
    %35 = vector.broadcast %34 : vector<1x512xi1> to vector<8x512xi1>
    %36 = arith.select %35, %31, %17 : vector<8x512xi1>, vector<8x512xf32>
    %c16 = arith.constant 16 : index
    %c0_13 = arith.constant 0 : index
    %37 = vector.load %arg10[%c16, %c0_13] : memref<216x512xf32, #tpu.memory_space<vmem>>, vector<8x512xf32>
    tpu.vector_store %arg10[%c16, %c0_13], %36 {strides = array<i32>} : memref<216x512xf32, #tpu.memory_space<vmem>>, vector<8x512xf32>,
    %c65_i32 = arith.constant 65 : i32
    %38 = tpu.dynamic_rotate %16 by %c65_i32 dim 1 : vector<8x512xf32>, i32 -> vector<8x512xf32>
    %39 = arith.andi %4, %12 : vector<1x512xi1>
    %40 = vector.shape_cast %39 : vector<1x512xi1> to vector<1x512xi1>
    %41 = vector.broadcast %40 : vector<1x512xi1> to vector<8x512xi1>
    %42 = arith.select %41, %38, %17 : vector<8x512xi1>, vector<8x512xf32>
    %c24 = arith.constant 24 : index
    %c0_14 = arith.constant 0 : index
    %43 = vector.load %arg10[%c24, %c0_14] : memref<216x512xf32, #tpu.memory_space<vmem>>, vector<8x512xf32>
    tpu.vector_store %arg10[%c24, %c0_14], %42 {strides = array<i32>} : memref<216x512xf32, #tpu.memory_space<vmem>>, vector<8x512xf32>,
    %c64_i32 = arith.constant 64 : i32
    %44 = tpu.dynamic_rotate %16 by %c64_i32 dim 1 : vector<8x512xf32>, i32 -> vector<8x512xf32>
    %45 = vector.shape_cast %4 : vector<1x512xi1> to vector<1x512xi1>
    %46 = vector.broadcast %45 : vector<1x512xi1> to vector<8x512xi1>
    %47 = arith.select %46, %44, %17 : vector<8x512xi1>, vector<8x512xf32>
    %c32 = arith.constant 32 : index
    %c0_15 = arith.constant 0 : index
    %48 = vector.load %arg10[%c32, %c0_15] : memref<216x512xf32, #tpu.memory_space<vmem>>, vector<8x512xf32>
    tpu.vector_store %arg10[%c32, %c0_15], %47 {strides = array<i32>} : memref<216x512xf32, #tpu.memory_space<vmem>>, vector<8x512xf32>,
    %c63_i32 = arith.constant 63 : i32
    %49 = tpu.dynamic_rotate %16 by %c63_i32 dim 1 : vector<8x512xf32>, i32 -> vector<8x512xf32>
    %50 = arith.andi %4, %14 : vector<1x512xi1>
    %51 = vector.shape_cast %50 : vector<1x512xi1> to vector<1x512xi1>
    %52 = vector.broadcast %51 : vector<1x512xi1> to vector<8x512xi1>
    %53 = arith.select %52, %49, %17 : vector<8x512xi1>, vector<8x512xf32>
    %c40 = arith.constant 40 : index
    %c0_16 = arith.constant 0 : index
    %54 = vector.load %arg10[%c40, %c0_16] : memref<216x512xf32, #tpu.memory_space<vmem>>, vector<8x512xf32>
    tpu.vector_store %arg10[%c40, %c0_16], %53 {strides = array<i32>} : memref<216x512xf32, #tpu.memory_space<vmem>>, vector<8x512xf32>,
    %c57_i32 = arith.constant 57 : i32
    %55 = tpu.dynamic_rotate %16 by %c57_i32 dim 1 : vector<8x512xf32>, i32 -> vector<8x512xf32>
    %56 = arith.andi %4, %10 : vector<1x512xi1>
    %57 = arith.andi %56, %12 : vector<1x512xi1>
    %58 = vector.shape_cast %57 : vector<1x512xi1> to vector<1x512xi1>
    %59 = vector.broadcast %58 : vector<1x512xi1> to vector<8x512xi1>
    %60 = arith.select %59, %55, %17 : vector<8x512xi1>, vector<8x512xf32>
    %c48 = arith.constant 48 : index
    %c0_17 = arith.constant 0 : index
    %61 = vector.load %arg10[%c48, %c0_17] : memref<216x512xf32, #tpu.memory_space<vmem>>, vector<8x512xf32>
    tpu.vector_store %arg10[%c48, %c0_17], %60 {strides = array<i32>} : memref<216x512xf32, #tpu.memory_space<vmem>>, vector<8x512xf32>,
    %c56_i32 = arith.constant 56 : i32
    %62 = tpu.dynamic_rotate %16 by %c56_i32 dim 1 : vector<8x512xf32>, i32 -> vector<8x512xf32>
    %63 = arith.andi %4, %10 : vector<1x512xi1>
    %64 = vector.shape_cast %63 : vector<1x512xi1> to vector<1x512xi1>
    %65 = vector.broadcast %64 : vector<1x512xi1> to vector<8x512xi1>
    %66 = arith.select %65, %62, %17 : vector<8x512xi1>, vector<8x512xf32>
    %c56 = arith.constant 56 : index
    %c0_18 = arith.constant 0 : index
    %67 = vector.load %arg10[%c56, %c0_18] : memref<216x512xf32, #tpu.memory_space<vmem>>, vector<8x512xf32>
    tpu.vector_store %arg10[%c56, %c0_18], %66 {strides = array<i32>} : memref<216x512xf32, #tpu.memory_space<vmem>>, vector<8x512xf32>,
    %c55_i32 = arith.constant 55 : i32
    %68 = tpu.dynamic_rotate %16 by %c55_i32 dim 1 : vector<8x512xf32>, i32 -> vector<8x512xf32>
    %69 = arith.andi %4, %10 : vector<1x512xi1>
    %70 = arith.andi %69, %14 : vector<1x512xi1>
    %71 = vector.shape_cast %70 : vector<1x512xi1> to vector<1x512xi1>
    %72 = vector.broadcast %71 : vector<1x512xi1> to vector<8x512xi1>
    %73 = arith.select %72, %68, %17 : vector<8x512xi1>, vector<8x512xf32>
    %c64 = arith.constant 64 : index
    %c0_19 = arith.constant 0 : index
    %74 = vector.load %arg10[%c64, %c0_19] : memref<216x512xf32, #tpu.memory_space<vmem>>, vector<8x512xf32>
    tpu.vector_store %arg10[%c64, %c0_19], %73 {strides = array<i32>} : memref<216x512xf32, #tpu.memory_space<vmem>>, vector<8x512xf32>,
    %c9_i32 = arith.constant 9 : i32
    %75 = tpu.dynamic_rotate %16 by %c9_i32 dim 1 : vector<8x512xf32>, i32 -> vector<8x512xf32>
    %76 = arith.andi %8, %12 : vector<1x512xi1>
    %77 = vector.shape_cast %76 : vector<1x512xi1> to vector<1x512xi1>
    %78 = vector.broadcast %77 : vector<1x512xi1> to vector<8x512xi1>
    %79 = arith.select %78, %75, %17 : vector<8x512xi1>, vector<8x512xf32>
    %c72 = arith.constant 72 : index
    %c0_20 = arith.constant 0 : index
    %80 = vector.load %arg10[%c72, %c0_20] : memref<216x512xf32, #tpu.memory_space<vmem>>, vector<8x512xf32>
    tpu.vector_store %arg10[%c72, %c0_20], %79 {strides = array<i32>} : memref<216x512xf32, #tpu.memory_space<vmem>>, vector<8x512xf32>,
    %c8_i32 = arith.constant 8 : i32
    %81 = tpu.dynamic_rotate %16 by %c8_i32 dim 1 : vector<8x512xf32>, i32 -> vector<8x512xf32>
    %82 = vector.shape_cast %8 : vector<1x512xi1> to vector<1x512xi1>
    %83 = vector.broadcast %82 : vector<1x512xi1> to vector<8x512xi1>
    %84 = arith.select %83, %81, %17 : vector<8x512xi1>, vector<8x512xf32>
    %c80 = arith.constant 80 : index
    %c0_21 = arith.constant 0 : index
    %85 = vector.load %arg10[%c80, %c0_21] : memref<216x512xf32, #tpu.memory_space<vmem>>, vector<8x512xf32>
    tpu.vector_store %arg10[%c80, %c0_21], %84 {strides = array<i32>} : memref<216x512xf32, #tpu.memory_space<vmem>>, vector<8x512xf32>,
    %c7_i32_22 = arith.constant 7 : i32
    %86 = tpu.dynamic_rotate %16 by %c7_i32_22 dim 1 : vector<8x512xf32>, i32 -> vector<8x512xf32>
    %87 = arith.andi %8, %14 : vector<1x512xi1>
    %88 = vector.shape_cast %87 : vector<1x512xi1> to vector<1x512xi1>
    %89 = vector.broadcast %88 : vector<1x512xi1> to vector<8x512xi1>
    %90 = arith.select %89, %86, %17 : vector<8x512xi1>, vector<8x512xf32>
    %c88 = arith.constant 88 : index
    %c0_23 = arith.constant 0 : index
    %91 = vector.load %arg10[%c88, %c0_23] : memref<216x512xf32, #tpu.memory_space<vmem>>, vector<8x512xf32>
    tpu.vector_store %arg10[%c88, %c0_23], %90 {strides = array<i32>} : memref<216x512xf32, #tpu.memory_space<vmem>>, vector<8x512xf32>,
    %c1_i32 = arith.constant 1 : i32
    %92 = tpu.dynamic_rotate %16 by %c1_i32 dim 1 : vector<8x512xf32>, i32 -> vector<8x512xf32>
    %93 = vector.shape_cast %12 : vector<1x512xi1> to vector<1x512xi1>
    %94 = vector.broadcast %93 : vector<1x512xi1> to vector<8x512xi1>
    %95 = arith.select %94, %92, %17 : vector<8x512xi1>, vector<8x512xf32>
    %c96 = arith.constant 96 : index
    %c0_24 = arith.constant 0 : index
    %96 = vector.load %arg10[%c96, %c0_24] : memref<216x512xf32, #tpu.memory_space<vmem>>, vector<8x512xf32>
    tpu.vector_store %arg10[%c96, %c0_24], %95 {strides = array<i32>} : memref<216x512xf32, #tpu.memory_space<vmem>>, vector<8x512xf32>,
    %c104 = arith.constant 104 : index
    %c0_25 = arith.constant 0 : index
    %97 = vector.load %arg10[%c104, %c0_25] : memref<216x512xf32, #tpu.memory_space<vmem>>, vector<8x512xf32>
    tpu.vector_store %arg10[%c104, %c0_25], %16 {strides = array<i32>} : memref<216x512xf32, #tpu.memory_space<vmem>>, vector<8x512xf32>,
    %c511_i32 = arith.constant 511 : i32
    %98 = tpu.dynamic_rotate %16 by %c511_i32 dim 1 : vector<8x512xf32>, i32 -> vector<8x512xf32>
    %99 = vector.shape_cast %14 : vector<1x512xi1> to vector<1x512xi1>
    %100 = vector.broadcast %99 : vector<1x512xi1> to vector<8x512xi1>
    %101 = arith.select %100, %98, %17 : vector<8x512xi1>, vector<8x512xf32>
    %c112 = arith.constant 112 : index
    %c0_26 = arith.constant 0 : index
    %102 = vector.load %arg10[%c112, %c0_26] : memref<216x512xf32, #tpu.memory_space<vmem>>, vector<8x512xf32>
    tpu.vector_store %arg10[%c112, %c0_26], %101 {strides = array<i32>} : memref<216x512xf32, #tpu.memory_space<vmem>>, vector<8x512xf32>,
    %c505_i32 = arith.constant 505 : i32
    %103 = tpu.dynamic_rotate %16 by %c505_i32 dim 1 : vector<8x512xf32>, i32 -> vector<8x512xf32>
    %104 = arith.andi %10, %12 : vector<1x512xi1>
    %105 = vector.shape_cast %104 : vector<1x512xi1> to vector<1x512xi1>
    %106 = vector.broadcast %105 : vector<1x512xi1> to vector<8x512xi1>
    %107 = arith.select %106, %103, %17 : vector<8x512xi1>, vector<8x512xf32>
    %c120 = arith.constant 120 : index
    %c0_27 = arith.constant 0 : index
    %108 = vector.load %arg10[%c120, %c0_27] : memref<216x512xf32, #tpu.memory_space<vmem>>, vector<8x512xf32>
    tpu.vector_store %arg10[%c120, %c0_27], %107 {strides = array<i32>} : memref<216x512xf32, #tpu.memory_space<vmem>>, vector<8x512xf32>,
    %c504_i32 = arith.constant 504 : i32
    %109 = tpu.dynamic_rotate %16 by %c504_i32 dim 1 : vector<8x512xf32>, i32 -> vector<8x512xf32>
    %110 = vector.shape_cast %10 : vector<1x512xi1> to vector<1x512xi1>
    %111 = vector.broadcast %110 : vector<1x512xi1> to vector<8x512xi1>
    %112 = arith.select %111, %109, %17 : vector<8x512xi1>, vector<8x512xf32>
    %c128 = arith.constant 128 : index
    %c0_28 = arith.constant 0 : index
    %113 = vector.load %arg10[%c128, %c0_28] : memref<216x512xf32, #tpu.memory_space<vmem>>, vector<8x512xf32>
    tpu.vector_store %arg10[%c128, %c0_28], %112 {strides = array<i32>} : memref<216x512xf32, #tpu.memory_space<vmem>>, vector<8x512xf32>,
    %c503_i32 = arith.constant 503 : i32
    %114 = tpu.dynamic_rotate %16 by %c503_i32 dim 1 : vector<8x512xf32>, i32 -> vector<8x512xf32>
    %115 = arith.andi %10, %14 : vector<1x512xi1>
    %116 = vector.shape_cast %115 : vector<1x512xi1> to vector<1x512xi1>
    %117 = vector.broadcast %116 : vector<1x512xi1> to vector<8x512xi1>
    %118 = arith.select %117, %114, %17 : vector<8x512xi1>, vector<8x512xf32>
    %c136 = arith.constant 136 : index
    %c0_29 = arith.constant 0 : index
    %119 = vector.load %arg10[%c136, %c0_29] : memref<216x512xf32, #tpu.memory_space<vmem>>, vector<8x512xf32>
    tpu.vector_store %arg10[%c136, %c0_29], %118 {strides = array<i32>} : memref<216x512xf32, #tpu.memory_space<vmem>>, vector<8x512xf32>,
    %c457_i32 = arith.constant 457 : i32
    %120 = tpu.dynamic_rotate %16 by %c457_i32 dim 1 : vector<8x512xf32>, i32 -> vector<8x512xf32>
    %121 = arith.andi %6, %8 : vector<1x512xi1>
    %122 = arith.andi %121, %12 : vector<1x512xi1>
    %123 = vector.shape_cast %122 : vector<1x512xi1> to vector<1x512xi1>
    %124 = vector.broadcast %123 : vector<1x512xi1> to vector<8x512xi1>
    %125 = arith.select %124, %120, %17 : vector<8x512xi1>, vector<8x512xf32>
    %c144 = arith.constant 144 : index
    %c0_30 = arith.constant 0 : index
    %126 = vector.load %arg10[%c144, %c0_30] : memref<216x512xf32, #tpu.memory_space<vmem>>, vector<8x512xf32>
    tpu.vector_store %arg10[%c144, %c0_30], %125 {strides = array<i32>} : memref<216x512xf32, #tpu.memory_space<vmem>>, vector<8x512xf32>,
    %c456_i32 = arith.constant 456 : i32
    %127 = tpu.dynamic_rotate %16 by %c456_i32 dim 1 : vector<8x512xf32>, i32 -> vector<8x512xf32>
    %128 = arith.andi %6, %8 : vector<1x512xi1>
    %129 = vector.shape_cast %128 : vector<1x512xi1> to vector<1x512xi1>
    %130 = vector.broadcast %129 : vector<1x512xi1> to vector<8x512xi1>
    %131 = arith.select %130, %127, %17 : vector<8x512xi1>, vector<8x512xf32>
    %c152 = arith.constant 152 : index
    %c0_31 = arith.constant 0 : index
    %132 = vector.load %arg10[%c152, %c0_31] : memref<216x512xf32, #tpu.memory_space<vmem>>, vector<8x512xf32>
    tpu.vector_store %arg10[%c152, %c0_31], %131 {strides = array<i32>} : memref<216x512xf32, #tpu.memory_space<vmem>>, vector<8x512xf32>,
    %c455_i32 = arith.constant 455 : i32
    %133 = tpu.dynamic_rotate %16 by %c455_i32 dim 1 : vector<8x512xf32>, i32 -> vector<8x512xf32>
    %134 = arith.andi %6, %8 : vector<1x512xi1>
    %135 = arith.andi %134, %14 : vector<1x512xi1>
    %136 = vector.shape_cast %135 : vector<1x512xi1> to vector<1x512xi1>
    %137 = vector.broadcast %136 : vector<1x512xi1> to vector<8x512xi1>
    %138 = arith.select %137, %133, %17 : vector<8x512xi1>, vector<8x512xf32>
    %c160 = arith.constant 160 : index
    %c0_32 = arith.constant 0 : index
    %139 = vector.load %arg10[%c160, %c0_32] : memref<216x512xf32, #tpu.memory_space<vmem>>, vector<8x512xf32>
    tpu.vector_store %arg10[%c160, %c0_32], %138 {strides = array<i32>} : memref<216x512xf32, #tpu.memory_space<vmem>>, vector<8x512xf32>,
    %c449_i32 = arith.constant 449 : i32
    %140 = tpu.dynamic_rotate %16 by %c449_i32 dim 1 : vector<8x512xf32>, i32 -> vector<8x512xf32>
    %141 = arith.andi %6, %12 : vector<1x512xi1>
    %142 = vector.shape_cast %141 : vector<1x512xi1> to vector<1x512xi1>
    %143 = vector.broadcast %142 : vector<1x512xi1> to vector<8x512xi1>
    %144 = arith.select %143, %140, %17 : vector<8x512xi1>, vector<8x512xf32>
    %c168 = arith.constant 168 : index
    %c0_33 = arith.constant 0 : index
    %145 = vector.load %arg10[%c168, %c0_33] : memref<216x512xf32, #tpu.memory_space<vmem>>, vector<8x512xf32>
    tpu.vector_store %arg10[%c168, %c0_33], %144 {strides = array<i32>} : memref<216x512xf32, #tpu.memory_space<vmem>>, vector<8x512xf32>,
    %c448_i32 = arith.constant 448 : i32
    %146 = tpu.dynamic_rotate %16 by %c448_i32 dim 1 : vector<8x512xf32>, i32 -> vector<8x512xf32>
    %147 = vector.shape_cast %6 : vector<1x512xi1> to vector<1x512xi1>
    %148 = vector.broadcast %147 : vector<1x512xi1> to vector<8x512xi1>
    %149 = arith.select %148, %146, %17 : vector<8x512xi1>, vector<8x512xf32>
    %c176 = arith.constant 176 : index
    %c0_34 = arith.constant 0 : index
    %150 = vector.load %arg10[%c176, %c0_34] : memref<216x512xf32, #tpu.memory_space<vmem>>, vector<8x512xf32>
    tpu.vector_store %arg10[%c176, %c0_34], %149 {strides = array<i32>} : memref<216x512xf32, #tpu.memory_space<vmem>>, vector<8x512xf32>,
    %c447_i32 = arith.constant 447 : i32
    %151 = tpu.dynamic_rotate %16 by %c447_i32 dim 1 : vector<8x512xf32>, i32 -> vector<8x512xf32>
    %152 = arith.andi %6, %14 : vector<1x512xi1>
    %153 = vector.shape_cast %152 : vector<1x512xi1> to vector<1x512xi1>
    %154 = vector.broadcast %153 : vector<1x512xi1> to vector<8x512xi1>
    %155 = arith.select %154, %151, %17 : vector<8x512xi1>, vector<8x512xf32>
    %c184 = arith.constant 184 : index
    %c0_35 = arith.constant 0 : index
    %156 = vector.load %arg10[%c184, %c0_35] : memref<216x512xf32, #tpu.memory_space<vmem>>, vector<8x512xf32>
    tpu.vector_store %arg10[%c184, %c0_35], %155 {strides = array<i32>} : memref<216x512xf32, #tpu.memory_space<vmem>>, vector<8x512xf32>,
    %c441_i32 = arith.constant 441 : i32
    %157 = tpu.dynamic_rotate %16 by %c441_i32 dim 1 : vector<8x512xf32>, i32 -> vector<8x512xf32>
    %158 = arith.andi %6, %10 : vector<1x512xi1>
    %159 = arith.andi %158, %12 : vector<1x512xi1>
    %160 = vector.shape_cast %159 : vector<1x512xi1> to vector<1x512xi1>
    %161 = vector.broadcast %160 : vector<1x512xi1> to vector<8x512xi1>
    %162 = arith.select %161, %157, %17 : vector<8x512xi1>, vector<8x512xf32>
    %c192 = arith.constant 192 : index
    %c0_36 = arith.constant 0 : index
    %163 = vector.load %arg10[%c192, %c0_36] : memref<216x512xf32, #tpu.memory_space<vmem>>, vector<8x512xf32>
    tpu.vector_store %arg10[%c192, %c0_36], %162 {strides = array<i32>} : memref<216x512xf32, #tpu.memory_space<vmem>>, vector<8x512xf32>,
    %c440_i32 = arith.constant 440 : i32
    %164 = tpu.dynamic_rotate %16 by %c440_i32 dim 1 : vector<8x512xf32>, i32 -> vector<8x512xf32>
    %165 = arith.andi %6, %10 : vector<1x512xi1>
    %166 = vector.shape_cast %165 : vector<1x512xi1> to vector<1x512xi1>
    %167 = vector.broadcast %166 : vector<1x512xi1> to vector<8x512xi1>
    %168 = arith.select %167, %164, %17 : vector<8x512xi1>, vector<8x512xf32>
    %c200 = arith.constant 200 : index
    %c0_37 = arith.constant 0 : index
    %169 = vector.load %arg10[%c200, %c0_37] : memref<216x512xf32, #tpu.memory_space<vmem>>, vector<8x512xf32>
    tpu.vector_store %arg10[%c200, %c0_37], %168 {strides = array<i32>} : memref<216x512xf32, #tpu.memory_space<vmem>>, vector<8x512xf32>,
    %c439_i32 = arith.constant 439 : i32
    %170 = tpu.dynamic_rotate %16 by %c439_i32 dim 1 : vector<8x512xf32>, i32 -> vector<8x512xf32>
    %171 = arith.andi %6, %10 : vector<1x512xi1>
    %172 = arith.andi %171, %14 : vector<1x512xi1>
    %173 = vector.shape_cast %172 : vector<1x512xi1> to vector<1x512xi1>
    %174 = vector.broadcast %173 : vector<1x512xi1> to vector<8x512xi1>
    %175 = arith.select %174, %170, %17 : vector<8x512xi1>, vector<8x512xf32>
    %c208 = arith.constant 208 : index
    %c0_38 = arith.constant 0 : index
    %176 = vector.load %arg10[%c208, %c0_38] : memref<216x512xf32, #tpu.memory_space<vmem>>, vector<8x512xf32>
    tpu.vector_store %arg10[%c208, %c0_38], %175 {strides = array<i32>} : memref<216x512xf32, #tpu.memory_space<vmem>>, vector<8x512xf32>,
    %c0_39 = arith.constant 0 : index
    %c0_40 = arith.constant 0 : index
    %177 = vector.load %arg3[%c0_39, %c0_40] : memref<8x216xf32, #tpu.memory_space<vmem>>, vector<8x216xf32>
    %c0_41 = arith.constant 0 : index
    %c0_42 = arith.constant 0 : index
    %178 = vector.load %arg10[%c0_41, %c0_42] : memref<216x512xf32, #tpu.memory_space<vmem>>, vector<216x512xf32>
    %cst_43 = arith.constant dense<0.000000e+00> : vector<8x512xf32>
    %179 = tpu.matmul %177, %178, %cst_43 {dimension_numbers = #tpu.dot_dimension_numbers<[1], [0], [0], [1], [0, 0, 1, 1], [], []>} : vector<8x216xf32>, vector<216x512xf32>, vector<8x512xf32> -> vector<8x512xf32>
    %c0_44 = arith.constant 0 : index
    %c0_45 = arith.constant 0 : index
    %180 = vector.load %arg4[%c0_44, %c0_45] : memref<8x1xf32, #tpu.memory_space<vmem>>, vector<8x1xf32>
    %181 = vector.broadcast %180 : vector<8x1xf32> to vector<8x512xf32>
    %182 = arith.mulf %179, %181 : vector<8x512xf32>
    %c0_46 = arith.constant 0 : index
    %c0_47 = arith.constant 0 : index
    %183 = vector.load %arg5[%c0_46, %c0_47] : memref<8x1xf32, #tpu.memory_space<vmem>>, vector<8x1xf32>
    %184 = vector.broadcast %183 : vector<8x1xf32> to vector<8x512xf32>
    %185 = arith.addf %182, %184 : vector<8x512xf32>
    %cst_48 = arith.constant 0.000000e+00 : f32
    %186 = vector.broadcast %cst_48 : f32 to vector<8x512xf32>
    %187 = arith.maximumf %185, %186 : vector<8x512xf32>
    %cst_49 = arith.constant 0.000000e+00 : f32
    %188 = vector.broadcast %cst_49 : f32 to vector<8x512xf32>
    %c73_i32_50 = arith.constant 73 : i32
    %189 = tpu.dynamic_rotate %187 by %c73_i32_50 dim 1 : vector<8x512xf32>, i32 -> vector<8x512xf32>
    %190 = arith.andi %4, %8 : vector<1x512xi1>
    %191 = arith.andi %190, %12 : vector<1x512xi1>
    %192 = vector.shape_cast %191 : vector<1x512xi1> to vector<1x512xi1>
    %193 = vector.broadcast %192 : vector<1x512xi1> to vector<8x512xi1>
    %194 = arith.select %193, %189, %188 : vector<8x512xi1>, vector<8x512xf32>
    %c0_51 = arith.constant 0 : index
    %c0_52 = arith.constant 0 : index
    %195 = vector.load %arg11[%c0_51, %c0_52] : memref<216x512xf32, #tpu.memory_space<vmem>>, vector<8x512xf32>
    tpu.vector_store %arg11[%c0_51, %c0_52], %194 {strides = array<i32>} : memref<216x512xf32, #tpu.memory_space<vmem>>, vector<8x512xf32>,
    %c72_i32_53 = arith.constant 72 : i32
    %196 = tpu.dynamic_rotate %187 by %c72_i32_53 dim 1 : vector<8x512xf32>, i32 -> vector<8x512xf32>
    %197 = arith.andi %4, %8 : vector<1x512xi1>
    %198 = vector.shape_cast %197 : vector<1x512xi1> to vector<1x512xi1>
    %199 = vector.broadcast %198 : vector<1x512xi1> to vector<8x512xi1>
    %200 = arith.select %199, %196, %188 : vector<8x512xi1>, vector<8x512xf32>
    %c8_54 = arith.constant 8 : index
    %c0_55 = arith.constant 0 : index
    %201 = vector.load %arg11[%c8_54, %c0_55] : memref<216x512xf32, #tpu.memory_space<vmem>>, vector<8x512xf32>
    tpu.vector_store %arg11[%c8_54, %c0_55], %200 {strides = array<i32>} : memref<216x512xf32, #tpu.memory_space<vmem>>, vector<8x512xf32>,
    %c71_i32_56 = arith.constant 71 : i32
    %202 = tpu.dynamic_rotate %187 by %c71_i32_56 dim 1 : vector<8x512xf32>, i32 -> vector<8x512xf32>
    %203 = arith.andi %4, %8 : vector<1x512xi1>
    %204 = arith.andi %203, %14 : vector<1x512xi1>
    %205 = vector.shape_cast %204 : vector<1x512xi1> to vector<1x512xi1>
    %206 = vector.broadcast %205 : vector<1x512xi1> to vector<8x512xi1>
    %207 = arith.select %206, %202, %188 : vector<8x512xi1>, vector<8x512xf32>
    %c16_57 = arith.constant 16 : index
    %c0_58 = arith.constant 0 : index
    %208 = vector.load %arg11[%c16_57, %c0_58] : memref<216x512xf32, #tpu.memory_space<vmem>>, vector<8x512xf32>
    tpu.vector_store %arg11[%c16_57, %c0_58], %207 {strides = array<i32>} : memref<216x512xf32, #tpu.memory_space<vmem>>, vector<8x512xf32>,
    %c65_i32_59 = arith.constant 65 : i32
    %209 = tpu.dynamic_rotate %187 by %c65_i32_59 dim 1 : vector<8x512xf32>, i32 -> vector<8x512xf32>
    %210 = arith.andi %4, %12 : vector<1x512xi1>
    %211 = vector.shape_cast %210 : vector<1x512xi1> to vector<1x512xi1>
    %212 = vector.broadcast %211 : vector<1x512xi1> to vector<8x512xi1>
    %213 = arith.select %212, %209, %188 : vector<8x512xi1>, vector<8x512xf32>
    %c24_60 = arith.constant 24 : index
    %c0_61 = arith.constant 0 : index
    %214 = vector.load %arg11[%c24_60, %c0_61] : memref<216x512xf32, #tpu.memory_space<vmem>>, vector<8x512xf32>
    tpu.vector_store %arg11[%c24_60, %c0_61], %213 {strides = array<i32>} : memref<216x512xf32, #tpu.memory_space<vmem>>, vector<8x512xf32>,
    %c64_i32_62 = arith.constant 64 : i32
    %215 = tpu.dynamic_rotate %187 by %c64_i32_62 dim 1 : vector<8x512xf32>, i32 -> vector<8x512xf32>
    %216 = vector.shape_cast %4 : vector<1x512xi1> to vector<1x512xi1>
    %217 = vector.broadcast %216 : vector<1x512xi1> to vector<8x512xi1>
    %218 = arith.select %217, %215, %188 : vector<8x512xi1>, vector<8x512xf32>
    %c32_63 = arith.constant 32 : index
    %c0_64 = arith.constant 0 : index
    %219 = vector.load %arg11[%c32_63, %c0_64] : memref<216x512xf32, #tpu.memory_space<vmem>>, vector<8x512xf32>
    tpu.vector_store %arg11[%c32_63, %c0_64], %218 {strides = array<i32>} : memref<216x512xf32, #tpu.memory_space<vmem>>, vector<8x512xf32>,
    %c63_i32_65 = arith.constant 63 : i32
    %220 = tpu.dynamic_rotate %187 by %c63_i32_65 dim 1 : vector<8x512xf32>, i32 -> vector<8x512xf32>
    %221 = arith.andi %4, %14 : vector<1x512xi1>
    %222 = vector.shape_cast %221 : vector<1x512xi1> to vector<1x512xi1>
    %223 = vector.broadcast %222 : vector<1x512xi1> to vector<8x512xi1>
    %224 = arith.select %223, %220, %188 : vector<8x512xi1>, vector<8x512xf32>
    %c40_66 = arith.constant 40 : index
    %c0_67 = arith.constant 0 : index
    %225 = vector.load %arg11[%c40_66, %c0_67] : memref<216x512xf32, #tpu.memory_space<vmem>>, vector<8x512xf32>
    tpu.vector_store %arg11[%c40_66, %c0_67], %224 {strides = array<i32>} : memref<216x512xf32, #tpu.memory_space<vmem>>, vector<8x512xf32>,
    %c57_i32_68 = arith.constant 57 : i32
    %226 = tpu.dynamic_rotate %187 by %c57_i32_68 dim 1 : vector<8x512xf32>, i32 -> vector<8x512xf32>
    %227 = arith.andi %4, %10 : vector<1x512xi1>
    %228 = arith.andi %227, %12 : vector<1x512xi1>
    %229 = vector.shape_cast %228 : vector<1x512xi1> to vector<1x512xi1>
    %230 = vector.broadcast %229 : vector<1x512xi1> to vector<8x512xi1>
    %231 = arith.select %230, %226, %188 : vector<8x512xi1>, vector<8x512xf32>
    %c48_69 = arith.constant 48 : index
    %c0_70 = arith.constant 0 : index
    %232 = vector.load %arg11[%c48_69, %c0_70] : memref<216x512xf32, #tpu.memory_space<vmem>>, vector<8x512xf32>
    tpu.vector_store %arg11[%c48_69, %c0_70], %231 {strides = array<i32>} : memref<216x512xf32, #tpu.memory_space<vmem>>, vector<8x512xf32>,
    %c56_i32_71 = arith.constant 56 : i32
    %233 = tpu.dynamic_rotate %187 by %c56_i32_71 dim 1 : vector<8x512xf32>, i32 -> vector<8x512xf32>
    %234 = arith.andi %4, %10 : vector<1x512xi1>
    %235 = vector.shape_cast %234 : vector<1x512xi1> to vector<1x512xi1>
    %236 = vector.broadcast %235 : vector<1x512xi1> to vector<8x512xi1>
    %237 = arith.select %236, %233, %188 : vector<8x512xi1>, vector<8x512xf32>
    %c56_72 = arith.constant 56 : index
    %c0_73 = arith.constant 0 : index
    %238 = vector.load %arg11[%c56_72, %c0_73] : memref<216x512xf32, #tpu.memory_space<vmem>>, vector<8x512xf32>
    tpu.vector_store %arg11[%c56_72, %c0_73], %237 {strides = array<i32>} : memref<216x512xf32, #tpu.memory_space<vmem>>, vector<8x512xf32>,
    %c55_i32_74 = arith.constant 55 : i32
    %239 = tpu.dynamic_rotate %187 by %c55_i32_74 dim 1 : vector<8x512xf32>, i32 -> vector<8x512xf32>
    %240 = arith.andi %4, %10 : vector<1x512xi1>
    %241 = arith.andi %240, %14 : vector<1x512xi1>
    %242 = vector.shape_cast %241 : vector<1x512xi1> to vector<1x512xi1>
    %243 = vector.broadcast %242 : vector<1x512xi1> to vector<8x512xi1>
    %244 = arith.select %243, %239, %188 : vector<8x512xi1>, vector<8x512xf32>
    %c64_75 = arith.constant 64 : index
    %c0_76 = arith.constant 0 : index
    %245 = vector.load %arg11[%c64_75, %c0_76] : memref<216x512xf32, #tpu.memory_space<vmem>>, vector<8x512xf32>
    tpu.vector_store %arg11[%c64_75, %c0_76], %244 {strides = array<i32>} : memref<216x512xf32, #tpu.memory_space<vmem>>, vector<8x512xf32>,
    %c9_i32_77 = arith.constant 9 : i32
    %246 = tpu.dynamic_rotate %187 by %c9_i32_77 dim 1 : vector<8x512xf32>, i32 -> vector<8x512xf32>
    %247 = arith.andi %8, %12 : vector<1x512xi1>
    %248 = vector.shape_cast %247 : vector<1x512xi1> to vector<1x512xi1>
    %249 = vector.broadcast %248 : vector<1x512xi1> to vector<8x512xi1>
    %250 = arith.select %249, %246, %188 : vector<8x512xi1>, vector<8x512xf32>
    %c72_78 = arith.constant 72 : index
    %c0_79 = arith.constant 0 : index
    %251 = vector.load %arg11[%c72_78, %c0_79] : memref<216x512xf32, #tpu.memory_space<vmem>>, vector<8x512xf32>
    tpu.vector_store %arg11[%c72_78, %c0_79], %250 {strides = array<i32>} : memref<216x512xf32, #tpu.memory_space<vmem>>, vector<8x512xf32>,
    %c8_i32_80 = arith.constant 8 : i32
    %252 = tpu.dynamic_rotate %187 by %c8_i32_80 dim 1 : vector<8x512xf32>, i32 -> vector<8x512xf32>
    %253 = vector.shape_cast %8 : vector<1x512xi1> to vector<1x512xi1>
    %254 = vector.broadcast %253 : vector<1x512xi1> to vector<8x512xi1>
    %255 = arith.select %254, %252, %188 : vector<8x512xi1>, vector<8x512xf32>
    %c80_81 = arith.constant 80 : index
    %c0_82 = arith.constant 0 : index
    %256 = vector.load %arg11[%c80_81, %c0_82] : memref<216x512xf32, #tpu.memory_space<vmem>>, vector<8x512xf32>
    tpu.vector_store %arg11[%c80_81, %c0_82], %255 {strides = array<i32>} : memref<216x512xf32, #tpu.memory_space<vmem>>, vector<8x512xf32>,
    %c7_i32_83 = arith.constant 7 : i32
    %257 = tpu.dynamic_rotate %187 by %c7_i32_83 dim 1 : vector<8x512xf32>, i32 -> vector<8x512xf32>
    %258 = arith.andi %8, %14 : vector<1x512xi1>
    %259 = vector.shape_cast %258 : vector<1x512xi1> to vector<1x512xi1>
    %260 = vector.broadcast %259 : vector<1x512xi1> to vector<8x512xi1>
    %261 = arith.select %260, %257, %188 : vector<8x512xi1>, vector<8x512xf32>
    %c88_84 = arith.constant 88 : index
    %c0_85 = arith.constant 0 : index
    %262 = vector.load %arg11[%c88_84, %c0_85] : memref<216x512xf32, #tpu.memory_space<vmem>>, vector<8x512xf32>
    tpu.vector_store %arg11[%c88_84, %c0_85], %261 {strides = array<i32>} : memref<216x512xf32, #tpu.memory_space<vmem>>, vector<8x512xf32>,
    %c1_i32_86 = arith.constant 1 : i32
    %263 = tpu.dynamic_rotate %187 by %c1_i32_86 dim 1 : vector<8x512xf32>, i32 -> vector<8x512xf32>
    %264 = vector.shape_cast %12 : vector<1x512xi1> to vector<1x512xi1>
    %265 = vector.broadcast %264 : vector<1x512xi1> to vector<8x512xi1>
    %266 = arith.select %265, %263, %188 : vector<8x512xi1>, vector<8x512xf32>
    %c96_87 = arith.constant 96 : index
    %c0_88 = arith.constant 0 : index
    %267 = vector.load %arg11[%c96_87, %c0_88] : memref<216x512xf32, #tpu.memory_space<vmem>>, vector<8x512xf32>
    tpu.vector_store %arg11[%c96_87, %c0_88], %266 {strides = array<i32>} : memref<216x512xf32, #tpu.memory_space<vmem>>, vector<8x512xf32>,
    %c104_89 = arith.constant 104 : index
    %c0_90 = arith.constant 0 : index
    %268 = vector.load %arg11[%c104_89, %c0_90] : memref<216x512xf32, #tpu.memory_space<vmem>>, vector<8x512xf32>
    tpu.vector_store %arg11[%c104_89, %c0_90], %187 {strides = array<i32>} : memref<216x512xf32, #tpu.memory_space<vmem>>, vector<8x512xf32>,
    %c511_i32_91 = arith.constant 511 : i32
    %269 = tpu.dynamic_rotate %187 by %c511_i32_91 dim 1 : vector<8x512xf32>, i32 -> vector<8x512xf32>
    %270 = vector.shape_cast %14 : vector<1x512xi1> to vector<1x512xi1>
    %271 = vector.broadcast %270 : vector<1x512xi1> to vector<8x512xi1>
    %272 = arith.select %271, %269, %188 : vector<8x512xi1>, vector<8x512xf32>
    %c112_92 = arith.constant 112 : index
    %c0_93 = arith.constant 0 : index
    %273 = vector.load %arg11[%c112_92, %c0_93] : memref<216x512xf32, #tpu.memory_space<vmem>>, vector<8x512xf32>
    tpu.vector_store %arg11[%c112_92, %c0_93], %272 {strides = array<i32>} : memref<216x512xf32, #tpu.memory_space<vmem>>, vector<8x512xf32>,
    %c505_i32_94 = arith.constant 505 : i32
    %274 = tpu.dynamic_rotate %187 by %c505_i32_94 dim 1 : vector<8x512xf32>, i32 -> vector<8x512xf32>
    %275 = arith.andi %10, %12 : vector<1x512xi1>
    %276 = vector.shape_cast %275 : vector<1x512xi1> to vector<1x512xi1>
    %277 = vector.broadcast %276 : vector<1x512xi1> to vector<8x512xi1>
    %278 = arith.select %277, %274, %188 : vector<8x512xi1>, vector<8x512xf32>
    %c120_95 = arith.constant 120 : index
    %c0_96 = arith.constant 0 : index
    %279 = vector.load %arg11[%c120_95, %c0_96] : memref<216x512xf32, #tpu.memory_space<vmem>>, vector<8x512xf32>
    tpu.vector_store %arg11[%c120_95, %c0_96], %278 {strides = array<i32>} : memref<216x512xf32, #tpu.memory_space<vmem>>, vector<8x512xf32>,
    %c504_i32_97 = arith.constant 504 : i32
    %280 = tpu.dynamic_rotate %187 by %c504_i32_97 dim 1 : vector<8x512xf32>, i32 -> vector<8x512xf32>
    %281 = vector.shape_cast %10 : vector<1x512xi1> to vector<1x512xi1>
    %282 = vector.broadcast %281 : vector<1x512xi1> to vector<8x512xi1>
    %283 = arith.select %282, %280, %188 : vector<8x512xi1>, vector<8x512xf32>
    %c128_98 = arith.constant 128 : index
    %c0_99 = arith.constant 0 : index
    %284 = vector.load %arg11[%c128_98, %c0_99] : memref<216x512xf32, #tpu.memory_space<vmem>>, vector<8x512xf32>
    tpu.vector_store %arg11[%c128_98, %c0_99], %283 {strides = array<i32>} : memref<216x512xf32, #tpu.memory_space<vmem>>, vector<8x512xf32>,
    %c503_i32_100 = arith.constant 503 : i32
    %285 = tpu.dynamic_rotate %187 by %c503_i32_100 dim 1 : vector<8x512xf32>, i32 -> vector<8x512xf32>
    %286 = arith.andi %10, %14 : vector<1x512xi1>
    %287 = vector.shape_cast %286 : vector<1x512xi1> to vector<1x512xi1>
    %288 = vector.broadcast %287 : vector<1x512xi1> to vector<8x512xi1>
    %289 = arith.select %288, %285, %188 : vector<8x512xi1>, vector<8x512xf32>
    %c136_101 = arith.constant 136 : index
    %c0_102 = arith.constant 0 : index
    %290 = vector.load %arg11[%c136_101, %c0_102] : memref<216x512xf32, #tpu.memory_space<vmem>>, vector<8x512xf32>
    tpu.vector_store %arg11[%c136_101, %c0_102], %289 {strides = array<i32>} : memref<216x512xf32, #tpu.memory_space<vmem>>, vector<8x512xf32>,
    %c457_i32_103 = arith.constant 457 : i32
    %291 = tpu.dynamic_rotate %187 by %c457_i32_103 dim 1 : vector<8x512xf32>, i32 -> vector<8x512xf32>
    %292 = arith.andi %6, %8 : vector<1x512xi1>
    %293 = arith.andi %292, %12 : vector<1x512xi1>
    %294 = vector.shape_cast %293 : vector<1x512xi1> to vector<1x512xi1>
    %295 = vector.broadcast %294 : vector<1x512xi1> to vector<8x512xi1>
    %296 = arith.select %295, %291, %188 : vector<8x512xi1>, vector<8x512xf32>
    %c144_104 = arith.constant 144 : index
    %c0_105 = arith.constant 0 : index
    %297 = vector.load %arg11[%c144_104, %c0_105] : memref<216x512xf32, #tpu.memory_space<vmem>>, vector<8x512xf32>
    tpu.vector_store %arg11[%c144_104, %c0_105], %296 {strides = array<i32>} : memref<216x512xf32, #tpu.memory_space<vmem>>, vector<8x512xf32>,
    %c456_i32_106 = arith.constant 456 : i32
    %298 = tpu.dynamic_rotate %187 by %c456_i32_106 dim 1 : vector<8x512xf32>, i32 -> vector<8x512xf32>
    %299 = arith.andi %6, %8 : vector<1x512xi1>
    %300 = vector.shape_cast %299 : vector<1x512xi1> to vector<1x512xi1>
    %301 = vector.broadcast %300 : vector<1x512xi1> to vector<8x512xi1>
    %302 = arith.select %301, %298, %188 : vector<8x512xi1>, vector<8x512xf32>
    %c152_107 = arith.constant 152 : index
    %c0_108 = arith.constant 0 : index
    %303 = vector.load %arg11[%c152_107, %c0_108] : memref<216x512xf32, #tpu.memory_space<vmem>>, vector<8x512xf32>
    tpu.vector_store %arg11[%c152_107, %c0_108], %302 {strides = array<i32>} : memref<216x512xf32, #tpu.memory_space<vmem>>, vector<8x512xf32>,
    %c455_i32_109 = arith.constant 455 : i32
    %304 = tpu.dynamic_rotate %187 by %c455_i32_109 dim 1 : vector<8x512xf32>, i32 -> vector<8x512xf32>
    %305 = arith.andi %6, %8 : vector<1x512xi1>
    %306 = arith.andi %305, %14 : vector<1x512xi1>
    %307 = vector.shape_cast %306 : vector<1x512xi1> to vector<1x512xi1>
    %308 = vector.broadcast %307 : vector<1x512xi1> to vector<8x512xi1>
    %309 = arith.select %308, %304, %188 : vector<8x512xi1>, vector<8x512xf32>
    %c160_110 = arith.constant 160 : index
    %c0_111 = arith.constant 0 : index
    %310 = vector.load %arg11[%c160_110, %c0_111] : memref<216x512xf32, #tpu.memory_space<vmem>>, vector<8x512xf32>
    tpu.vector_store %arg11[%c160_110, %c0_111], %309 {strides = array<i32>} : memref<216x512xf32, #tpu.memory_space<vmem>>, vector<8x512xf32>,
    %c449_i32_112 = arith.constant 449 : i32
    %311 = tpu.dynamic_rotate %187 by %c449_i32_112 dim 1 : vector<8x512xf32>, i32 -> vector<8x512xf32>
    %312 = arith.andi %6, %12 : vector<1x512xi1>
    %313 = vector.shape_cast %312 : vector<1x512xi1> to vector<1x512xi1>
    %314 = vector.broadcast %313 : vector<1x512xi1> to vector<8x512xi1>
    %315 = arith.select %314, %311, %188 : vector<8x512xi1>, vector<8x512xf32>
    %c168_113 = arith.constant 168 : index
    %c0_114 = arith.constant 0 : index
    %316 = vector.load %arg11[%c168_113, %c0_114] : memref<216x512xf32, #tpu.memory_space<vmem>>, vector<8x512xf32>
    tpu.vector_store %arg11[%c168_113, %c0_114], %315 {strides = array<i32>} : memref<216x512xf32, #tpu.memory_space<vmem>>, vector<8x512xf32>,
    %c448_i32_115 = arith.constant 448 : i32
    %317 = tpu.dynamic_rotate %187 by %c448_i32_115 dim 1 : vector<8x512xf32>, i32 -> vector<8x512xf32>
    %318 = vector.shape_cast %6 : vector<1x512xi1> to vector<1x512xi1>
    %319 = vector.broadcast %318 : vector<1x512xi1> to vector<8x512xi1>
    %320 = arith.select %319, %317, %188 : vector<8x512xi1>, vector<8x512xf32>
    %c176_116 = arith.constant 176 : index
    %c0_117 = arith.constant 0 : index
    %321 = vector.load %arg11[%c176_116, %c0_117] : memref<216x512xf32, #tpu.memory_space<vmem>>, vector<8x512xf32>
    tpu.vector_store %arg11[%c176_116, %c0_117], %320 {strides = array<i32>} : memref<216x512xf32, #tpu.memory_space<vmem>>, vector<8x512xf32>,
    %c447_i32_118 = arith.constant 447 : i32
    %322 = tpu.dynamic_rotate %187 by %c447_i32_118 dim 1 : vector<8x512xf32>, i32 -> vector<8x512xf32>
    %323 = arith.andi %6, %14 : vector<1x512xi1>
    %324 = vector.shape_cast %323 : vector<1x512xi1> to vector<1x512xi1>
    %325 = vector.broadcast %324 : vector<1x512xi1> to vector<8x512xi1>
    %326 = arith.select %325, %322, %188 : vector<8x512xi1>, vector<8x512xf32>
    %c184_119 = arith.constant 184 : index
    %c0_120 = arith.constant 0 : index
    %327 = vector.load %arg11[%c184_119, %c0_120] : memref<216x512xf32, #tpu.memory_space<vmem>>, vector<8x512xf32>
    tpu.vector_store %arg11[%c184_119, %c0_120], %326 {strides = array<i32>} : memref<216x512xf32, #tpu.memory_space<vmem>>, vector<8x512xf32>,
    %c441_i32_121 = arith.constant 441 : i32
    %328 = tpu.dynamic_rotate %187 by %c441_i32_121 dim 1 : vector<8x512xf32>, i32 -> vector<8x512xf32>
    %329 = arith.andi %6, %10 : vector<1x512xi1>
    %330 = arith.andi %329, %12 : vector<1x512xi1>
    %331 = vector.shape_cast %330 : vector<1x512xi1> to vector<1x512xi1>
    %332 = vector.broadcast %331 : vector<1x512xi1> to vector<8x512xi1>
    %333 = arith.select %332, %328, %188 : vector<8x512xi1>, vector<8x512xf32>
    %c192_122 = arith.constant 192 : index
    %c0_123 = arith.constant 0 : index
    %334 = vector.load %arg11[%c192_122, %c0_123] : memref<216x512xf32, #tpu.memory_space<vmem>>, vector<8x512xf32>
    tpu.vector_store %arg11[%c192_122, %c0_123], %333 {strides = array<i32>} : memref<216x512xf32, #tpu.memory_space<vmem>>, vector<8x512xf32>,
    %c440_i32_124 = arith.constant 440 : i32
    %335 = tpu.dynamic_rotate %187 by %c440_i32_124 dim 1 : vector<8x512xf32>, i32 -> vector<8x512xf32>
    %336 = arith.andi %6, %10 : vector<1x512xi1>
    %337 = vector.shape_cast %336 : vector<1x512xi1> to vector<1x512xi1>
    %338 = vector.broadcast %337 : vector<1x512xi1> to vector<8x512xi1>
    %339 = arith.select %338, %335, %188 : vector<8x512xi1>, vector<8x512xf32>
    %c200_125 = arith.constant 200 : index
    %c0_126 = arith.constant 0 : index
    %340 = vector.load %arg11[%c200_125, %c0_126] : memref<216x512xf32, #tpu.memory_space<vmem>>, vector<8x512xf32>
    tpu.vector_store %arg11[%c200_125, %c0_126], %339 {strides = array<i32>} : memref<216x512xf32, #tpu.memory_space<vmem>>, vector<8x512xf32>,
    %c439_i32_127 = arith.constant 439 : i32
    %341 = tpu.dynamic_rotate %187 by %c439_i32_127 dim 1 : vector<8x512xf32>, i32 -> vector<8x512xf32>
    %342 = arith.andi %6, %10 : vector<1x512xi1>
    %343 = arith.andi %342, %14 : vector<1x512xi1>
    %344 = vector.shape_cast %343 : vector<1x512xi1> to vector<1x512xi1>
    %345 = vector.broadcast %344 : vector<1x512xi1> to vector<8x512xi1>
    %346 = arith.select %345, %341, %188 : vector<8x512xi1>, vector<8x512xf32>
    %c208_128 = arith.constant 208 : index
    %c0_129 = arith.constant 0 : index
    %347 = vector.load %arg11[%c208_128, %c0_129] : memref<216x512xf32, #tpu.memory_space<vmem>>, vector<8x512xf32>
    tpu.vector_store %arg11[%c208_128, %c0_129], %346 {strides = array<i32>} : memref<216x512xf32, #tpu.memory_space<vmem>>, vector<8x512xf32>,
    %c0_130 = arith.constant 0 : index
    %c0_131 = arith.constant 0 : index
    %348 = vector.load %arg6[%c0_130, %c0_131] : memref<8x216xf32, #tpu.memory_space<vmem>>, vector<8x216xf32>
    %c0_132 = arith.constant 0 : index
    %c0_133 = arith.constant 0 : index
    %349 = vector.load %arg11[%c0_132, %c0_133] : memref<216x512xf32, #tpu.memory_space<vmem>>, vector<216x512xf32>
    %cst_134 = arith.constant dense<0.000000e+00> : vector<8x512xf32>
    %350 = tpu.matmul %348, %349, %cst_134 {dimension_numbers = #tpu.dot_dimension_numbers<[1], [0], [0], [1], [0, 0, 1, 1], [], []>} : vector<8x216xf32>, vector<216x512xf32>, vector<8x512xf32> -> vector<8x512xf32>
    %c0_135 = arith.constant 0 : index
    %c0_136 = arith.constant 0 : index
    %351 = vector.load %arg7[%c0_135, %c0_136] : memref<8x1xf32, #tpu.memory_space<vmem>>, vector<8x1xf32>
    %352 = vector.broadcast %351 : vector<8x1xf32> to vector<8x512xf32>
    %353 = arith.mulf %350, %352 : vector<8x512xf32>
    %c0_137 = arith.constant 0 : index
    %c0_138 = arith.constant 0 : index
    %354 = vector.load %arg8[%c0_137, %c0_138] : memref<8x1xf32, #tpu.memory_space<vmem>>, vector<8x1xf32>
    %355 = vector.broadcast %354 : vector<8x1xf32> to vector<8x512xf32>
    %356 = arith.addf %353, %355 : vector<8x512xf32>
    %cst_139 = arith.constant 0.000000e+00 : f32
    %357 = vector.broadcast %cst_139 : f32 to vector<8x512xf32>
    %358 = arith.maximumf %356, %357 : vector<8x512xf32>
    %c0_140 = arith.constant 0 : index
    %c0_141 = arith.constant 0 : index
    %c0_142 = arith.constant 0 : index
    %359 = vector.load %arg9[%c0_140, %c0_141, %c0_142] : memref<1x8x512xf32, #tpu.memory_space<vmem>>, vector<1x8x512xf32>
    %360 = vector.shape_cast %359 : vector<1x8x512xf32> to vector<8x512xf32>
    %361 = vector.shape_cast %358 : vector<8x512xf32> to vector<1x8x512xf32>
    tpu.vector_store %arg9[%c0_140, %c0_141, %c0_142], %361 {strides = array<i32>} : memref<1x8x512xf32, #tpu.memory_space<vmem>>, vector<1x8x512xf32>,
    return
  }
  func.func @transform_0(%arg0: i32) -> (i32, i32) {
    %c0_i32 = arith.constant 0 : i32
    %c0_i32_0 = arith.constant 0 : i32
    %c0_i32_1 = arith.constant 0 : i32
    return %c0_i32, %c0_i32_0 : i32, i32
  }
  func.func @transform_1(%arg0: i32) -> (i32, i32, i32) {
    %c0_i32 = arith.constant 0 : i32
    %c0_i32_0 = arith.constant 0 : i32
    %c0_i32_1 = arith.constant 0 : i32
    return %arg0, %c0_i32, %c0_i32_0 : i32, i32, i32
  }
  func.func @transform_2(%arg0: i32) -> (i32, i32) {
    %c0_i32 = arith.constant 0 : i32
    %c0_i32_0 = arith.constant 0 : i32
    %c0_i32_1 = arith.constant 0 : i32
    return %c0_i32, %c0_i32_0 : i32, i32
  }
  func.func @transform_3(%arg0: i32) -> (i32, i32) {
    %c0_i32 = arith.constant 0 : i32
    %c0_i32_0 = arith.constant 0 : i32
    %c0_i32_1 = arith.constant 0 : i32
    return %c0_i32, %c0_i32_0 : i32, i32
  }
  func.func @transform_4(%arg0: i32) -> (i32, i32) {
    %c0_i32 = arith.constant 0 : i32
    %c0_i32_0 = arith.constant 0 : i32
    %c0_i32_1 = arith.constant 0 : i32
    return %c0_i32, %c0_i32_0 : i32, i32
  }
  func.func @transform_5(%arg0: i32) -> (i32, i32) {
    %c0_i32 = arith.constant 0 : i32
    %c0_i32_0 = arith.constant 0 : i32
    %c0_i32_1 = arith.constant 0 : i32
    return %c0_i32, %c0_i32_0 : i32, i32
  }
  func.func @transform_6(%arg0: i32) -> (i32, i32) {
    %c0_i32 = arith.constant 0 : i32
    %c0_i32_0 = arith.constant 0 : i32
    %c0_i32_1 = arith.constant 0 : i32
    return %c0_i32, %c0_i32_0 : i32, i32
  }
  func.func @transform_7(%arg0: i32) -> (i32, i32) {
    %c0_i32 = arith.constant 0 : i32
    %c0_i32_0 = arith.constant 0 : i32
    %c0_i32_1 = arith.constant 0 : i32
    return %c0_i32, %c0_i32_0 : i32, i32
  }
  func.func @transform_8(%arg0: i32) -> (i32, i32, i32) {
    %c0_i32 = arith.constant 0 : i32
    %c0_i32_0 = arith.constant 0 : i32
    %c0_i32_1 = arith.constant 0 : i32
    return %arg0, %c0_i32, %c0_i32_0 : i32, i32, i32
  }
}

</mosaic_0001>

<llo_original>
// kernel: tpu_custom_call.1
$region0: #{tpu_custom_call.1}
  #allocation0 [shape = 'u32[]', space=smem, size = 0x4, offset = 0x4, fixed_abs, tag = 'smem constant byte address 0x4 - core index']
  #allocation1 [shape = 'u32[144,128]{1,0:T(1,128)}', space=vmem, size = 0x12000, scoped, tag = 'internal scratch']
  #allocation2 [shape = 'f32[216,512]{1,0:T(8,128)}', space=vmem, size = 0x6c000, scoped, tag = 'scratch operand']
  #allocation3 [shape = 'f32[216,512]{1,0:T(8,128)}', space=vmem, size = 0x6c000, scoped, tag = 'scratch operand']
  %s0 = inlined_call_operand.vmem [shape: s32[3,512], index: 0, kind: input, shape index: {}]
  %s1 = inlined_call_operand.hbm [shape: f32[2,8,512], index: 1, kind: input, shape index: {}]
  %s2 = inlined_call_operand.vmem [shape: f32[8,216], index: 2, kind: input, shape index: {}]
  %s3 = inlined_call_operand.vmem [shape: f32[8,1], index: 3, kind: input, shape index: {}]
  %s4 = inlined_call_operand.vmem [shape: f32[8,1], index: 4, kind: input, shape index: {}]
  %s5 = inlined_call_operand.hbm [shape: f32[8,216], index: 5, kind: input, shape index: {}]
  %s6 = inlined_call_operand.vmem [shape: f32[8,1], index: 6, kind: input, shape index: {}]
  %s7 = inlined_call_operand.vmem [shape: f32[8,1], index: 7, kind: input, shape index: {}]
  %s8 = inlined_call_operand.hbm [shape: f32[2,8,512], index: 8, kind: output, shape index: {}]
  %s9 = sld [smem:[#allocation0]]
  $region73: #{tpu_custom_call.1} parent=0
    _
  %s11 = ssub.s32 1, %s9
  %s12 = scalar_select 0, %s11, %s9
  $region1: #{tpu_custom_call.1} parent=0
    #allocation4 [shape = 'u8[32768]{0}', space=vmem, size = 0x8000, scoped, tag = 'input window, operand 1']
    #allocation5 [shape = 's32[2]{0}', space=sflag, size = 0x8, scoped, tag = 'scoped memory for tpu_custom_call.1']
    #allocation6 [shape = 's32[2]{0}', space=sflag, size = 0x8, scoped, tag = 'scoped memory for tpu_custom_call.1']
    #allocation7 [shape = 'u8[8192]{0}', space=vmem, size = 0x2000, scoped, tag = 'input window, operand 5, single buffered']
    #allocation8 [shape = 's32[1]{0}', space=sflag, size = 0x4, scoped, tag = 'scoped memory for tpu_custom_call.1']
    #allocation9 [shape = 'u8[32768]{0}', space=vmem, size = 0x8000, scoped, tag = 'output window, operand 0']
    %13 = vsyncpa [#allocation5], 0
    %s14 = scalar_lea.sflag [#allocation5], 1
    %15 = vsyncpa %s14, 0
    %16 = vsyncpa [#allocation8], 0
    %17 = vsyncpa [#allocation6], 0
    %s18 = scalar_lea.sflag [#allocation6], 1
    %19 = vsyncpa %s18, 0
    loop: start=0, step=1, limit=4
    $region2: #{tpu_custom_call.1} parent=1 // loop_pre_header
      _
    $region3: #{tpu_custom_call.1} parent=1 // loop_header
      %s21 = sphi 0, %s25
      %p22 = scmp.ge.s32.totalorder %s21, 4
      %s29 = sphi 0, %s29
      %s31 = sphi 0, %s29
      %s32 = sphi 0, %s31
      %s46 = sphi 0, %s32
      %s52 = sphi 0, %s54
      %s55 = sphi 0, %s52
      %s56 = sphi 0, %s55
      %s72 = sphi 0, %s56
      %s76 = sphi 0, %s76
      %s78 = sphi 0, %s76
      %s79 = sphi 0, %s78
      %s93 = sphi 0, %s79
      %s97 = sphi 0, %s97
      %s99 = sphi 0, %s97
      %s100 = sphi 0, %s99
      %s114 = sphi 0, %s100
      %s118 = sphi 0, %s118
      %s120 = sphi 0, %s118
      %s121 = sphi 0, %s120
      %s135 = sphi 0, %s121
      %s139 = sphi 0, %s139
      %s141 = sphi 0, %s139
      %s142 = sphi 0, %s141
      %s156 = sphi 0, %s142
      %s160 = sphi 0, %s160
      %s162 = sphi 0, %s160
      %s163 = sphi 0, %s162
      %s177 = sphi 0, %s163
      %s181 = sphi 0, %s181
      %s183 = sphi 0, %s181
      %s184 = sphi 0, %s183
      %s198 = sphi 0, %s184
      %s204 = sphi 0, %s206
      %s207 = sphi 0, %s204
      %s208 = sphi 0, %s207
      %s224 = sphi 0, %s208
    $region4: #{tpu_custom_call.1} parent=1 // loop_header_branch
      %24 = sbr.rel (%p22) target = $region8
    $region5: #{tpu_custom_call.1} parent=1 // loop_body
      %s26 = ssub.s32 %s21, 1
      %s27 = ssub.s32 %s21, 2
      %s28 = sadd.s32 %s21, 1
      %s30 = sadd.s32 %s29, 1
      %p33 = scmp.eq.s32.totalorder %s21, 1
      %p34 = scmp.ne.s32.totalorder %s29, %s31
      %p35 = scmp.eq.s32.totalorder %s21, 0
      %p36 = por %p34, %p35
      %p37 = scmp.ne.s32.totalorder %s29, %s31
      %p38 = scmp.eq.s32.totalorder %s26, 1
      %p39 = por %p37, %p38
      %p40 = scmp.ne.s32.totalorder %s31, %s32
      %p41 = scmp.eq.s32.totalorder %s26, 0
      %p42 = por %p40, %p41
      %p43 = scmp.ne.s32.totalorder %s31, %s32
      %p44 = scmp.eq.s32.totalorder %s27, 1
      %p45 = por %p43, %p44
      %p47 = scmp.ne.s32.totalorder %s32, %s46
      %p48 = scmp.eq.s32.totalorder %s27, 0
      %p49 = por %p47, %p48
      %s50 = ssub.s32 %s21, %s28
      %p51 = scmp.eq.s32.totalorder %s50, 0
      %s53 = sadd.s32 %s52, 1
      %s54 = scalar_select %p51, %s52, %s53
      %p57 = pneg %p51
      %p58 = scmp.eq.s32.totalorder %s21, 1
      %p59 = por %p57, %p58
      %p60 = scmp.ne.s32.totalorder %s52, %s55
      %p61 = scmp.eq.s32.totalorder %s21, 0
      %p62 = por %p60, %p61
      %p63 = scmp.ne.s32.totalorder %s52, %s55
      %p64 = scmp.eq.s32.totalorder %s26, 1
      %p65 = por %p63, %p64
      %p66 = scmp.ne.s32.totalorder %s55, %s56
      %p67 = scmp.eq.s32.totalorder %s26, 0
      %p68 = por %p66, %p67
      %p69 = scmp.ne.s32.totalorder %s55, %s56
      %p70 = scmp.eq.s32.totalorder %s27, 1
      %p71 = por %p69, %p70
      %p73 = scmp.ne.s32.totalorder %s56, %s72
      %p74 = scmp.eq.s32.totalorder %s27, 0
      %p75 = por %p73, %p74
      %s77 = sadd.s32 %s76, 1
      %p80 = scmp.eq.s32.totalorder %s21, 1
      %p81 = scmp.ne.s32.totalorder %s76, %s78
      %p82 = scmp.eq.s32.totalorder %s21, 0
      %p83 = por %p81, %p82
      %p84 = scmp.ne.s32.totalorder %s76, %s78
      %p85 = scmp.eq.s32.totalorder %s26, 1
      %p86 = por %p84, %p85
      %p87 = scmp.ne.s32.totalorder %s78, %s79
      %p88 = scmp.eq.s32.totalorder %s26, 0
      %p89 = por %p87, %p88
      %p90 = scmp.ne.s32.totalorder %s78, %s79
      %p91 = scmp.eq.s32.totalorder %s27, 1
      %p92 = por %p90, %p91
      %p94 = scmp.ne.s32.totalorder %s79, %s93
      %p95 = scmp.eq.s32.totalorder %s27, 0
      %p96 = por %p94, %p95
      %s98 = sadd.s32 %s97, 1
      %p101 = scmp.eq.s32.totalorder %s21, 1
      %p102 = scmp.ne.s32.totalorder %s97, %s99
      %p103 = scmp.eq.s32.totalorder %s21, 0
      %p104 = por %p102, %p103
      %p105 = scmp.ne.s32.totalorder %s97, %s99
      %p106 = scmp.eq.s32.totalorder %s26, 1
      %p107 = por %p105, %p106
      %p108 = scmp.ne.s32.totalorder %s99, %s100
      %p109 = scmp.eq.s32.totalorder %s26, 0
      %p110 = por %p108, %p109
      %p111 = scmp.ne.s32.totalorder %s99, %s100
      %p112 = scmp.eq.s32.totalorder %s27, 1
      %p113 = por %p111, %p112
      %p115 = scmp.ne.s32.totalorder %s100, %s114
      %p116 = scmp.eq.s32.totalorder %s27, 0
      %p117 = por %p115, %p116
      %s119 = sadd.s32 %s118, 1
      %p122 = scmp.eq.s32.totalorder %s21, 1
      %p123 = scmp.ne.s32.totalorder %s118, %s120
      %p124 = scmp.eq.s32.totalorder %s21, 0
      %p125 = por %p123, %p124
      %p126 = scmp.ne.s32.totalorder %s118, %s120
      %p127 = scmp.eq.s32.totalorder %s26, 1
      %p128 = por %p126, %p127
      %p129 = scmp.ne.s32.totalorder %s120, %s121
      %p130 = scmp.eq.s32.totalorder %s26, 0
      %p131 = por %p129, %p130
      %p132 = scmp.ne.s32.totalorder %s120, %s121
      %p133 = scmp.eq.s32.totalorder %s27, 1
      %p134 = por %p132, %p133
      %p136 = scmp.ne.s32.totalorder %s121, %s135
      %p137 = scmp.eq.s32.totalorder %s27, 0
      %p138 = por %p136, %p137
      %s140 = sadd.s32 %s139, 1
      %p143 = scmp.eq.s32.totalorder %s21, 1
      %p144 = scmp.ne.s32.totalorder %s139, %s141
      %p145 = scmp.eq.s32.totalorder %s21, 0
      %p146 = por %p144, %p145
      %p147 = scmp.ne.s32.totalorder %s139, %s141
      %p148 = scmp.eq.s32.totalorder %s26, 1
      %p149 = por %p147, %p148
      %p150 = scmp.ne.s32.totalorder %s141, %s142
      %p151 = scmp.eq.s32.totalorder %s26, 0
      %p152 = por %p150, %p151
      %p153 = scmp.ne.s32.totalorder %s141, %s142
      %p154 = scmp.eq.s32.totalorder %s27, 1
      %p155 = por %p153, %p154
      %p157 = scmp.ne.s32.totalorder %s142, %s156
      %p158 = scmp.eq.s32.totalorder %s27, 0
      %p159 = por %p157, %p158
      %s161 = sadd.s32 %s160, 1
      %p164 = scmp.eq.s32.totalorder %s21, 1
      %p165 = scmp.ne.s32.totalorder %s160, %s162
      %p166 = scmp.eq.s32.totalorder %s21, 0
      %p167 = por %p165, %p166
      %p168 = scmp.ne.s32.totalorder %s160, %s162
      %p169 = scmp.eq.s32.totalorder %s26, 1
      %p170 = por %p168, %p169
      %p171 = scmp.ne.s32.totalorder %s162, %s163
      %p172 = scmp.eq.s32.totalorder %s26, 0
      %p173 = por %p171, %p172
      %p174 = scmp.ne.s32.totalorder %s162, %s163
      %p175 = scmp.eq.s32.totalorder %s27, 1
      %p176 = por %p174, %p175
      %p178 = scmp.ne.s32.totalorder %s163, %s177
      %p179 = scmp.eq.s32.totalorder %s27, 0
      %p180 = por %p178, %p179
      %s182 = sadd.s32 %s181, 1
      %p185 = scmp.eq.s32.totalorder %s21, 1
      %p186 = scmp.ne.s32.totalorder %s181, %s183
      %p187 = scmp.eq.s32.totalorder %s21, 0
      %p188 = por %p186, %p187
      %p189 = scmp.ne.s32.totalorder %s181, %s183
      %p190 = scmp.eq.s32.totalorder %s26, 1
      %p191 = por %p189, %p190
      %p192 = scmp.ne.s32.totalorder %s183, %s184
      %p193 = scmp.eq.s32.totalorder %s26, 0
      %p194 = por %p192, %p193
      %p195 = scmp.ne.s32.totalorder %s183, %s184
      %p196 = scmp.eq.s32.totalorder %s27, 1
      %p197 = por %p195, %p196
      %p199 = scmp.ne.s32.totalorder %s184, %s198
      %p200 = scmp.eq.s32.totalorder %s27, 0
      %p201 = por %p199, %p200
      %s202 = ssub.s32 %s21, %s28
      %p203 = scmp.eq.s32.totalorder %s202, 0
      %s205 = sadd.s32 %s204, 1
      %s206 = scalar_select %p203, %s204, %s205
      %p209 = pneg %p203
      %p210 = scmp.eq.s32.totalorder %s21, 1
      %p211 = por %p209, %p210
      %p212 = scmp.ne.s32.totalorder %s204, %s207
      %p213 = scmp.eq.s32.totalorder %s21, 0
      %p214 = por %p212, %p213
      %p215 = scmp.ne.s32.totalorder %s204, %s207
      %p216 = scmp.eq.s32.totalorder %s26, 1
      %p217 = por %p215, %p216
      %p218 = scmp.ne.s32.totalorder %s207, %s208
      %p219 = scmp.eq.s32.totalorder %s26, 0
      %p220 = por %p218, %p219
      %p221 = scmp.ne.s32.totalorder %s207, %s208
      %p222 = scmp.eq.s32.totalorder %s27, 1
      %p223 = por %p221, %p222
      %p225 = scmp.ne.s32.totalorder %s208, %s224
      %p226 = scmp.eq.s32.totalorder %s27, 0
      %p227 = por %p225, %p226
      %p228 = scmp.le.s32.totalorder 1, %s21
      %p229 = scmp.lt.s32.totalorder %s21, 3
      %p230 = pnand %p228, %p229
      %p231 = pneg %p230
      // Predicated region
      $region9: #{tpu_custom_call.1} parent=5 // pred_check
        _
      $region10: #{tpu_custom_call.1} parent=5 // pred_check_branch
        %233 = sbr.rel (%p230) target = $region12
      $region11: #{tpu_custom_call.1} parent=5 // pred_region
        %s234 = ssub.s32 %s21, 1
        // Predicated region
        $region13: #{tpu_custom_call.1} parent=11 // pred_check
          %p235 = pneg %p42
        $region14: #{tpu_custom_call.1} parent=11 // pred_check_branch
          %237 = sbr.rel (%p235) target = $region16
        $region15: #{tpu_custom_call.1} parent=11 // pred_region
          _
        $region16: #{tpu_custom_call.1} parent=11 // pred_fallthru
          _
        // Predicated region
        $region17: #{tpu_custom_call.1} parent=11 // pred_check
          %p238 = pneg %p89
        $region18: #{tpu_custom_call.1} parent=11 // pred_check_branch
          %240 = sbr.rel (%p238) target = $region20
        $region19: #{tpu_custom_call.1} parent=11 // pred_region
          _
        $region20: #{tpu_custom_call.1} parent=11 // pred_fallthru
          _
        // Predicated region
        $region21: #{tpu_custom_call.1} parent=11 // pred_check
          %p241 = pneg %p110
        $region22: #{tpu_custom_call.1} parent=11 // pred_check_branch
          %243 = sbr.rel (%p241) target = $region24
        $region23: #{tpu_custom_call.1} parent=11 // pred_region
          _
        $region24: #{tpu_custom_call.1} parent=11 // pred_fallthru
          _
        // Predicated region
        $region25: #{tpu_custom_call.1} parent=11 // pred_check
          %p244 = pneg %p131
        $region26: #{tpu_custom_call.1} parent=11 // pred_check_branch
          %246 = sbr.rel (%p244) target = $region28
        $region27: #{tpu_custom_call.1} parent=11 // pred_region
          _
        $region28: #{tpu_custom_call.1} parent=11 // pred_fallthru
          _
        // Predicated region
        $region29: #{tpu_custom_call.1} parent=11 // pred_check
          %p247 = pneg %p152
        $region30: #{tpu_custom_call.1} parent=11 // pred_check_branch
          %249 = sbr.rel (%p247) target = $region32
        $region31: #{tpu_custom_call.1} parent=11 // pred_region
          %s251 = ssub.s32 256, 256
          %252 = vsyncadd [#allocation8], %s251
          %s254 = sshll.u32 [#allocation7], 4
          %s255 = int_to_ptr.vmem [resolvable:$true] %s254
          %257 = dma.hbm_to_vmem [thread:$0]  %s5, 256, %s255, [#allocation8]
        $region32: #{tpu_custom_call.1} parent=11 // pred_fallthru
          _
        // Predicated region
        $region33: #{tpu_custom_call.1} parent=11 // pred_check
          %p258 = pneg %p173
        $region34: #{tpu_custom_call.1} parent=11 // pred_check_branch
          %260 = sbr.rel (%p258) target = $region36
        $region35: #{tpu_custom_call.1} parent=11 // pred_region
          _
        $region36: #{tpu_custom_call.1} parent=11 // pred_fallthru
          _
        // Predicated region
        $region37: #{tpu_custom_call.1} parent=11 // pred_check
          %p261 = pneg %p194
        $region38: #{tpu_custom_call.1} parent=11 // pred_check_branch
          %263 = sbr.rel (%p261) target = $region40
        $region39: #{tpu_custom_call.1} parent=11 // pred_region
          _
        $region40: #{tpu_custom_call.1} parent=11 // pred_fallthru
          _
      $region12: #{tpu_custom_call.1} parent=5 // pred_fallthru
        _
      %p264 = scmp.lt.s32.totalorder %s21, 2
      // Predicated region
      $region41: #{tpu_custom_call.1} parent=5 // pred_check
        %p265 = pneg %p264
      $region42: #{tpu_custom_call.1} parent=5 // pred_check_branch
        %267 = sbr.rel (%p265) target = $region44
      $region43: #{tpu_custom_call.1} parent=5 // pred_region
        // Predicated region
        $region45: #{tpu_custom_call.1} parent=43 // pred_check
          %p268 = pneg %p62
        $region46: #{tpu_custom_call.1} parent=43 // pred_check_branch
          %270 = sbr.rel (%p268) target = $region48
        $region47: #{tpu_custom_call.1} parent=43 // pred_region
          %s271 = sand.u32 %s52, 1
          %s272 = scalar_lea.sflag [#allocation5], %s271
          %s273 = sand.u32 %s52, 1
          %s274 = smul.addr %s273, 32
          %s275 = scalar_lea.vmem [#allocation4], %s274
          %s277 = ssub.s32 512, 512
          %278 = vsyncadd %s272, %s277
          %s279 = smul.addr %s21, 4
          %s280 = smul.addr %s279, 128
          %s281 = scalar_lea.hbm %s1, %s280
          %s283 = sshll.u32 %s275, 4
          %s284 = int_to_ptr.vmem [resolvable:$true] %s283
          %286 = dma.hbm_to_vmem [thread:$0]  %s281, 512, %s284, %s272
        $region48: #{tpu_custom_call.1} parent=43 // pred_fallthru
          _
      $region44: #{tpu_custom_call.1} parent=5 // pred_fallthru
        _
      %p287 = scmp.le.s32.totalorder 1, %s21
      %p288 = scmp.lt.s32.totalorder %s21, 3
      %p289 = pnand %p287, %p288
      %p290 = pneg %p289
      // Predicated region
      $region49: #{tpu_custom_call.1} parent=5 // pred_check
        _
      $region50: #{tpu_custom_call.1} parent=5 // pred_check_branch
        %292 = sbr.rel (%p289) target = $region52
      $region51: #{tpu_custom_call.1} parent=5 // pred_region
        %s293 = ssub.s32 %s21, 1
        %s294 = sand.u32 %s55, 1
        %s295 = scalar_lea.sflag [#allocation5], %s294
        %s296 = sand.u32 %s55, 1
        %s297 = smul.addr %s296, 32
        %s298 = scalar_lea.vmem [#allocation4], %s297
        // Predicated region
        $region53: #{tpu_custom_call.1} parent=51 // pred_check
          %p299 = pneg %p68
        $region54: #{tpu_custom_call.1} parent=51 // pred_check_branch
          %301 = sbr.rel (%p299) target = $region56
        $region55: #{tpu_custom_call.1} parent=51 // pred_region
          %302 = dma.done %s295, 512
        $region56: #{tpu_custom_call.1} parent=51 // pred_fallthru
          _
        // Predicated region
        $region57: #{tpu_custom_call.1} parent=51 // pred_check
          %p303 = pneg %p152
        $region58: #{tpu_custom_call.1} parent=51 // pred_check_branch
          %305 = sbr.rel (%p303) target = $region60
        $region59: #{tpu_custom_call.1} parent=51 // pred_region
          %306 = dma.done [#allocation8], 256
        $region60: #{tpu_custom_call.1} parent=51 // pred_fallthru
          _
        %p307 = pneg %p42
        %p308 = pneg %p39
        %s309 = sand.u32 %s55, 1
        %s310 = scalar_lea.sflag [#allocation5], %s309
        %s311 = sand.u32 %s55, 1
        %s312 = smul.addr %s311, 32
        %s313 = scalar_lea.vmem [#allocation4], %s312
        %p314 = pneg %p68
        %p315 = pneg %p65
        %p316 = pneg %p89
        %p317 = pneg %p86
        %p318 = pneg %p110
        %p319 = pneg %p107
        %p320 = pneg %p131
        %p321 = pneg %p128
        %p322 = pneg %p152
        %p323 = pneg %p149
        %p324 = pneg %p173
        %p325 = pneg %p170
        %p326 = pneg %p194
        %p327 = pneg %p191
        %p328 = pneg %p220
        %p329 = pneg %p217
        %s330 = sand.u32 %s207, 1
        %s331 = scalar_lea.sflag [#allocation6], %s330
        %s332 = sand.u32 %s207, 1
        %s333 = smul.addr %s332, 32
        %s334 = scalar_lea.vmem [#allocation9], %s333
        %v335 = vld [vmem:[%s0] ss:$4 sm:$0xf]
        %s336 = scalar_lea.vmem %s0, 1
        %v337 = vld [vmem:[%s336] ss:$4 sm:$0xf]
        %s338 = scalar_lea.vmem %s0, 2
        %v339 = vld [vmem:[%s338] ss:$4 sm:$0xf]
        %vm340 = vcmp.gt.s32.totalorder %v335, 0
        %vm341 = vcmp.lt.s32.totalorder %v335, 7
        %vm342 = vcmp.gt.s32.totalorder %v337, 0
        %vm343 = vcmp.lt.s32.totalorder %v337, 7
        %vm344 = vcmp.gt.s32.totalorder %v339, 0
        %vm345 = vcmp.lt.s32.totalorder %v339, 7
        %v346 = vld [vmem:[%s298] sm:$0xff]
        %v347 = vld [vmem:[%s298 + $0x8] sm:$0xff]
        %v348 = vld [vmem:[%s298 + $0x10] sm:$0xff]
        %v349 = vld [vmem:[%s298 + $0x18] sm:$0xff]
        %350 = vrot.lane.b32.xlu0 %v346, 73
        %v351 = vpop.permute.xlu0 %350
        %352 = vrot.lane.b32.xlu0 %v347, 73
        %v353 = vpop.permute.xlu0 %352
        %354 = vrot.lane.b32.xlu0 %v348, 73
        %v355 = vpop.permute.xlu0 %354
        %356 = vrot.lane.b32.xlu0 %v349, 73
        %v357 = vpop.permute.xlu0 %356
        %v358 = vlaneseq
        %v359 = vand.u32 %v358, 127
        %vm360 = vcmp.lt.s32.totalorder %v359, 73
        %v361 = vsel %vm360, %v355, %v357
        %v362 = vsel %vm360, %v353, %v355
        %v363 = vsel %vm360, %v351, %v353
        %v364 = vsel %vm360, %v357, %v351
        %vm365 = vmand %vm340, %vm342
        %vm366 = vmand %vm365, %vm344
        %v367 = vsel %vm366, 1, 0
        %v368 = vlaneseq
        %v369 = vshrl.u32 %v368, 7
        %v370 = vsub.s32 0, %v369
        %v371 = vrot.slane %v367, %v370
        %v372 = vlaneseq
        %v373 = vshrl.u32 %v372, 7
        %v374 = vsub.s32 1, %v373
        %v375 = vrot.slane %v367, %v374
        %v376 = vlaneseq
        %v377 = vshrl.u32 %v376, 7
        %v378 = vsub.s32 2, %v377
        %v379 = vrot.slane %v367, %v378
        %v380 = vlaneseq
        %v381 = vshrl.u32 %v380, 7
        %v382 = vsub.s32 3, %v381
        %v383 = vrot.slane %v367, %v382
        %vm384 = vcmp.eq.s32.totalorder %v371, 1
        %vm385 = vcmp.eq.s32.totalorder %v375, 1
        %vm386 = vcmp.eq.s32.totalorder %v379, 1
        %vm387 = vcmp.eq.s32.totalorder %v383, 1
        %v388 = vsel %vm384, %v364, 0.0
        %v389 = vsel %vm385, %v363, 0.0
        %v390 = vsel %vm386, %v362, 0.0
        %v391 = vsel %vm387, %v361, 0.0
        %392 = vst [vmem:[#allocation2] sm:$0xff] %v388
        %393 = vst [vmem:[#allocation2 + $0x8] sm:$0xff] %v389
        %394 = vst [vmem:[#allocation2 + $0x10] sm:$0xff] %v390
        %395 = vst [vmem:[#allocation2 + $0x18] sm:$0xff] %v391
        %396 = vrot.lane.b32.xlu0 %v346, 72
        %v397 = vpop.permute.xlu0 %396
        %398 = vrot.lane.b32.xlu0 %v347, 72
        %v399 = vpop.permute.xlu0 %398
        %400 = vrot.lane.b32.xlu0 %v348, 72
        %v401 = vpop.permute.xlu0 %400
        %402 = vrot.lane.b32.xlu0 %v349, 72
        %v403 = vpop.permute.xlu0 %402
        %vm404 = vcmp.lt.s32.totalorder %v359, 72
        %v405 = vsel %vm404, %v401, %v403
        %v406 = vsel %vm404, %v399, %v401
        %v407 = vsel %vm404, %v397, %v399
        %v408 = vsel %vm404, %v403, %v397
        %v409 = vsel %vm365, 1, 0
        %v410 = vlaneseq
        %v411 = vshrl.u32 %v410, 7
        %v412 = vsub.s32 0, %v411
        %v413 = vrot.slane %v409, %v412
        %v414 = vlaneseq
        %v415 = vshrl.u32 %v414, 7
        %v416 = vsub.s32 1, %v415
        %v417 = vrot.slane %v409, %v416
        %v418 = vlaneseq
        %v419 = vshrl.u32 %v418, 7
        %v420 = vsub.s32 2, %v419
        %v421 = vrot.slane %v409, %v420
        %v422 = vlaneseq
        %v423 = vshrl.u32 %v422, 7
        %v424 = vsub.s32 3, %v423
        %v425 = vrot.slane %v409, %v424
        %vm426 = vcmp.eq.s32.totalorder %v413, 1
        %vm427 = vcmp.eq.s32.totalorder %v417, 1
        %vm428 = vcmp.eq.s32.totalorder %v421, 1
        %vm429 = vcmp.eq.s32.totalorder %v425, 1
        %v430 = vsel %vm426, %v408, 0.0
        %v431 = vsel %vm427, %v407, 0.0
        %v432 = vsel %vm428, %v406, 0.0
        %v433 = vsel %vm429, %v405, 0.0
        %434 = vst [vmem:[#allocation2 + $0x20] sm:$0xff] %v430
        %435 = vst [vmem:[#allocation2 + $0x28] sm:$0xff] %v431
        %436 = vst [vmem:[#allocation2 + $0x30] sm:$0xff] %v432
        %437 = vst [vmem:[#allocation2 + $0x38] sm:$0xff] %v433
        %438 = vrot.lane.b32.xlu0 %v346, 71
        %v439 = vpop.permute.xlu0 %438
        %440 = vrot.lane.b32.xlu0 %v347, 71
        %v441 = vpop.permute.xlu0 %440
        %442 = vrot.lane.b32.xlu0 %v348, 71
        %v443 = vpop.permute.xlu0 %442
        %444 = vrot.lane.b32.xlu0 %v349, 71
        %v445 = vpop.permute.xlu0 %444
        %vm446 = vcmp.lt.s32.totalorder %v359, 71
        %v447 = vsel %vm446, %v443, %v445
        %v448 = vsel %vm446, %v441, %v443
        %v449 = vsel %vm446, %v439, %v441
        %v450 = vsel %vm446, %v445, %v439
        %vm451 = vmand %vm365, %vm345
        %v452 = vsel %vm451, 1, 0
        %v453 = vlaneseq
        %v454 = vshrl.u32 %v453, 7
        %v455 = vsub.s32 0, %v454
        %v456 = vrot.slane %v452, %v455
        %v457 = vlaneseq
        %v458 = vshrl.u32 %v457, 7
        %v459 = vsub.s32 1, %v458
        %v460 = vrot.slane %v452, %v459
        %v461 = vlaneseq
        %v462 = vshrl.u32 %v461, 7
        %v463 = vsub.s32 2, %v462
        %v464 = vrot.slane %v452, %v463
        %v465 = vlaneseq
        %v466 = vshrl.u32 %v465, 7
        %v467 = vsub.s32 3, %v466
        %v468 = vrot.slane %v452, %v467
        %vm469 = vcmp.eq.s32.totalorder %v456, 1
        %vm470 = vcmp.eq.s32.totalorder %v460, 1
        %vm471 = vcmp.eq.s32.totalorder %v464, 1
        %vm472 = vcmp.eq.s32.totalorder %v468, 1
        %v473 = vsel %vm469, %v450, 0.0
        %v474 = vsel %vm470, %v449, 0.0
        %v475 = vsel %vm471, %v448, 0.0
        %v476 = vsel %vm472, %v447, 0.0
        %477 = vst [vmem:[#allocation2 + $0x40] sm:$0xff] %v473
        %478 = vst [vmem:[#allocation2 + $0x48] sm:$0xff] %v474
        %479 = vst [vmem:[#allocation2 + $0x50] sm:$0xff] %v475
        %480 = vst [vmem:[#allocation2 + $0x58] sm:$0xff] %v476
        %481 = vrot.lane.b32.xlu0 %v346, 65
        %v482 = vpop.permute.xlu0 %481
        %483 = vrot.lane.b32.xlu0 %v347, 65
        %v484 = vpop.permute.xlu0 %483
        %485 = vrot.lane.b32.xlu0 %v348, 65
        %v486 = vpop.permute.xlu0 %485
        %487 = vrot.lane.b32.xlu0 %v349, 65
        %v488 = vpop.permute.xlu0 %487
        %vm489 = vcmp.lt.s32.totalorder %v359, 65
        %v490 = vsel %vm489, %v486, %v488
        %v491 = vsel %vm489, %v484, %v486
        %v492 = vsel %vm489, %v482, %v484
        %v493 = vsel %vm489, %v488, %v482
        %vm494 = vmand %vm340, %vm344
        %v495 = vsel %vm494, 1, 0
        %v496 = vlaneseq
        %v497 = vshrl.u32 %v496, 7
        %v498 = vsub.s32 0, %v497
        %v499 = vrot.slane %v495, %v498
        %v500 = vlaneseq
        %v501 = vshrl.u32 %v500, 7
        %v502 = vsub.s32 1, %v501
        %v503 = vrot.slane %v495, %v502
        %v504 = vlaneseq
        %v505 = vshrl.u32 %v504, 7
        %v506 = vsub.s32 2, %v505
        %v507 = vrot.slane %v495, %v506
        %v508 = vlaneseq
        %v509 = vshrl.u32 %v508, 7
        %v510 = vsub.s32 3, %v509
        %v511 = vrot.slane %v495, %v510
        %vm512 = vcmp.eq.s32.totalorder %v499, 1
        %vm513 = vcmp.eq.s32.totalorder %v503, 1
        %vm514 = vcmp.eq.s32.totalorder %v507, 1
        %vm515 = vcmp.eq.s32.totalorder %v511, 1
        %v516 = vsel %vm512, %v493, 0.0
        %v517 = vsel %vm513, %v492, 0.0
        %v518 = vsel %vm514, %v491, 0.0
        %v519 = vsel %vm515, %v490, 0.0
        %520 = vst [vmem:[#allocation2 + $0x60] sm:$0xff] %v516
        %521 = vst [vmem:[#allocation2 + $0x68] sm:$0xff] %v517
        %522 = vst [vmem:[#allocation2 + $0x70] sm:$0xff] %v518
        %523 = vst [vmem:[#allocation2 + $0x78] sm:$0xff] %v519
        %524 = vrot.lane.b32.xlu0 %v346, 64
        %v525 = vpop.permute.xlu0 %524
        %526 = vrot.lane.b32.xlu0 %v347, 64
        %v527 = vpop.permute.xlu0 %526
        %528 = vrot.lane.b32.xlu0 %v348, 64
        %v529 = vpop.permute.xlu0 %528
        %530 = vrot.lane.b32.xlu0 %v349, 64
        %v531 = vpop.permute.xlu0 %530
        %vm532 = vcmp.lt.s32.totalorder %v359, 64
        %v533 = vsel %vm532, %v529, %v531
        %v534 = vsel %vm532, %v527, %v529
        %v535 = vsel %vm532, %v525, %v527
        %v536 = vsel %vm532, %v531, %v525
        %v537 = vsel %vm340, 1, 0
        %v538 = vlaneseq
        %v539 = vshrl.u32 %v538, 7
        %v540 = vsub.s32 0, %v539
        %v541 = vrot.slane %v537, %v540
        %v542 = vlaneseq
        %v543 = vshrl.u32 %v542, 7
        %v544 = vsub.s32 1, %v543
        %v545 = vrot.slane %v537, %v544
        %v546 = vlaneseq
        %v547 = vshrl.u32 %v546, 7
        %v548 = vsub.s32 2, %v547
        %v549 = vrot.slane %v537, %v548
        %v550 = vlaneseq
        %v551 = vshrl.u32 %v550, 7
        %v552 = vsub.s32 3, %v551
        %v553 = vrot.slane %v537, %v552
        %vm554 = vcmp.eq.s32.totalorder %v541, 1
        %vm555 = vcmp.eq.s32.totalorder %v545, 1
        %vm556 = vcmp.eq.s32.totalorder %v549, 1
        %vm557 = vcmp.eq.s32.totalorder %v553, 1
        %v558 = vsel %vm554, %v536, 0.0
        %v559 = vsel %vm555, %v535, 0.0
        %v560 = vsel %vm556, %v534, 0.0
        %v561 = vsel %vm557, %v533, 0.0
        %562 = vst [vmem:[#allocation2 + $0x80] sm:$0xff] %v558
        %563 = vst [vmem:[#allocation2 + $0x88] sm:$0xff] %v559
        %564 = vst [vmem:[#allocation2 + $0x90] sm:$0xff] %v560
        %565 = vst [vmem:[#allocation2 + $0x98] sm:$0xff] %v561
        %566 = vrot.lane.b32.xlu0 %v346, 63
        %v567 = vpop.permute.xlu0 %566
        %568 = vrot.lane.b32.xlu0 %v347, 63
        %v569 = vpop.permute.xlu0 %568
        %570 = vrot.lane.b32.xlu0 %v348, 63
        %v571 = vpop.permute.xlu0 %570
        %572 = vrot.lane.b32.xlu0 %v349, 63
        %v573 = vpop.permute.xlu0 %572
        %vm574 = vcmp.lt.s32.totalorder %v359, 63
        %v575 = vsel %vm574, %v571, %v573
        %v576 = vsel %vm574, %v569, %v571
        %v577 = vsel %vm574, %v567, %v569
        %v578 = vsel %vm574, %v573, %v567
        %vm579 = vmand %vm340, %vm345
        %v580 = vsel %vm579, 1, 0
        %v581 = vlaneseq
        %v582 = vshrl.u32 %v581, 7
        %v583 = vsub.s32 0, %v582
        %v584 = vrot.slane %v580, %v583
        %v585 = vlaneseq
        %v586 = vshrl.u32 %v585, 7
        %v587 = vsub.s32 1, %v586
        %v588 = vrot.slane %v580, %v587
        %v589 = vlaneseq
        %v590 = vshrl.u32 %v589, 7
        %v591 = vsub.s32 2, %v590
        %v592 = vrot.slane %v580, %v591
        %v593 = vlaneseq
        %v594 = vshrl.u32 %v593, 7
        %v595 = vsub.s32 3, %v594
        %v596 = vrot.slane %v580, %v595
        %vm597 = vcmp.eq.s32.totalorder %v584, 1
        %vm598 = vcmp.eq.s32.totalorder %v588, 1
        %vm599 = vcmp.eq.s32.totalorder %v592, 1
        %vm600 = vcmp.eq.s32.totalorder %v596, 1
        %v601 = vsel %vm597, %v578, 0.0
        %v602 = vsel %vm598, %v577, 0.0
        %v603 = vsel %vm599, %v576, 0.0
        %v604 = vsel %vm600, %v575, 0.0
        %605 = vst [vmem:[#allocation2 + $0xa0] sm:$0xff] %v601
        %606 = vst [vmem:[#allocation2 + $0xa8] sm:$0xff] %v602
        %607 = vst [vmem:[#allocation2 + $0xb0] sm:$0xff] %v603
        %608 = vst [vmem:[#allocation2 + $0xb8] sm:$0xff] %v604
        %609 = vrot.lane.b32.xlu0 %v346, 57
        %v610 = vpop.permute.xlu0 %609
        %611 = vrot.lane.b32.xlu0 %v347, 57
        %v612 = vpop.permute.xlu0 %611
        %613 = vrot.lane.b32.xlu0 %v348, 57
        %v614 = vpop.permute.xlu0 %613
        %615 = vrot.lane.b32.xlu0 %v349, 57
        %v616 = vpop.permute.xlu0 %615
        %vm617 = vcmp.lt.s32.totalorder %v359, 57
        %v618 = vsel %vm617, %v614, %v616
        %v619 = vsel %vm617, %v612, %v614
        %v620 = vsel %vm617, %v610, %v612
        %v621 = vsel %vm617, %v616, %v610
        %vm622 = vmand %vm340, %vm343
        %vm623 = vmand %vm622, %vm344
        %v624 = vsel %vm623, 1, 0
        %v625 = vlaneseq
        %v626 = vshrl.u32 %v625, 7
        %v627 = vsub.s32 0, %v626
        %v628 = vrot.slane %v624, %v627
        %v629 = vlaneseq
        %v630 = vshrl.u32 %v629, 7
        %v631 = vsub.s32 1, %v630
        %v632 = vrot.slane %v624, %v631
        %v633 = vlaneseq
        %v634 = vshrl.u32 %v633, 7
        %v635 = vsub.s32 2, %v634
        %v636 = vrot.slane %v624, %v635
        %v637 = vlaneseq
        %v638 = vshrl.u32 %v637, 7
        %v639 = vsub.s32 3, %v638
        %v640 = vrot.slane %v624, %v639
        %vm641 = vcmp.eq.s32.totalorder %v628, 1
        %vm642 = vcmp.eq.s32.totalorder %v632, 1
        %vm643 = vcmp.eq.s32.totalorder %v636, 1
        %vm644 = vcmp.eq.s32.totalorder %v640, 1
        %v645 = vsel %vm641, %v621, 0.0
        %v646 = vsel %vm642, %v620, 0.0
        %v647 = vsel %vm643, %v619, 0.0
        %v648 = vsel %vm644, %v618, 0.0
        %649 = vst [vmem:[#allocation2 + $0xc0] sm:$0xff] %v645
        %650 = vst [vmem:[#allocation2 + $0xc8] sm:$0xff] %v646
        %651 = vst [vmem:[#allocation2 + $0xd0] sm:$0xff] %v647
        %652 = vst [vmem:[#allocation2 + $0xd8] sm:$0xff] %v648
        %653 = vrot.lane.b32.xlu0 %v346, 56
        %v654 = vpop.permute.xlu0 %653
        %655 = vrot.lane.b32.xlu0 %v347, 56
        %v656 = vpop.permute.xlu0 %655
        %657 = vrot.lane.b32.xlu0 %v348, 56
        %v658 = vpop.permute.xlu0 %657
        %659 = vrot.lane.b32.xlu0 %v349, 56
        %v660 = vpop.permute.xlu0 %659
        %vm661 = vcmp.lt.s32.totalorder %v359, 56
        %v662 = vsel %vm661, %v658, %v660
        %v663 = vsel %vm661, %v656, %v658
        %v664 = vsel %vm661, %v654, %v656
        %v665 = vsel %vm661, %v660, %v654
        %v666 = vsel %vm622, 1, 0
        %v667 = vlaneseq
        %v668 = vshrl.u32 %v667, 7
        %v669 = vsub.s32 0, %v668
        %v670 = vrot.slane %v666, %v669
        %v671 = vlaneseq
        %v672 = vshrl.u32 %v671, 7
        %v673 = vsub.s32 1, %v672
        %v674 = vrot.slane %v666, %v673
        %v675 = vlaneseq
        %v676 = vshrl.u32 %v675, 7
        %v677 = vsub.s32 2, %v676
        %v678 = vrot.slane %v666, %v677
        %v679 = vlaneseq
        %v680 = vshrl.u32 %v679, 7
        %v681 = vsub.s32 3, %v680
        %v682 = vrot.slane %v666, %v681
        %vm683 = vcmp.eq.s32.totalorder %v670, 1
        %vm684 = vcmp.eq.s32.totalorder %v674, 1
        %vm685 = vcmp.eq.s32.totalorder %v678, 1
        %vm686 = vcmp.eq.s32.totalorder %v682, 1
        %v687 = vsel %vm683, %v665, 0.0
        %v688 = vsel %vm684, %v664, 0.0
        %v689 = vsel %vm685, %v663, 0.0
        %v690 = vsel %vm686, %v662, 0.0
        %691 = vst [vmem:[#allocation2 + $0xe0] sm:$0xff] %v687
        %692 = vst [vmem:[#allocation2 + $0xe8] sm:$0xff] %v688
        %693 = vst [vmem:[#allocation2 + $0xf0] sm:$0xff] %v689
        %694 = vst [vmem:[#allocation2 + $0xf8] sm:$0xff] %v690
        %695 = vrot.lane.b32.xlu0 %v346, 55
        %v696 = vpop.permute.xlu0 %695
        %697 = vrot.lane.b32.xlu0 %v347, 55
        %v698 = vpop.permute.xlu0 %697
        %699 = vrot.lane.b32.xlu0 %v348, 55
        %v700 = vpop.permute.xlu0 %699
        %701 = vrot.lane.b32.xlu0 %v349, 55
        %v702 = vpop.permute.xlu0 %701
        %vm703 = vcmp.lt.s32.totalorder %v359, 55
        %v704 = vsel %vm703, %v700, %v702
        %v705 = vsel %vm703, %v698, %v700
        %v706 = vsel %vm703, %v696, %v698
        %v707 = vsel %vm703, %v702, %v696
        %vm708 = vmand %vm622, %vm345
        %v709 = vsel %vm708, 1, 0
        %v710 = vlaneseq
        %v711 = vshrl.u32 %v710, 7
        %v712 = vsub.s32 0, %v711
        %v713 = vrot.slane %v709, %v712
        %v714 = vlaneseq
        %v715 = vshrl.u32 %v714, 7
        %v716 = vsub.s32 1, %v715
        %v717 = vrot.slane %v709, %v716
        %v718 = vlaneseq
        %v719 = vshrl.u32 %v718, 7
        %v720 = vsub.s32 2, %v719
        %v721 = vrot.slane %v709, %v720
        %v722 = vlaneseq
        %v723 = vshrl.u32 %v722, 7
        %v724 = vsub.s32 3, %v723
        %v725 = vrot.slane %v709, %v724
        %vm726 = vcmp.eq.s32.totalorder %v713, 1
        %vm727 = vcmp.eq.s32.totalorder %v717, 1
        %vm728 = vcmp.eq.s32.totalorder %v721, 1
        %vm729 = vcmp.eq.s32.totalorder %v725, 1
        %v730 = vsel %vm726, %v707, 0.0
        %v731 = vsel %vm727, %v706, 0.0
        %v732 = vsel %vm728, %v705, 0.0
        %v733 = vsel %vm729, %v704, 0.0
        %734 = vst [vmem:[#allocation2 + $0x100] sm:$0xff] %v730
        %735 = vst [vmem:[#allocation2 + $0x108] sm:$0xff] %v731
        %736 = vst [vmem:[#allocation2 + $0x110] sm:$0xff] %v732
        %737 = vst [vmem:[#allocation2 + $0x118] sm:$0xff] %v733
        %738 = vrot.lane.b32.xlu0 %v346, 9
        %v739 = vpop.permute.xlu0 %738
        %740 = vrot.lane.b32.xlu0 %v347, 9
        %v741 = vpop.permute.xlu0 %740
        %742 = vrot.lane.b32.xlu0 %v348, 9
        %v743 = vpop.permute.xlu0 %742
        %744 = vrot.lane.b32.xlu0 %v349, 9
        %v745 = vpop.permute.xlu0 %744
        %vm746 = vcmp.lt.s32.totalorder %v359, 9
        %v747 = vsel %vm746, %v743, %v745
        %v748 = vsel %vm746, %v741, %v743
        %v749 = vsel %vm746, %v739, %v741
        %v750 = vsel %vm746, %v745, %v739
        %vm751 = vmand %vm342, %vm344
        %v752 = vsel %vm751, 1, 0
        %v753 = vlaneseq
        %v754 = vshrl.u32 %v753, 7
        %v755 = vsub.s32 0, %v754
        %v756 = vrot.slane %v752, %v755
        %v757 = vlaneseq
        %v758 = vshrl.u32 %v757, 7
        %v759 = vsub.s32 1, %v758
        %v760 = vrot.slane %v752, %v759
        %v761 = vlaneseq
        %v762 = vshrl.u32 %v761, 7
        %v763 = vsub.s32 2, %v762
        %v764 = vrot.slane %v752, %v763
        %v765 = vlaneseq
        %v766 = vshrl.u32 %v765, 7
        %v767 = vsub.s32 3, %v766
        %v768 = vrot.slane %v752, %v767
        %vm769 = vcmp.eq.s32.totalorder %v756, 1
        %vm770 = vcmp.eq.s32.totalorder %v760, 1
        %vm771 = vcmp.eq.s32.totalorder %v764, 1
        %vm772 = vcmp.eq.s32.totalorder %v768, 1
        %v773 = vsel %vm769, %v750, 0.0
        %v774 = vsel %vm770, %v749, 0.0
        %v775 = vsel %vm771, %v748, 0.0
        %v776 = vsel %vm772, %v747, 0.0
        %777 = vst [vmem:[#allocation2 + $0x120] sm:$0xff] %v773
        %778 = vst [vmem:[#allocation2 + $0x128] sm:$0xff] %v774
        %779 = vst [vmem:[#allocation2 + $0x130] sm:$0xff] %v775
        %780 = vst [vmem:[#allocation2 + $0x138] sm:$0xff] %v776
        %781 = vrot.lane.b32.xlu0 %v346, 8
        %v782 = vpop.permute.xlu0 %781
        %783 = vrot.lane.b32.xlu0 %v347, 8
        %v784 = vpop.permute.xlu0 %783
        %785 = vrot.lane.b32.xlu0 %v348, 8
        %v786 = vpop.permute.xlu0 %785
        %787 = vrot.lane.b32.xlu0 %v349, 8
        %v788 = vpop.permute.xlu0 %787
        %vm789 = vcmp.lt.s32.totalorder %v359, 8
        %v790 = vsel %vm789, %v786, %v788
        %v791 = vsel %vm789, %v784, %v786
        %v792 = vsel %vm789, %v782, %v784
        %v793 = vsel %vm789, %v788, %v782
        %v794 = vsel %vm342, 1, 0
        %v795 = vlaneseq
        %v796 = vshrl.u32 %v795, 7
        %v797 = vsub.s32 0, %v796
        %v798 = vrot.slane %v794, %v797
        %v799 = vlaneseq
        %v800 = vshrl.u32 %v799, 7
        %v801 = vsub.s32 1, %v800
        %v802 = vrot.slane %v794, %v801
        %v803 = vlaneseq
        %v804 = vshrl.u32 %v803, 7
        %v805 = vsub.s32 2, %v804
        %v806 = vrot.slane %v794, %v805
        %v807 = vlaneseq
        %v808 = vshrl.u32 %v807, 7
        %v809 = vsub.s32 3, %v808
        %v810 = vrot.slane %v794, %v809
        %vm811 = vcmp.eq.s32.totalorder %v798, 1
        %vm812 = vcmp.eq.s32.totalorder %v802, 1
        %vm813 = vcmp.eq.s32.totalorder %v806, 1
        %vm814 = vcmp.eq.s32.totalorder %v810, 1
        %v815 = vsel %vm811, %v793, 0.0
        %v816 = vsel %vm812, %v792, 0.0
        %v817 = vsel %vm813, %v791, 0.0
        %v818 = vsel %vm814, %v790, 0.0
        %819 = vst [vmem:[#allocation2 + $0x140] sm:$0xff] %v815
        %820 = vst [vmem:[#allocation2 + $0x148] sm:$0xff] %v816
        %821 = vst [vmem:[#allocation2 + $0x150] sm:$0xff] %v817
        %822 = vst [vmem:[#allocation2 + $0x158] sm:$0xff] %v818
        %823 = vrot.lane.b32.xlu0 %v346, 7
        %v824 = vpop.permute.xlu0 %823
        %825 = vrot.lane.b32.xlu0 %v347, 7
        %v826 = vpop.permute.xlu0 %825
        %827 = vrot.lane.b32.xlu0 %v348, 7
        %v828 = vpop.permute.xlu0 %827
        %829 = vrot.lane.b32.xlu0 %v349, 7
        %v830 = vpop.permute.xlu0 %829
        %vm831 = vcmp.lt.s32.totalorder %v359, 7
        %v832 = vsel %vm831, %v828, %v830
        %v833 = vsel %vm831, %v826, %v828
        %v834 = vsel %vm831, %v824, %v826
        %v835 = vsel %vm831, %v830, %v824
        %vm836 = vmand %vm342, %vm345
        %v837 = vsel %vm836, 1, 0
        %v838 = vlaneseq
        %v839 = vshrl.u32 %v838, 7
        %v840 = vsub.s32 0, %v839
        %v841 = vrot.slane %v837, %v840
        %v842 = vlaneseq
        %v843 = vshrl.u32 %v842, 7
        %v844 = vsub.s32 1, %v843
        %v845 = vrot.slane %v837, %v844
        %v846 = vlaneseq
        %v847 = vshrl.u32 %v846, 7
        %v848 = vsub.s32 2, %v847
        %v849 = vrot.slane %v837, %v848
        %v850 = vlaneseq
        %v851 = vshrl.u32 %v850, 7
        %v852 = vsub.s32 3, %v851
        %v853 = vrot.slane %v837, %v852
        %vm854 = vcmp.eq.s32.totalorder %v841, 1
        %vm855 = vcmp.eq.s32.totalorder %v845, 1
        %vm856 = vcmp.eq.s32.totalorder %v849, 1
        %vm857 = vcmp.eq.s32.totalorder %v853, 1
        %v858 = vsel %vm854, %v835, 0.0
        %v859 = vsel %vm855, %v834, 0.0
        %v860 = vsel %vm856, %v833, 0.0
        %v861 = vsel %vm857, %v832, 0.0
        %862 = vst [vmem:[#allocation2 + $0x160] sm:$0xff] %v858
        %863 = vst [vmem:[#allocation2 + $0x168] sm:$0xff] %v859
        %864 = vst [vmem:[#allocation2 + $0x170] sm:$0xff] %v860
        %865 = vst [vmem:[#allocation2 + $0x178] sm:$0xff] %v861
        %866 = vrot.lane.b32.xlu0 %v346, 1
        %v867 = vpop.permute.xlu0 %866
        %868 = vrot.lane.b32.xlu0 %v347, 1
        %v869 = vpop.permute.xlu0 %868
        %870 = vrot.lane.b32.xlu0 %v348, 1
        %v871 = vpop.permute.xlu0 %870
        %872 = vrot.lane.b32.xlu0 %v349, 1
        %v873 = vpop.permute.xlu0 %872
        %vm874 = vcmp.lt.s32.totalorder %v359, 1
        %v875 = vsel %vm874, %v871, %v873
        %v876 = vsel %vm874, %v869, %v871
        %v877 = vsel %vm874, %v867, %v869
        %v878 = vsel %vm874, %v873, %v867
        %v879 = vsel %vm344, 1, 0
        %v880 = vlaneseq
        %v881 = vshrl.u32 %v880, 7
        %v882 = vsub.s32 0, %v881
        %v883 = vrot.slane %v879, %v882
        %v884 = vlaneseq
        %v885 = vshrl.u32 %v884, 7
        %v886 = vsub.s32 1, %v885
        %v887 = vrot.slane %v879, %v886
        %v888 = vlaneseq
        %v889 = vshrl.u32 %v888, 7
        %v890 = vsub.s32 2, %v889
        %v891 = vrot.slane %v879, %v890
        %v892 = vlaneseq
        %v893 = vshrl.u32 %v892, 7
        %v894 = vsub.s32 3, %v893
        %v895 = vrot.slane %v879, %v894
        %vm896 = vcmp.eq.s32.totalorder %v883, 1
        %vm897 = vcmp.eq.s32.totalorder %v887, 1
        %vm898 = vcmp.eq.s32.totalorder %v891, 1
        %vm899 = vcmp.eq.s32.totalorder %v895, 1
        %v900 = vsel %vm896, %v878, 0.0
        %v901 = vsel %vm897, %v877, 0.0
        %v902 = vsel %vm898, %v876, 0.0
        %v903 = vsel %vm899, %v875, 0.0
        %904 = vst [vmem:[#allocation2 + $0x180] sm:$0xff] %v900
        %905 = vst [vmem:[#allocation2 + $0x188] sm:$0xff] %v901
        %906 = vst [vmem:[#allocation2 + $0x190] sm:$0xff] %v902
        %907 = vst [vmem:[#allocation2 + $0x198] sm:$0xff] %v903
        %908 = vst [vmem:[#allocation2 + $0x1a0] sm:$0xff] %v346
        %909 = vst [vmem:[#allocation2 + $0x1a8] sm:$0xff] %v347
        %910 = vst [vmem:[#allocation2 + $0x1b0] sm:$0xff] %v348
        %911 = vst [vmem:[#allocation2 + $0x1b8] sm:$0xff] %v349
        %912 = vrot.lane.b32.xlu0 %v346, 127
        %v913 = vpop.permute.xlu0 %912
        %914 = vrot.lane.b32.xlu0 %v347, 127
        %v915 = vpop.permute.xlu0 %914
        %916 = vrot.lane.b32.xlu0 %v348, 127
        %v917 = vpop.permute.xlu0 %916
        %918 = vrot.lane.b32.xlu0 %v349, 127
        %v919 = vpop.permute.xlu0 %918
        %vm920 = vcmp.lt.s32.totalorder %v359, 127
        %v921 = vsel %vm920, %v917, %v919
        %v922 = vsel %vm920, %v915, %v917
        %v923 = vsel %vm920, %v913, %v915
        %v924 = vsel %vm920, %v919, %v913
        %v925 = vsel %vm345, 1, 0
        %v926 = vlaneseq
        %v927 = vshrl.u32 %v926, 7
        %v928 = vsub.s32 0, %v927
        %v929 = vrot.slane %v925, %v928
        %v930 = vlaneseq
        %v931 = vshrl.u32 %v930, 7
        %v932 = vsub.s32 1, %v931
        %v933 = vrot.slane %v925, %v932
        %v934 = vlaneseq
        %v935 = vshrl.u32 %v934, 7
        %v936 = vsub.s32 2, %v935
        %v937 = vrot.slane %v925, %v936
        %v938 = vlaneseq
        %v939 = vshrl.u32 %v938, 7
        %v940 = vsub.s32 3, %v939
        %v941 = vrot.slane %v925, %v940
        %vm942 = vcmp.eq.s32.totalorder %v929, 1
        %vm943 = vcmp.eq.s32.totalorder %v933, 1
        %vm944 = vcmp.eq.s32.totalorder %v937, 1
        %vm945 = vcmp.eq.s32.totalorder %v941, 1
        %v946 = vsel %vm942, %v923, 0.0
        %v947 = vsel %vm943, %v922, 0.0
        %v948 = vsel %vm944, %v921, 0.0
        %v949 = vsel %vm945, %v924, 0.0
        %950 = vst [vmem:[#allocation2 + $0x1c0] sm:$0xff] %v946
        %951 = vst [vmem:[#allocation2 + $0x1c8] sm:$0xff] %v947
        %952 = vst [vmem:[#allocation2 + $0x1d0] sm:$0xff] %v948
        %953 = vst [vmem:[#allocation2 + $0x1d8] sm:$0xff] %v949
        %954 = vrot.lane.b32.xlu0 %v346, 121
        %v955 = vpop.permute.xlu0 %954
        %956 = vrot.lane.b32.xlu0 %v347, 121
        %v957 = vpop.permute.xlu0 %956
        %958 = vrot.lane.b32.xlu0 %v348, 121
        %v959 = vpop.permute.xlu0 %958
        %960 = vrot.lane.b32.xlu0 %v349, 121
        %v961 = vpop.permute.xlu0 %960
        %vm962 = vcmp.lt.s32.totalorder %v359, 121
        %v963 = vsel %vm962, %v959, %v961
        %v964 = vsel %vm962, %v957, %v959
        %v965 = vsel %vm962, %v955, %v957
        %v966 = vsel %vm962, %v961, %v955
        %vm967 = vmand %vm343, %vm344
        %v968 = vsel %vm967, 1, 0
        %v969 = vlaneseq
        %v970 = vshrl.u32 %v969, 7
        %v971 = vsub.s32 0, %v970
        %v972 = vrot.slane %v968, %v971
        %v973 = vlaneseq
        %v974 = vshrl.u32 %v973, 7
        %v975 = vsub.s32 1, %v974
        %v976 = vrot.slane %v968, %v975
        %v977 = vlaneseq
        %v978 = vshrl.u32 %v977, 7
        %v979 = vsub.s32 2, %v978
        %v980 = vrot.slane %v968, %v979
        %v981 = vlaneseq
        %v982 = vshrl.u32 %v981, 7
        %v983 = vsub.s32 3, %v982
        %v984 = vrot.slane %v968, %v983
        %vm985 = vcmp.eq.s32.totalorder %v972, 1
        %vm986 = vcmp.eq.s32.totalorder %v976, 1
        %vm987 = vcmp.eq.s32.totalorder %v980, 1
        %vm988 = vcmp.eq.s32.totalorder %v984, 1
        %v989 = vsel %vm985, %v965, 0.0
        %v990 = vsel %vm986, %v964, 0.0
        %v991 = vsel %vm987, %v963, 0.0
        %v992 = vsel %vm988, %v966, 0.0
        %993 = vst [vmem:[#allocation2 + $0x1e0] sm:$0xff] %v989
        %994 = vst [vmem:[#allocation2 + $0x1e8] sm:$0xff] %v990
        %995 = vst [vmem:[#allocation2 + $0x1f0] sm:$0xff] %v991
        %996 = vst [vmem:[#allocation2 + $0x1f8] sm:$0xff] %v992
        %997 = vrot.lane.b32.xlu0 %v346, 120
        %v998 = vpop.permute.xlu0 %997
        %999 = vrot.lane.b32.xlu0 %v347, 120
        %v1000 = vpop.permute.xlu0 %999
        %1001 = vrot.lane.b32.xlu0 %v348, 120
        %v1002 = vpop.permute.xlu0 %1001
        %1003 = vrot.lane.b32.xlu0 %v349, 120
        %v1004 = vpop.permute.xlu0 %1003
        %vm1005 = vcmp.lt.s32.totalorder %v359, 120
        %v1006 = vsel %vm1005, %v1002, %v1004
        %v1007 = vsel %vm1005, %v1000, %v1002
        %v1008 = vsel %vm1005, %v998, %v1000
        %v1009 = vsel %vm1005, %v1004, %v998
        %v1010 = vsel %vm343, 1, 0
        %v1011 = vlaneseq
        %v1012 = vshrl.u32 %v1011, 7
        %v1013 = vsub.s32 0, %v1012
        %v1014 = vrot.slane %v1010, %v1013
        %v1015 = vlaneseq
        %v1016 = vshrl.u32 %v1015, 7
        %v1017 = vsub.s32 1, %v1016
        %v1018 = vrot.slane %v1010, %v1017
        %v1019 = vlaneseq
        %v1020 = vshrl.u32 %v1019, 7
        %v1021 = vsub.s32 2, %v1020
        %v1022 = vrot.slane %v1010, %v1021
        %v1023 = vlaneseq
        %v1024 = vshrl.u32 %v1023, 7
        %v1025 = vsub.s32 3, %v1024
        %v1026 = vrot.slane %v1010, %v1025
        %vm1027 = vcmp.eq.s32.totalorder %v1014, 1
        %vm1028 = vcmp.eq.s32.totalorder %v1018, 1
        %vm1029 = vcmp.eq.s32.totalorder %v1022, 1
        %vm1030 = vcmp.eq.s32.totalorder %v1026, 1
        %v1031 = vsel %vm1027, %v1008, 0.0
        %v1032 = vsel %vm1028, %v1007, 0.0
        %v1033 = vsel %vm1029, %v1006, 0.0
        %v1034 = vsel %vm1030, %v1009, 0.0
        %1035 = vst [vmem:[#allocation2 + $0x200] sm:$0xff] %v1031
        %1036 = vst [vmem:[#allocation2 + $0x208] sm:$0xff] %v1032
        %1037 = vst [vmem:[#allocation2 + $0x210] sm:$0xff] %v1033
        %1038 = vst [vmem:[#allocation2 + $0x218] sm:$0xff] %v1034
        %1039 = vrot.lane.b32.xlu0 %v346, 119
        %v1040 = vpop.permute.xlu0 %1039
        %1041 = vrot.lane.b32.xlu0 %v347, 119
        %v1042 = vpop.permute.xlu0 %1041
        %1043 = vrot.lane.b32.xlu0 %v348, 119
        %v1044 = vpop.permute.xlu0 %1043
        %1045 = vrot.lane.b32.xlu0 %v349, 119
        %v1046 = vpop.permute.xlu0 %1045
        %vm1047 = vcmp.lt.s32.totalorder %v359, 119
        %v1048 = vsel %vm1047, %v1044, %v1046
        %v1049 = vsel %vm1047, %v1042, %v1044
        %v1050 = vsel %vm1047, %v1040, %v1042
        %v1051 = vsel %vm1047, %v1046, %v1040
        %vm1052 = vmand %vm343, %vm345
        %v1053 = vsel %vm1052, 1, 0
        %v1054 = vlaneseq
        %v1055 = vshrl.u32 %v1054, 7
        %v1056 = vsub.s32 0, %v1055
        %v1057 = vrot.slane %v1053, %v1056
        %v1058 = vlaneseq
        %v1059 = vshrl.u32 %v1058, 7
        %v1060 = vsub.s32 1, %v1059
        %v1061 = vrot.slane %v1053, %v1060
        %v1062 = vlaneseq
        %v1063 = vshrl.u32 %v1062, 7
        %v1064 = vsub.s32 2, %v1063
        %v1065 = vrot.slane %v1053, %v1064
        %v1066 = vlaneseq
        %v1067 = vshrl.u32 %v1066, 7
        %v1068 = vsub.s32 3, %v1067
        %v1069 = vrot.slane %v1053, %v1068
        %vm1070 = vcmp.eq.s32.totalorder %v1057, 1
        %vm1071 = vcmp.eq.s32.totalorder %v1061, 1
        %vm1072 = vcmp.eq.s32.totalorder %v1065, 1
        %vm1073 = vcmp.eq.s32.totalorder %v1069, 1
        %v1074 = vsel %vm1070, %v1050, 0.0
        %v1075 = vsel %vm1071, %v1049, 0.0
        %v1076 = vsel %vm1072, %v1048, 0.0
        %v1077 = vsel %vm1073, %v1051, 0.0
        %1078 = vst [vmem:[#allocation2 + $0x220] sm:$0xff] %v1074
        %1079 = vst [vmem:[#allocation2 + $0x228] sm:$0xff] %v1075
        %1080 = vst [vmem:[#allocation2 + $0x230] sm:$0xff] %v1076
        %1081 = vst [vmem:[#allocation2 + $0x238] sm:$0xff] %v1077
        %vm1082 = vmand %vm341, %vm342
        %vm1083 = vmand %vm1082, %vm344
        %v1084 = vsel %vm1083, 1, 0
        %v1085 = vlaneseq
        %v1086 = vshrl.u32 %v1085, 7
        %v1087 = vsub.s32 0, %v1086
        %v1088 = vrot.slane %v1084, %v1087
        %v1089 = vlaneseq
        %v1090 = vshrl.u32 %v1089, 7
        %v1091 = vsub.s32 1, %v1090
        %v1092 = vrot.slane %v1084, %v1091
        %v1093 = vlaneseq
        %v1094 = vshrl.u32 %v1093, 7
        %v1095 = vsub.s32 2, %v1094
        %v1096 = vrot.slane %v1084, %v1095
        %v1097 = vlaneseq
        %v1098 = vshrl.u32 %v1097, 7
        %v1099 = vsub.s32 3, %v1098
        %v1100 = vrot.slane %v1084, %v1099
        %vm1101 = vcmp.eq.s32.totalorder %v1088, 1
        %vm1102 = vcmp.eq.s32.totalorder %v1092, 1
        %vm1103 = vcmp.eq.s32.totalorder %v1096, 1
        %vm1104 = vcmp.eq.s32.totalorder %v1100, 1
        %v1105 = vsel %vm1101, %v363, 0.0
        %v1106 = vsel %vm1102, %v362, 0.0
        %v1107 = vsel %vm1103, %v361, 0.0
        %v1108 = vsel %vm1104, %v364, 0.0
        %1109 = vst [vmem:[#allocation2 + $0x240] sm:$0xff] %v1105
        %1110 = vst [vmem:[#allocation2 + $0x248] sm:$0xff] %v1106
        %1111 = vst [vmem:[#allocation2 + $0x250] sm:$0xff] %v1107
        %1112 = vst [vmem:[#allocation2 + $0x258] sm:$0xff] %v1108
        %v1113 = vsel %vm1082, 1, 0
        %v1114 = vlaneseq
        %v1115 = vshrl.u32 %v1114, 7
        %v1116 = vsub.s32 0, %v1115
        %v1117 = vrot.slane %v1113, %v1116
        %v1118 = vlaneseq
        %v1119 = vshrl.u32 %v1118, 7
        %v1120 = vsub.s32 1, %v1119
        %v1121 = vrot.slane %v1113, %v1120
        %v1122 = vlaneseq
        %v1123 = vshrl.u32 %v1122, 7
        %v1124 = vsub.s32 2, %v1123
        %v1125 = vrot.slane %v1113, %v1124
        %v1126 = vlaneseq
        %v1127 = vshrl.u32 %v1126, 7
        %v1128 = vsub.s32 3, %v1127
        %v1129 = vrot.slane %v1113, %v1128
        %vm1130 = vcmp.eq.s32.totalorder %v1117, 1
        %vm1131 = vcmp.eq.s32.totalorder %v1121, 1
        %vm1132 = vcmp.eq.s32.totalorder %v1125, 1
        %vm1133 = vcmp.eq.s32.totalorder %v1129, 1
        %v1134 = vsel %vm1130, %v407, 0.0
        %v1135 = vsel %vm1131, %v406, 0.0
        %v1136 = vsel %vm1132, %v405, 0.0
        %v1137 = vsel %vm1133, %v408, 0.0
        %1138 = vst [vmem:[#allocation2 + $0x260] sm:$0xff] %v1134
        %1139 = vst [vmem:[#allocation2 + $0x268] sm:$0xff] %v1135
        %1140 = vst [vmem:[#allocation2 + $0x270] sm:$0xff] %v1136
        %1141 = vst [vmem:[#allocation2 + $0x278] sm:$0xff] %v1137
        %vm1142 = vmand %vm1082, %vm345
        %v1143 = vsel %vm1142, 1, 0
        %v1144 = vlaneseq
        %v1145 = vshrl.u32 %v1144, 7
        %v1146 = vsub.s32 0, %v1145
        %v1147 = vrot.slane %v1143, %v1146
        %v1148 = vlaneseq
        %v1149 = vshrl.u32 %v1148, 7
        %v1150 = vsub.s32 1, %v1149
        %v1151 = vrot.slane %v1143, %v1150
        %v1152 = vlaneseq
        %v1153 = vshrl.u32 %v1152, 7
        %v1154 = vsub.s32 2, %v1153
        %v1155 = vrot.slane %v1143, %v1154
        %v1156 = vlaneseq
        %v1157 = vshrl.u32 %v1156, 7
        %v1158 = vsub.s32 3, %v1157
        %v1159 = vrot.slane %v1143, %v1158
        %vm1160 = vcmp.eq.s32.totalorder %v1147, 1
        %vm1161 = vcmp.eq.s32.totalorder %v1151, 1
        %vm1162 = vcmp.eq.s32.totalorder %v1155, 1
        %vm1163 = vcmp.eq.s32.totalorder %v1159, 1
        %v1164 = vsel %vm1160, %v449, 0.0
        %v1165 = vsel %vm1161, %v448, 0.0
        %v1166 = vsel %vm1162, %v447, 0.0
        %v1167 = vsel %vm1163, %v450, 0.0
        %1168 = vst [vmem:[#allocation2 + $0x280] sm:$0xff] %v1164
        %1169 = vst [vmem:[#allocation2 + $0x288] sm:$0xff] %v1165
        %1170 = vst [vmem:[#allocation2 + $0x290] sm:$0xff] %v1166
        %1171 = vst [vmem:[#allocation2 + $0x298] sm:$0xff] %v1167
        %vm1172 = vmand %vm341, %vm344
        %v1173 = vsel %vm1172, 1, 0
        %v1174 = vlaneseq
        %v1175 = vshrl.u32 %v1174, 7
        %v1176 = vsub.s32 0, %v1175
        %v1177 = vrot.slane %v1173, %v1176
        %v1178 = vlaneseq
        %v1179 = vshrl.u32 %v1178, 7
        %v1180 = vsub.s32 1, %v1179
        %v1181 = vrot.slane %v1173, %v1180
        %v1182 = vlaneseq
        %v1183 = vshrl.u32 %v1182, 7
        %v1184 = vsub.s32 2, %v1183
        %v1185 = vrot.slane %v1173, %v1184
        %v1186 = vlaneseq
        %v1187 = vshrl.u32 %v1186, 7
        %v1188 = vsub.s32 3, %v1187
        %v1189 = vrot.slane %v1173, %v1188
        %vm1190 = vcmp.eq.s32.totalorder %v1177, 1
        %vm1191 = vcmp.eq.s32.totalorder %v1181, 1
        %vm1192 = vcmp.eq.s32.totalorder %v1185, 1
        %vm1193 = vcmp.eq.s32.totalorder %v1189, 1
        %v1194 = vsel %vm1190, %v492, 0.0
        %v1195 = vsel %vm1191, %v491, 0.0
        %v1196 = vsel %vm1192, %v490, 0.0
        %v1197 = vsel %vm1193, %v493, 0.0
        %1198 = vst [vmem:[#allocation2 + $0x2a0] sm:$0xff] %v1194
        %1199 = vst [vmem:[#allocation2 + $0x2a8] sm:$0xff] %v1195
        %1200 = vst [vmem:[#allocation2 + $0x2b0] sm:$0xff] %v1196
        %1201 = vst [vmem:[#allocation2 + $0x2b8] sm:$0xff] %v1197
        %v1202 = vsel %vm341, 1, 0
        %v1203 = vlaneseq
        %v1204 = vshrl.u32 %v1203, 7
        %v1205 = vsub.s32 0, %v1204
        %v1206 = vrot.slane %v1202, %v1205
        %v1207 = vlaneseq
        %v1208 = vshrl.u32 %v1207, 7
        %v1209 = vsub.s32 1, %v1208
        %v1210 = vrot.slane %v1202, %v1209
        %v1211 = vlaneseq
        %v1212 = vshrl.u32 %v1211, 7
        %v1213 = vsub.s32 2, %v1212
        %v1214 = vrot.slane %v1202, %v1213
        %v1215 = vlaneseq
        %v1216 = vshrl.u32 %v1215, 7
        %v1217 = vsub.s32 3, %v1216
        %v1218 = vrot.slane %v1202, %v1217
        %vm1219 = vcmp.eq.s32.totalorder %v1206, 1
        %vm1220 = vcmp.eq.s32.totalorder %v1210, 1
        %vm1221 = vcmp.eq.s32.totalorder %v1214, 1
        %vm1222 = vcmp.eq.s32.totalorder %v1218, 1
        %v1223 = vsel %vm1219, %v535, 0.0
        %v1224 = vsel %vm1220, %v534, 0.0
        %v1225 = vsel %vm1221, %v533, 0.0
        %v1226 = vsel %vm1222, %v536, 0.0
        %1227 = vst [vmem:[#allocation2 + $0x2c0] sm:$0xff] %v1223
        %1228 = vst [vmem:[#allocation2 + $0x2c8] sm:$0xff] %v1224
        %1229 = vst [vmem:[#allocation2 + $0x2d0] sm:$0xff] %v1225
        %1230 = vst [vmem:[#allocation2 + $0x2d8] sm:$0xff] %v1226
        %vm1231 = vmand %vm341, %vm345
        %v1232 = vsel %vm1231, 1, 0
        %v1233 = vlaneseq
        %v1234 = vshrl.u32 %v1233, 7
        %v1235 = vsub.s32 0, %v1234
        %v1236 = vrot.slane %v1232, %v1235
        %v1237 = vlaneseq
        %v1238 = vshrl.u32 %v1237, 7
        %v1239 = vsub.s32 1, %v1238
        %v1240 = vrot.slane %v1232, %v1239
        %v1241 = vlaneseq
        %v1242 = vshrl.u32 %v1241, 7
        %v1243 = vsub.s32 2, %v1242
        %v1244 = vrot.slane %v1232, %v1243
        %v1245 = vlaneseq
        %v1246 = vshrl.u32 %v1245, 7
        %v1247 = vsub.s32 3, %v1246
        %v1248 = vrot.slane %v1232, %v1247
        %vm1249 = vcmp.eq.s32.totalorder %v1236, 1
        %vm1250 = vcmp.eq.s32.totalorder %v1240, 1
        %vm1251 = vcmp.eq.s32.totalorder %v1244, 1
        %vm1252 = vcmp.eq.s32.totalorder %v1248, 1
        %v1253 = vsel %vm1249, %v577, 0.0
        %v1254 = vsel %vm1250, %v576, 0.0
        %v1255 = vsel %vm1251, %v575, 0.0
        %v1256 = vsel %vm1252, %v578, 0.0
        %1257 = vst [vmem:[#allocation2 + $0x2e0] sm:$0xff] %v1253
        %1258 = vst [vmem:[#allocation2 + $0x2e8] sm:$0xff] %v1254
        %1259 = vst [vmem:[#allocation2 + $0x2f0] sm:$0xff] %v1255
        %1260 = vst [vmem:[#allocation2 + $0x2f8] sm:$0xff] %v1256
        %vm1261 = vmand %vm341, %vm343
        %vm1262 = vmand %vm1261, %vm344
        %v1263 = vsel %vm1262, 1, 0
        %v1264 = vlaneseq
        %v1265 = vshrl.u32 %v1264, 7
        %v1266 = vsub.s32 0, %v1265
        %v1267 = vrot.slane %v1263, %v1266
        %v1268 = vlaneseq
        %v1269 = vshrl.u32 %v1268, 7
        %v1270 = vsub.s32 1, %v1269
        %v1271 = vrot.slane %v1263, %v1270
        %v1272 = vlaneseq
        %v1273 = vshrl.u32 %v1272, 7
        %v1274 = vsub.s32 2, %v1273
        %v1275 = vrot.slane %v1263, %v1274
        %v1276 = vlaneseq
        %v1277 = vshrl.u32 %v1276, 7
        %v1278 = vsub.s32 3, %v1277
        %v1279 = vrot.slane %v1263, %v1278
        %vm1280 = vcmp.eq.s32.totalorder %v1267, 1
        %vm1281 = vcmp.eq.s32.totalorder %v1271, 1
        %vm1282 = vcmp.eq.s32.totalorder %v1275, 1
        %vm1283 = vcmp.eq.s32.totalorder %v1279, 1
        %v1284 = vsel %vm1280, %v620, 0.0
        %v1285 = vsel %vm1281, %v619, 0.0
        %v1286 = vsel %vm1282, %v618, 0.0
        %v1287 = vsel %vm1283, %v621, 0.0
        %1288 = vst [vmem:[#allocation2 + $0x300] sm:$0xff] %v1284
        %1289 = vst [vmem:[#allocation2 + $0x308] sm:$0xff] %v1285
        %1290 = vst [vmem:[#allocation2 + $0x310] sm:$0xff] %v1286
        %1291 = vst [vmem:[#allocation2 + $0x318] sm:$0xff] %v1287
        %v1292 = vsel %vm1261, 1, 0
        %v1293 = vlaneseq
        %v1294 = vshrl.u32 %v1293, 7
        %v1295 = vsub.s32 0, %v1294
        %v1296 = vrot.slane %v1292, %v1295
        %v1297 = vlaneseq
        %v1298 = vshrl.u32 %v1297, 7
        %v1299 = vsub.s32 1, %v1298
        %v1300 = vrot.slane %v1292, %v1299
        %v1301 = vlaneseq
        %v1302 = vshrl.u32 %v1301, 7
        %v1303 = vsub.s32 2, %v1302
        %v1304 = vrot.slane %v1292, %v1303
        %v1305 = vlaneseq
        %v1306 = vshrl.u32 %v1305, 7
        %v1307 = vsub.s32 3, %v1306
        %v1308 = vrot.slane %v1292, %v1307
        %vm1309 = vcmp.eq.s32.totalorder %v1296, 1
        %vm1310 = vcmp.eq.s32.totalorder %v1300, 1
        %vm1311 = vcmp.eq.s32.totalorder %v1304, 1
        %vm1312 = vcmp.eq.s32.totalorder %v1308, 1
        %v1313 = vsel %vm1309, %v664, 0.0
        %v1314 = vsel %vm1310, %v663, 0.0
        %v1315 = vsel %vm1311, %v662, 0.0
        %v1316 = vsel %vm1312, %v665, 0.0
        %1317 = vst [vmem:[#allocation2 + $0x320] sm:$0xff] %v1313
        %1318 = vst [vmem:[#allocation2 + $0x328] sm:$0xff] %v1314
        %1319 = vst [vmem:[#allocation2 + $0x330] sm:$0xff] %v1315
        %1320 = vst [vmem:[#allocation2 + $0x338] sm:$0xff] %v1316
        %vm1321 = vmand %vm1261, %vm345
        %v1322 = vsel %vm1321, 1, 0
        %v1323 = vlaneseq
        %v1324 = vshrl.u32 %v1323, 7
        %v1325 = vsub.s32 0, %v1324
        %v1326 = vrot.slane %v1322, %v1325
        %v1327 = vlaneseq
        %v1328 = vshrl.u32 %v1327, 7
        %v1329 = vsub.s32 1, %v1328
        %v1330 = vrot.slane %v1322, %v1329
        %v1331 = vlaneseq
        %v1332 = vshrl.u32 %v1331, 7
        %v1333 = vsub.s32 2, %v1332
        %v1334 = vrot.slane %v1322, %v1333
        %v1335 = vlaneseq
        %v1336 = vshrl.u32 %v1335, 7
        %v1337 = vsub.s32 3, %v1336
        %v1338 = vrot.slane %v1322, %v1337
        %vm1339 = vcmp.eq.s32.totalorder %v1326, 1
        %vm1340 = vcmp.eq.s32.totalorder %v1330, 1
        %vm1341 = vcmp.eq.s32.totalorder %v1334, 1
        %vm1342 = vcmp.eq.s32.totalorder %v1338, 1
        %v1343 = vsel %vm1339, %v706, 0.0
        %v1344 = vsel %vm1340, %v705, 0.0
        %v1345 = vsel %vm1341, %v704, 0.0
        %v1346 = vsel %vm1342, %v707, 0.0
        %1347 = vst [vmem:[#allocation2 + $0x340] sm:$0xff] %v1343
        %1348 = vst [vmem:[#allocation2 + $0x348] sm:$0xff] %v1344
        %1349 = vst [vmem:[#allocation2 + $0x350] sm:$0xff] %v1345
        %1350 = vst [vmem:[#allocation2 + $0x358] sm:$0xff] %v1346
        %v1351 = vld [vmem:[%s2] sm:$0xff]
        %v1352 = vld [vmem:[%s2 + $0x8] sm:$0xff]
        %v1353 = vld [vmem:[#allocation2] sm:$0xff]
        %v1354 = vld [vmem:[#allocation2 + $0x8] sm:$0xff]
        %v1355 = vld [vmem:[#allocation2 + $0x10] sm:$0xff]
        %v1356 = vld [vmem:[#allocation2 + $0x18] sm:$0xff]
        %v1357 = vld [vmem:[#allocation2 + $0x20] sm:$0xff]
        %v1358 = vld [vmem:[#allocation2 + $0x28] sm:$0xff]
        %v1359 = vld [vmem:[#allocation2 + $0x30] sm:$0xff]
        %v1360 = vld [vmem:[#allocation2 + $0x38] sm:$0xff]
        %v1361 = vld [vmem:[#allocation2 + $0x40] sm:$0xff]
        %v1362 = vld [vmem:[#allocation2 + $0x48] sm:$0xff]
        %v1363 = vld [vmem:[#allocation2 + $0x50] sm:$0xff]
        %v1364 = vld [vmem:[#allocation2 + $0x58] sm:$0xff]
        %v1365 = vld [vmem:[#allocation2 + $0x60] sm:$0xff]
        %v1366 = vld [vmem:[#allocation2 + $0x68] sm:$0xff]
        %v1367 = vld [vmem:[#allocation2 + $0x70] sm:$0xff]
        %v1368 = vld [vmem:[#allocation2 + $0x78] sm:$0xff]
        %v1369 = vld [vmem:[#allocation2 + $0x80] sm:$0xff]
        %v1370 = vld [vmem:[#allocation2 + $0x88] sm:$0xff]
        %v1371 = vld [vmem:[#allocation2 + $0x90] sm:$0xff]
        %v1372 = vld [vmem:[#allocation2 + $0x98] sm:$0xff]
        %v1373 = vld [vmem:[#allocation2 + $0xa0] sm:$0xff]
        %v1374 = vld [vmem:[#allocation2 + $0xa8] sm:$0xff]
        %v1375 = vld [vmem:[#allocation2 + $0xb0] sm:$0xff]
        %v1376 = vld [vmem:[#allocation2 + $0xb8] sm:$0xff]
        %v1377 = vld [vmem:[#allocation2 + $0xc0] sm:$0xff]
        %v1378 = vld [vmem:[#allocation2 + $0xc8] sm:$0xff]
        %v1379 = vld [vmem:[#allocation2 + $0xd0] sm:$0xff]
        %v1380 = vld [vmem:[#allocation2 + $0xd8] sm:$0xff]
        %v1381 = vld [vmem:[#allocation2 + $0xe0] sm:$0xff]
        %v1382 = vld [vmem:[#allocation2 + $0xe8] sm:$0xff]
        %v1383 = vld [vmem:[#allocation2 + $0xf0] sm:$0xff]
        %v1384 = vld [vmem:[#allocation2 + $0xf8] sm:$0xff]
        %v1385 = vld [vmem:[#allocation2 + $0x100] sm:$0xff]
        %v1386 = vld [vmem:[#allocation2 + $0x108] sm:$0xff]
        %v1387 = vld [vmem:[#allocation2 + $0x110] sm:$0xff]
        %v1388 = vld [vmem:[#allocation2 + $0x118] sm:$0xff]
        %v1389 = vld [vmem:[#allocation2 + $0x120] sm:$0xff]
        %v1390 = vld [vmem:[#allocation2 + $0x128] sm:$0xff]
        %v1391 = vld [vmem:[#allocation2 + $0x130] sm:$0xff]
        %v1392 = vld [vmem:[#allocation2 + $0x138] sm:$0xff]
        %v1393 = vld [vmem:[#allocation2 + $0x140] sm:$0xff]
        %v1394 = vld [vmem:[#allocation2 + $0x148] sm:$0xff]
        %v1395 = vld [vmem:[#allocation2 + $0x150] sm:$0xff]
        %v1396 = vld [vmem:[#allocation2 + $0x158] sm:$0xff]
        %v1397 = vld [vmem:[#allocation2 + $0x160] sm:$0xff]
        %v1398 = vld [vmem:[#allocation2 + $0x168] sm:$0xff]
        %v1399 = vld [vmem:[#allocation2 + $0x170] sm:$0xff]
        %v1400 = vld [vmem:[#allocation2 + $0x178] sm:$0xff]
        %v1401 = vld [vmem:[#allocation2 + $0x180] sm:$0xff]
        %v1402 = vld [vmem:[#allocation2 + $0x188] sm:$0xff]
        %v1403 = vld [vmem:[#allocation2 + $0x190] sm:$0xff]
        %v1404 = vld [vmem:[#allocation2 + $0x198] sm:$0xff]
        %v1405 = vld [vmem:[#allocation2 + $0x1a0] sm:$0xff]
        %v1406 = vld [vmem:[#allocation2 + $0x1a8] sm:$0xff]
        %v1407 = vld [vmem:[#allocation2 + $0x1b0] sm:$0xff]
        %v1408 = vld [vmem:[#allocation2 + $0x1b8] sm:$0xff]
        %v1409 = vld [vmem:[#allocation2 + $0x1c0] sm:$0xff]
        %v1410 = vld [vmem:[#allocation2 + $0x1c8] sm:$0xff]
        %v1411 = vld [vmem:[#allocation2 + $0x1d0] sm:$0xff]
        %v1412 = vld [vmem:[#allocation2 + $0x1d8] sm:$0xff]
        %v1413 = vld [vmem:[#allocation2 + $0x1e0] sm:$0xff]
        %v1414 = vld [vmem:[#allocation2 + $0x1e8] sm:$0xff]
        %v1415 = vld [vmem:[#allocation2 + $0x1f0] sm:$0xff]
        %v1416 = vld [vmem:[#allocation2 + $0x1f8] sm:$0xff]
        %v1417 = vld [vmem:[#allocation2 + $0x200] sm:$0xff]
        %v1418 = vld [vmem:[#allocation2 + $0x208] sm:$0xff]
        %v1419 = vld [vmem:[#allocation2 + $0x210] sm:$0xff]
        %v1420 = vld [vmem:[#allocation2 + $0x218] sm:$0xff]
        %v1421 = vld [vmem:[#allocation2 + $0x220] sm:$0xff]
        %v1422 = vld [vmem:[#allocation2 + $0x228] sm:$0xff]
        %v1423 = vld [vmem:[#allocation2 + $0x230] sm:$0xff]
        %v1424 = vld [vmem:[#allocation2 + $0x238] sm:$0xff]
        %v1425 = vld [vmem:[#allocation2 + $0x240] sm:$0xff]
        %v1426 = vld [vmem:[#allocation2 + $0x248] sm:$0xff]
        %v1427 = vld [vmem:[#allocation2 + $0x250] sm:$0xff]
        %v1428 = vld [vmem:[#allocation2 + $0x258] sm:$0xff]
        %v1429 = vld [vmem:[#allocation2 + $0x260] sm:$0xff]
        %v1430 = vld [vmem:[#allocation2 + $0x268] sm:$0xff]
        %v1431 = vld [vmem:[#allocation2 + $0x270] sm:$0xff]
        %v1432 = vld [vmem:[#allocation2 + $0x278] sm:$0xff]
        %v1433 = vld [vmem:[#allocation2 + $0x280] sm:$0xff]
        %v1434 = vld [vmem:[#allocation2 + $0x288] sm:$0xff]
        %v1435 = vld [vmem:[#allocation2 + $0x290] sm:$0xff]
        %v1436 = vld [vmem:[#allocation2 + $0x298] sm:$0xff]
        %v1437 = vld [vmem:[#allocation2 + $0x2a0] sm:$0xff]
        %v1438 = vld [vmem:[#allocation2 + $0x2a8] sm:$0xff]
        %v1439 = vld [vmem:[#allocation2 + $0x2b0] sm:$0xff]
        %v1440 = vld [vmem:[#allocation2 + $0x2b8] sm:$0xff]
        %v1441 = vld [vmem:[#allocation2 + $0x2c0] sm:$0xff]
        %v1442 = vld [vmem:[#allocation2 + $0x2c8] sm:$0xff]
        %v1443 = vld [vmem:[#allocation2 + $0x2d0] sm:$0xff]
        %v1444 = vld [vmem:[#allocation2 + $0x2d8] sm:$0xff]
        %v1445 = vld [vmem:[#allocation2 + $0x2e0] sm:$0xff]
        %v1446 = vld [vmem:[#allocation2 + $0x2e8] sm:$0xff]
        %v1447 = vld [vmem:[#allocation2 + $0x2f0] sm:$0xff]
        %v1448 = vld [vmem:[#allocation2 + $0x2f8] sm:$0xff]
        %v1449 = vld [vmem:[#allocation2 + $0x300] sm:$0xff]
        %v1450 = vld [vmem:[#allocation2 + $0x308] sm:$0xff]
        %v1451 = vld [vmem:[#allocation2 + $0x310] sm:$0xff]
        %v1452 = vld [vmem:[#allocation2 + $0x318] sm:$0xff]
        %v1453 = vld [vmem:[#allocation2 + $0x320] sm:$0xff]
        %v1454 = vld [vmem:[#allocation2 + $0x328] sm:$0xff]
        %v1455 = vld [vmem:[#allocation2 + $0x330] sm:$0xff]
        %v1456 = vld [vmem:[#allocation2 + $0x338] sm:$0xff]
        %v1457 = vld [vmem:[#allocation2 + $0x340] sm:$0xff]
        %v1458 = vld [vmem:[#allocation2 + $0x348] sm:$0xff]
        %v1459 = vld [vmem:[#allocation2 + $0x350] sm:$0xff]
        %v1460 = vld [vmem:[#allocation2 + $0x358] sm:$0xff]
        %vm1461 = vcmask 719872
        %v1463 = vsel %vm1461, %v1352, 0
        %1465 = vmatprep.subr.mxu0 %v1414
        %1466 = vmatpush1.msra.mxu0 %v1413
        %1467 = vmatprep.subr.mxu0 %v1410
        %1468 = vmatpush1.msra.mxu0 %v1409
        %1469 = vmatprep.subr.mxu0 %v1406
        %1470 = vmatpush1.msra.mxu0 %v1405
        %1471 = vmatprep.subr.mxu0 %v1402
        %1472 = vmatpush1.msra.mxu0 %v1401
        %1473 = vmatprep.subr.mxu0 %v1398
        %1474 = vmatpush1.msra.mxu0 %v1397
        %1475 = vmatprep.subr.mxu0 %v1394
        %1476 = vmatpush1.msra.mxu0 %v1393
        %1477 = vmatprep.subr.mxu0 %v1390
        %1478 = vmatpush1.msra.mxu0 %v1389
        %1479 = vmatprep.subr.mxu0 %v1386
        %1480 = vmatpush1.msra.mxu0 %v1385
        %1481 = vmatprep.subr.mxu0 %v1382
        %1482 = vmatpush1.msra.mxu0 %v1381
        %1483 = vmatprep.subr.mxu0 %v1378
        %1484 = vmatpush1.msra.mxu0 %v1377
        %1485 = vmatprep.subr.mxu0 %v1374
        %1486 = vmatpush1.msra.mxu0 %v1373
        %1487 = vmatprep.subr.mxu0 %v1370
        %1488 = vmatpush1.msra.mxu0 %v1369
        %1489 = vmatprep.subr.mxu0 %v1366
        %1490 = vmatpush1.msra.mxu0 %v1365
        %1491 = vmatprep.subr.mxu0 %v1362
        %1492 = vmatpush1.msra.mxu0 %v1361
        %1493 = vmatprep.subr.mxu0 %v1358
        %1494 = vmatpush1.msra.mxu0 %v1357
        %1495 = vmatprep.subr.mxu0 %v1354
        %1496 = vmatpush1.msra.mxu0 %v1353
        %1497 = vmatprep.subr.mxu0 0.0
        %1498 = vmatpush2.msra.mxu0 0.0
        %1499 = vmatprep.subr.mxu0 0.0
        %1500 = vmatpush2.msra.mxu0 0.0
        %1501 = vmatprep.subr.mxu0 0.0
        %1502 = vmatpush2.msra.mxu0 0.0
        %1503 = vmatprep.subr.mxu0 0.0
        %1504 = vmatpush2.msra.mxu0 0.0
        %1505 = vmatprep.subr.mxu0 0.0
        %1506 = vmatpush2.msra.mxu0 0.0
        %1507 = vmatprep.subr.mxu0 %v1458
        %1508 = vmatpush2.msra.mxu0 %v1457
        %1509 = vmatprep.subr.mxu0 %v1454
        %1510 = vmatpush2.msra.mxu0 %v1453
        %1511 = vmatprep.subr.mxu0 %v1450
        %1512 = vmatpush2.msra.mxu0 %v1449
        %1513 = vmatprep.subr.mxu0 %v1446
        %1514 = vmatpush2.msra.mxu0 %v1445
        %1515 = vmatprep.subr.mxu0 %v1442
        %1516 = vmatpush2.msra.mxu0 %v1441
        %1517 = vmatprep.subr.mxu0 %v1438
        %1518 = vmatpush2.msra.mxu0 %v1437
        %1519 = vmatprep.subr.mxu0 %v1434
        %1520 = vmatpush2.msra.mxu0 %v1433
        %1521 = vmatprep.subr.mxu0 %v1430
        %1522 = vmatpush2.msra.mxu0 %v1429
        %1523 = vmatprep.subr.mxu0 %v1426
        %1524 = vmatpush2.msra.mxu0 %v1425
        %1525 = vmatprep.subr.mxu0 %v1422
        %1526 = vmatpush2.msra.mxu0 %v1421
        %1527 = vmatprep.subr.mxu0 %v1418
        %1528 = vmatpush2.msra.mxu0 %v1417
        %1529 = vmatprep.mubr.f32.mxu0 %v1463
        %1530 = vmatmul.mubr.f32.gmra.mxu0 %v1351
        %v1531 = vpop.f32.mrf.mxu0
        %v1532 = vadd.f32 0.0, %v1531
        %v1533 = vpop.f32.mrf.mxu0
        %v1534 = vadd.f32 0.0, %v1533
        %1535 = vdwg.mxu0
        %1536 = vmatprep.subr.mxu0 %v1416
        %1537 = vmatpush1.msra.mxu0 %v1415
        %1538 = vmatprep.subr.mxu0 %v1412
        %1539 = vmatpush1.msra.mxu0 %v1411
        %1540 = vmatprep.subr.mxu0 %v1408
        %1541 = vmatpush1.msra.mxu0 %v1407
        %1542 = vmatprep.subr.mxu0 %v1404
        %1543 = vmatpush1.msra.mxu0 %v1403
        %1544 = vmatprep.subr.mxu0 %v1400
        %1545 = vmatpush1.msra.mxu0 %v1399
        %1546 = vmatprep.subr.mxu0 %v1396
        %1547 = vmatpush1.msra.mxu0 %v1395
        %1548 = vmatprep.subr.mxu0 %v1392
        %1549 = vmatpush1.msra.mxu0 %v1391
        %1550 = vmatprep.subr.mxu0 %v1388
        %1551 = vmatpush1.msra.mxu0 %v1387
        %1552 = vmatprep.subr.mxu0 %v1384
        %1553 = vmatpush1.msra.mxu0 %v1383
        %1554 = vmatprep.subr.mxu0 %v1380
        %1555 = vmatpush1.msra.mxu0 %v1379
        %1556 = vmatprep.subr.mxu0 %v1376
        %1557 = vmatpush1.msra.mxu0 %v1375
        %1558 = vmatprep.subr.mxu0 %v1372
        %1559 = vmatpush1.msra.mxu0 %v1371
        %1560 = vmatprep.subr.mxu0 %v1368
        %1561 = vmatpush1.msra.mxu0 %v1367
        %1562 = vmatprep.subr.mxu0 %v1364
        %1563 = vmatpush1.msra.mxu0 %v1363
        %1564 = vmatprep.subr.mxu0 %v1360
        %1565 = vmatpush1.msra.mxu0 %v1359
        %1566 = vmatprep.subr.mxu0 %v1356
        %1567 = vmatpush1.msra.mxu0 %v1355
        %1568 = vmatprep.subr.mxu0 0.0
        %1569 = vmatpush2.msra.mxu0 0.0
        %1570 = vmatprep.subr.mxu0 0.0
        %1571 = vmatpush2.msra.mxu0 0.0
        %1572 = vmatprep.subr.mxu0 0.0
        %1573 = vmatpush2.msra.mxu0 0.0
        %1574 = vmatprep.subr.mxu0 0.0
        %1575 = vmatpush2.msra.mxu0 0.0
        %1576 = vmatprep.subr.mxu0 0.0
        %1577 = vmatpush2.msra.mxu0 0.0
        %1578 = vmatprep.subr.mxu0 %v1460
        %1579 = vmatpush2.msra.mxu0 %v1459
        %1580 = vmatprep.subr.mxu0 %v1456
        %1581 = vmatpush2.msra.mxu0 %v1455
        %1582 = vmatprep.subr.mxu0 %v1452
        %1583 = vmatpush2.msra.mxu0 %v1451
        %1584 = vmatprep.subr.mxu0 %v1448
        %1585 = vmatpush2.msra.mxu0 %v1447
        %1586 = vmatprep.subr.mxu0 %v1444
        %1587 = vmatpush2.msra.mxu0 %v1443
        %1588 = vmatprep.subr.mxu0 %v1440
        %1589 = vmatpush2.msra.mxu0 %v1439
        %1590 = vmatprep.subr.mxu0 %v1436
        %1591 = vmatpush2.msra.mxu0 %v1435
        %1592 = vmatprep.subr.mxu0 %v1432
        %1593 = vmatpush2.msra.mxu0 %v1431
        %1594 = vmatprep.subr.mxu0 %v1428
        %1595 = vmatpush2.msra.mxu0 %v1427
        %1596 = vmatprep.subr.mxu0 %v1424
        %1597 = vmatpush2.msra.mxu0 %v1423
        %1598 = vmatprep.subr.mxu0 %v1420
        %1599 = vmatpush2.msra.mxu0 %v1419
        %1600 = vmatprep.mubr.f32.mxu0 %v1463
        %1601 = vmatmul.mubr.f32.gmra.mxu0 %v1351
        %v1602 = vpop.f32.mrf.mxu0
        %v1603 = vadd.f32 0.0, %v1602
        %v1604 = vpop.f32.mrf.mxu0
        %v1605 = vadd.f32 0.0, %v1604
        %1606 = vdwg.mxu0
        %v1607 = vld [vmem:[%s3] sm:$0xff]
        %1609 = vset.pattern.permute.xlu0 0
        %1610 = vperm.xlu0 %1609, %v1607
        %v1611 = vpop.permute.xlu0 %1610
        %v1613 = vmul.f32 %v1532, %v1611
        %v1614 = vmul.f32 %v1534, %v1611
        %v1615 = vmul.f32 %v1603, %v1611
        %v1616 = vmul.f32 %v1605, %v1611
        %v1617 = vld [vmem:[%s4] sm:$0xff]
        %1619 = vset.pattern.permute.xlu0 0
        %1620 = vperm.xlu0 %1619, %v1617
        %v1621 = vpop.permute.xlu0 %1620
        %v1623 = vadd.f32 %v1613, %v1621
        %v1624 = vadd.f32 %v1614, %v1621
        %v1625 = vadd.f32 %v1615, %v1621
        %v1626 = vadd.f32 %v1616, %v1621
        %v1627 = vmax.f32 %v1623, 0.0
        %v1628 = vmax.f32 %v1624, 0.0
        %v1629 = vmax.f32 %v1625, 0.0
        %v1630 = vmax.f32 %v1626, 0.0
        %1631 = vrot.lane.b32.xlu0 %v1627, 73
        %v1632 = vpop.permute.xlu0 %1631
        %1633 = vrot.lane.b32.xlu0 %v1628, 73
        %v1634 = vpop.permute.xlu0 %1633
        %1635 = vrot.lane.b32.xlu0 %v1629, 73
        %v1636 = vpop.permute.xlu0 %1635
        %1637 = vrot.lane.b32.xlu0 %v1630, 73
        %v1638 = vpop.permute.xlu0 %1637
        %v1639 = vsel %vm360, %v1636, %v1638
        %v1640 = vsel %vm360, %v1634, %v1636
        %v1641 = vsel %vm360, %v1632, %v1634
        %v1642 = vsel %vm360, %v1638, %v1632
        %v1643 = vsel %vm384, %v1642, 0.0
        %v1644 = vsel %vm385, %v1641, 0.0
        %v1645 = vsel %vm386, %v1640, 0.0
        %v1646 = vsel %vm387, %v1639, 0.0
        %1647 = vst [vmem:[#allocation3] sm:$0xff] %v1643
        %1648 = vst [vmem:[#allocation3 + $0x8] sm:$0xff] %v1644
        %1649 = vst [vmem:[#allocation3 + $0x10] sm:$0xff] %v1645
        %1650 = vst [vmem:[#allocation3 + $0x18] sm:$0xff] %v1646
        %1651 = vrot.lane.b32.xlu0 %v1627, 72
        %v1652 = vpop.permute.xlu0 %1651
        %1653 = vrot.lane.b32.xlu0 %v1628, 72
        %v1654 = vpop.permute.xlu0 %1653
        %1655 = vrot.lane.b32.xlu0 %v1629, 72
        %v1656 = vpop.permute.xlu0 %1655
        %1657 = vrot.lane.b32.xlu0 %v1630, 72
        %v1658 = vpop.permute.xlu0 %1657
        %v1659 = vsel %vm404, %v1656, %v1658
        %v1660 = vsel %vm404, %v1654, %v1656
        %v1661 = vsel %vm404, %v1652, %v1654
        %v1662 = vsel %vm404, %v1658, %v1652
        %v1663 = vsel %vm426, %v1662, 0.0
        %v1664 = vsel %vm427, %v1661, 0.0
        %v1665 = vsel %vm428, %v1660, 0.0
        %v1666 = vsel %vm429, %v1659, 0.0
        %1667 = vst [vmem:[#allocation3 + $0x20] sm:$0xff] %v1663
        %1668 = vst [vmem:[#allocation3 + $0x28] sm:$0xff] %v1664
        %1669 = vst [vmem:[#allocation3 + $0x30] sm:$0xff] %v1665
        %1670 = vst [vmem:[#allocation3 + $0x38] sm:$0xff] %v1666
        %1671 = vrot.lane.b32.xlu0 %v1627, 71
        %v1672 = vpop.permute.xlu0 %1671
        %1673 = vrot.lane.b32.xlu0 %v1628, 71
        %v1674 = vpop.permute.xlu0 %1673
        %1675 = vrot.lane.b32.xlu0 %v1629, 71
        %v1676 = vpop.permute.xlu0 %1675
        %1677 = vrot.lane.b32.xlu0 %v1630, 71
        %v1678 = vpop.permute.xlu0 %1677
        %v1679 = vsel %vm446, %v1676, %v1678
        %v1680 = vsel %vm446, %v1674, %v1676
        %v1681 = vsel %vm446, %v1672, %v1674
        %v1682 = vsel %vm446, %v1678, %v1672
        %v1683 = vsel %vm469, %v1682, 0.0
        %v1684 = vsel %vm470, %v1681, 0.0
        %v1685 = vsel %vm471, %v1680, 0.0
        %v1686 = vsel %vm472, %v1679, 0.0
        %1687 = vst [vmem:[#allocation3 + $0x40] sm:$0xff] %v1683
        %1688 = vst [vmem:[#allocation3 + $0x48] sm:$0xff] %v1684
        %1689 = vst [vmem:[#allocation3 + $0x50] sm:$0xff] %v1685
        %1690 = vst [vmem:[#allocation3 + $0x58] sm:$0xff] %v1686
        %1691 = vrot.lane.b32.xlu0 %v1627, 65
        %v1692 = vpop.permute.xlu0 %1691
        %1693 = vrot.lane.b32.xlu0 %v1628, 65
        %v1694 = vpop.permute.xlu0 %1693
        %1695 = vrot.lane.b32.xlu0 %v1629, 65
        %v1696 = vpop.permute.xlu0 %1695
        %1697 = vrot.lane.b32.xlu0 %v1630, 65
        %v1698 = vpop.permute.xlu0 %1697
        %v1699 = vsel %vm489, %v1696, %v1698
        %v1700 = vsel %vm489, %v1694, %v1696
        %v1701 = vsel %vm489, %v1692, %v1694
        %v1702 = vsel %vm489, %v1698, %v1692
        %v1703 = vsel %vm512, %v1702, 0.0
        %v1704 = vsel %vm513, %v1701, 0.0
        %v1705 = vsel %vm514, %v1700, 0.0
        %v1706 = vsel %vm515, %v1699, 0.0
        %1707 = vst [vmem:[#allocation3 + $0x60] sm:$0xff] %v1703
        %1708 = vst [vmem:[#allocation3 + $0x68] sm:$0xff] %v1704
        %1709 = vst [vmem:[#allocation3 + $0x70] sm:$0xff] %v1705
        %1710 = vst [vmem:[#allocation3 + $0x78] sm:$0xff] %v1706
        %1711 = vrot.lane.b32.xlu0 %v1627, 64
        %v1712 = vpop.permute.xlu0 %1711
        %1713 = vrot.lane.b32.xlu0 %v1628, 64
        %v1714 = vpop.permute.xlu0 %1713
        %1715 = vrot.lane.b32.xlu0 %v1629, 64
        %v1716 = vpop.permute.xlu0 %1715
        %1717 = vrot.lane.b32.xlu0 %v1630, 64
        %v1718 = vpop.permute.xlu0 %1717
        %v1719 = vsel %vm532, %v1716, %v1718
        %v1720 = vsel %vm532, %v1714, %v1716
        %v1721 = vsel %vm532, %v1712, %v1714
        %v1722 = vsel %vm532, %v1718, %v1712
        %v1723 = vsel %vm554, %v1722, 0.0
        %v1724 = vsel %vm555, %v1721, 0.0
        %v1725 = vsel %vm556, %v1720, 0.0
        %v1726 = vsel %vm557, %v1719, 0.0
        %1727 = vst [vmem:[#allocation3 + $0x80] sm:$0xff] %v1723
        %1728 = vst [vmem:[#allocation3 + $0x88] sm:$0xff] %v1724
        %1729 = vst [vmem:[#allocation3 + $0x90] sm:$0xff] %v1725
        %1730 = vst [vmem:[#allocation3 + $0x98] sm:$0xff] %v1726
        %1731 = vrot.lane.b32.xlu0 %v1627, 63
        %v1732 = vpop.permute.xlu0 %1731
        %1733 = vrot.lane.b32.xlu0 %v1628, 63
        %v1734 = vpop.permute.xlu0 %1733
        %1735 = vrot.lane.b32.xlu0 %v1629, 63
        %v1736 = vpop.permute.xlu0 %1735
        %1737 = vrot.lane.b32.xlu0 %v1630, 63
        %v1738 = vpop.permute.xlu0 %1737
        %v1739 = vsel %vm574, %v1736, %v1738
        %v1740 = vsel %vm574, %v1734, %v1736
        %v1741 = vsel %vm574, %v1732, %v1734
        %v1742 = vsel %vm574, %v1738, %v1732
        %v1743 = vsel %vm597, %v1742, 0.0
        %v1744 = vsel %vm598, %v1741, 0.0
        %v1745 = vsel %vm599, %v1740, 0.0
        %v1746 = vsel %vm600, %v1739, 0.0
        %1747 = vst [vmem:[#allocation3 + $0xa0] sm:$0xff] %v1743
        %1748 = vst [vmem:[#allocation3 + $0xa8] sm:$0xff] %v1744
        %1749 = vst [vmem:[#allocation3 + $0xb0] sm:$0xff] %v1745
        %1750 = vst [vmem:[#allocation3 + $0xb8] sm:$0xff] %v1746
        %1751 = vrot.lane.b32.xlu0 %v1627, 57
        %v1752 = vpop.permute.xlu0 %1751
        %1753 = vrot.lane.b32.xlu0 %v1628, 57
        %v1754 = vpop.permute.xlu0 %1753
        %1755 = vrot.lane.b32.xlu0 %v1629, 57
        %v1756 = vpop.permute.xlu0 %1755
        %1757 = vrot.lane.b32.xlu0 %v1630, 57
        %v1758 = vpop.permute.xlu0 %1757
        %v1759 = vsel %vm617, %v1756, %v1758
        %v1760 = vsel %vm617, %v1754, %v1756
        %v1761 = vsel %vm617, %v1752, %v1754
        %v1762 = vsel %vm617, %v1758, %v1752
        %v1763 = vsel %vm641, %v1762, 0.0
        %v1764 = vsel %vm642, %v1761, 0.0
        %v1765 = vsel %vm643, %v1760, 0.0
        %v1766 = vsel %vm644, %v1759, 0.0
        %1767 = vst [vmem:[#allocation3 + $0xc0] sm:$0xff] %v1763
        %1768 = vst [vmem:[#allocation3 + $0xc8] sm:$0xff] %v1764
        %1769 = vst [vmem:[#allocation3 + $0xd0] sm:$0xff] %v1765
        %1770 = vst [vmem:[#allocation3 + $0xd8] sm:$0xff] %v1766
        %1771 = vrot.lane.b32.xlu0 %v1627, 56
        %v1772 = vpop.permute.xlu0 %1771
        %1773 = vrot.lane.b32.xlu0 %v1628, 56
        %v1774 = vpop.permute.xlu0 %1773
        %1775 = vrot.lane.b32.xlu0 %v1629, 56
        %v1776 = vpop.permute.xlu0 %1775
        %1777 = vrot.lane.b32.xlu0 %v1630, 56
        %v1778 = vpop.permute.xlu0 %1777
        %v1779 = vsel %vm661, %v1776, %v1778
        %v1780 = vsel %vm661, %v1774, %v1776
        %v1781 = vsel %vm661, %v1772, %v1774
        %v1782 = vsel %vm661, %v1778, %v1772
        %v1783 = vsel %vm683, %v1782, 0.0
        %v1784 = vsel %vm684, %v1781, 0.0
        %v1785 = vsel %vm685, %v1780, 0.0
        %v1786 = vsel %vm686, %v1779, 0.0
        %1787 = vst [vmem:[#allocation3 + $0xe0] sm:$0xff] %v1783
        %1788 = vst [vmem:[#allocation3 + $0xe8] sm:$0xff] %v1784
        %1789 = vst [vmem:[#allocation3 + $0xf0] sm:$0xff] %v1785
        %1790 = vst [vmem:[#allocation3 + $0xf8] sm:$0xff] %v1786
        %1791 = vrot.lane.b32.xlu0 %v1627, 55
        %v1792 = vpop.permute.xlu0 %1791
        %1793 = vrot.lane.b32.xlu0 %v1628, 55
        %v1794 = vpop.permute.xlu0 %1793
        %1795 = vrot.lane.b32.xlu0 %v1629, 55
        %v1796 = vpop.permute.xlu0 %1795
        %1797 = vrot.lane.b32.xlu0 %v1630, 55
        %v1798 = vpop.permute.xlu0 %1797
        %v1799 = vsel %vm703, %v1796, %v1798
        %v1800 = vsel %vm703, %v1794, %v1796
        %v1801 = vsel %vm703, %v1792, %v1794
        %v1802 = vsel %vm703, %v1798, %v1792
        %v1803 = vsel %vm726, %v1802, 0.0
        %v1804 = vsel %vm727, %v1801, 0.0
        %v1805 = vsel %vm728, %v1800, 0.0
        %v1806 = vsel %vm729, %v1799, 0.0
        %1807 = vst [vmem:[#allocation3 + $0x100] sm:$0xff] %v1803
        %1808 = vst [vmem:[#allocation3 + $0x108] sm:$0xff] %v1804
        %1809 = vst [vmem:[#allocation3 + $0x110] sm:$0xff] %v1805
        %1810 = vst [vmem:[#allocation3 + $0x118] sm:$0xff] %v1806
        %1811 = vrot.lane.b32.xlu0 %v1627, 9
        %v1812 = vpop.permute.xlu0 %1811
        %1813 = vrot.lane.b32.xlu0 %v1628, 9
        %v1814 = vpop.permute.xlu0 %1813
        %1815 = vrot.lane.b32.xlu0 %v1629, 9
        %v1816 = vpop.permute.xlu0 %1815
        %1817 = vrot.lane.b32.xlu0 %v1630, 9
        %v1818 = vpop.permute.xlu0 %1817
        %v1819 = vsel %vm746, %v1816, %v1818
        %v1820 = vsel %vm746, %v1814, %v1816
        %v1821 = vsel %vm746, %v1812, %v1814
        %v1822 = vsel %vm746, %v1818, %v1812
        %v1823 = vsel %vm769, %v1822, 0.0
        %v1824 = vsel %vm770, %v1821, 0.0
        %v1825 = vsel %vm771, %v1820, 0.0
        %v1826 = vsel %vm772, %v1819, 0.0
        %1827 = vst [vmem:[#allocation3 + $0x120] sm:$0xff] %v1823
        %1828 = vst [vmem:[#allocation3 + $0x128] sm:$0xff] %v1824
        %1829 = vst [vmem:[#allocation3 + $0x130] sm:$0xff] %v1825
        %1830 = vst [vmem:[#allocation3 + $0x138] sm:$0xff] %v1826
        %1831 = vrot.lane.b32.xlu0 %v1627, 8
        %v1832 = vpop.permute.xlu0 %1831
        %1833 = vrot.lane.b32.xlu0 %v1628, 8
        %v1834 = vpop.permute.xlu0 %1833
        %1835 = vrot.lane.b32.xlu0 %v1629, 8
        %v1836 = vpop.permute.xlu0 %1835
        %1837 = vrot.lane.b32.xlu0 %v1630, 8
        %v1838 = vpop.permute.xlu0 %1837
        %v1839 = vsel %vm789, %v1836, %v1838
        %v1840 = vsel %vm789, %v1834, %v1836
        %v1841 = vsel %vm789, %v1832, %v1834
        %v1842 = vsel %vm789, %v1838, %v1832
        %v1843 = vsel %vm811, %v1842, 0.0
        %v1844 = vsel %vm812, %v1841, 0.0
        %v1845 = vsel %vm813, %v1840, 0.0
        %v1846 = vsel %vm814, %v1839, 0.0
        %1847 = vst [vmem:[#allocation3 + $0x140] sm:$0xff] %v1843
        %1848 = vst [vmem:[#allocation3 + $0x148] sm:$0xff] %v1844
        %1849 = vst [vmem:[#allocation3 + $0x150] sm:$0xff] %v1845
        %1850 = vst [vmem:[#allocation3 + $0x158] sm:$0xff] %v1846
        %1851 = vrot.lane.b32.xlu0 %v1627, 7
        %v1852 = vpop.permute.xlu0 %1851
        %1853 = vrot.lane.b32.xlu0 %v1628, 7
        %v1854 = vpop.permute.xlu0 %1853
        %1855 = vrot.lane.b32.xlu0 %v1629, 7
        %v1856 = vpop.permute.xlu0 %1855
        %1857 = vrot.lane.b32.xlu0 %v1630, 7
        %v1858 = vpop.permute.xlu0 %1857
        %v1859 = vsel %vm831, %v1856, %v1858
        %v1860 = vsel %vm831, %v1854, %v1856
        %v1861 = vsel %vm831, %v1852, %v1854
        %v1862 = vsel %vm831, %v1858, %v1852
        %v1863 = vsel %vm854, %v1862, 0.0
        %v1864 = vsel %vm855, %v1861, 0.0
        %v1865 = vsel %vm856, %v1860, 0.0
        %v1866 = vsel %vm857, %v1859, 0.0
        %1867 = vst [vmem:[#allocation3 + $0x160] sm:$0xff] %v1863
        %1868 = vst [vmem:[#allocation3 + $0x168] sm:$0xff] %v1864
        %1869 = vst [vmem:[#allocation3 + $0x170] sm:$0xff] %v1865
        %1870 = vst [vmem:[#allocation3 + $0x178] sm:$0xff] %v1866
        %1871 = vrot.lane.b32.xlu0 %v1627, 1
        %v1872 = vpop.permute.xlu0 %1871
        %1873 = vrot.lane.b32.xlu0 %v1628, 1
        %v1874 = vpop.permute.xlu0 %1873
        %1875 = vrot.lane.b32.xlu0 %v1629, 1
        %v1876 = vpop.permute.xlu0 %1875
        %1877 = vrot.lane.b32.xlu0 %v1630, 1
        %v1878 = vpop.permute.xlu0 %1877
        %v1879 = vsel %vm874, %v1876, %v1878
        %v1880 = vsel %vm874, %v1874, %v1876
        %v1881 = vsel %vm874, %v1872, %v1874
        %v1882 = vsel %vm874, %v1878, %v1872
        %v1883 = vsel %vm896, %v1882, 0.0
        %v1884 = vsel %vm897, %v1881, 0.0
        %v1885 = vsel %vm898, %v1880, 0.0
        %v1886 = vsel %vm899, %v1879, 0.0
        %1887 = vst [vmem:[#allocation3 + $0x180] sm:$0xff] %v1883
        %1888 = vst [vmem:[#allocation3 + $0x188] sm:$0xff] %v1884
        %1889 = vst [vmem:[#allocation3 + $0x190] sm:$0xff] %v1885
        %1890 = vst [vmem:[#allocation3 + $0x198] sm:$0xff] %v1886
        %1891 = vst [vmem:[#allocation3 + $0x1a0] sm:$0xff] %v1627
        %1892 = vst [vmem:[#allocation3 + $0x1a8] sm:$0xff] %v1628
        %1893 = vst [vmem:[#allocation3 + $0x1b0] sm:$0xff] %v1629
        %1894 = vst [vmem:[#allocation3 + $0x1b8] sm:$0xff] %v1630
        %1895 = vrot.lane.b32.xlu0 %v1627, 127
        %v1896 = vpop.permute.xlu0 %1895
        %1897 = vrot.lane.b32.xlu0 %v1628, 127
        %v1898 = vpop.permute.xlu0 %1897
        %1899 = vrot.lane.b32.xlu0 %v1629, 127
        %v1900 = vpop.permute.xlu0 %1899
        %1901 = vrot.lane.b32.xlu0 %v1630, 127
        %v1902 = vpop.permute.xlu0 %1901
        %v1903 = vsel %vm920, %v1900, %v1902
        %v1904 = vsel %vm920, %v1898, %v1900
        %v1905 = vsel %vm920, %v1896, %v1898
        %v1906 = vsel %vm920, %v1902, %v1896
        %v1907 = vsel %vm942, %v1905, 0.0
        %v1908 = vsel %vm943, %v1904, 0.0
        %v1909 = vsel %vm944, %v1903, 0.0
        %v1910 = vsel %vm945, %v1906, 0.0
        %1911 = vst [vmem:[#allocation3 + $0x1c0] sm:$0xff] %v1907
        %1912 = vst [vmem:[#allocation3 + $0x1c8] sm:$0xff] %v1908
        %1913 = vst [vmem:[#allocation3 + $0x1d0] sm:$0xff] %v1909
        %1914 = vst [vmem:[#allocation3 + $0x1d8] sm:$0xff] %v1910
        %1915 = vrot.lane.b32.xlu0 %v1627, 121
        %v1916 = vpop.permute.xlu0 %1915
        %1917 = vrot.lane.b32.xlu0 %v1628, 121
        %v1918 = vpop.permute.xlu0 %1917
        %1919 = vrot.lane.b32.xlu0 %v1629, 121
        %v1920 = vpop.permute.xlu0 %1919
        %1921 = vrot.lane.b32.xlu0 %v1630, 121
        %v1922 = vpop.permute.xlu0 %1921
        %v1923 = vsel %vm962, %v1920, %v1922
        %v1924 = vsel %vm962, %v1918, %v1920
        %v1925 = vsel %vm962, %v1916, %v1918
        %v1926 = vsel %vm962, %v1922, %v1916
        %v1927 = vsel %vm985, %v1925, 0.0
        %v1928 = vsel %vm986, %v1924, 0.0
        %v1929 = vsel %vm987, %v1923, 0.0
        %v1930 = vsel %vm988, %v1926, 0.0
        %1931 = vst [vmem:[#allocation3 + $0x1e0] sm:$0xff] %v1927
        %1932 = vst [vmem:[#allocation3 + $0x1e8] sm:$0xff] %v1928
        %1933 = vst [vmem:[#allocation3 + $0x1f0] sm:$0xff] %v1929
        %1934 = vst [vmem:[#allocation3 + $0x1f8] sm:$0xff] %v1930
        %1935 = vrot.lane.b32.xlu0 %v1627, 120
        %v1936 = vpop.permute.xlu0 %1935
        %1937 = vrot.lane.b32.xlu0 %v1628, 120
        %v1938 = vpop.permute.xlu0 %1937
        %1939 = vrot.lane.b32.xlu0 %v1629, 120
        %v1940 = vpop.permute.xlu0 %1939
        %1941 = vrot.lane.b32.xlu0 %v1630, 120
        %v1942 = vpop.permute.xlu0 %1941
        %v1943 = vsel %vm1005, %v1940, %v1942
        %v1944 = vsel %vm1005, %v1938, %v1940
        %v1945 = vsel %vm1005, %v1936, %v1938
        %v1946 = vsel %vm1005, %v1942, %v1936
        %v1947 = vsel %vm1027, %v1945, 0.0
        %v1948 = vsel %vm1028, %v1944, 0.0
        %v1949 = vsel %vm1029, %v1943, 0.0
        %v1950 = vsel %vm1030, %v1946, 0.0
        %1951 = vst [vmem:[#allocation3 + $0x200] sm:$0xff] %v1947
        %1952 = vst [vmem:[#allocation3 + $0x208] sm:$0xff] %v1948
        %1953 = vst [vmem:[#allocation3 + $0x210] sm:$0xff] %v1949
        %1954 = vst [vmem:[#allocation3 + $0x218] sm:$0xff] %v1950
        %1955 = vrot.lane.b32.xlu0 %v1627, 119
        %v1956 = vpop.permute.xlu0 %1955
        %1957 = vrot.lane.b32.xlu0 %v1628, 119
        %v1958 = vpop.permute.xlu0 %1957
        %1959 = vrot.lane.b32.xlu0 %v1629, 119
        %v1960 = vpop.permute.xlu0 %1959
        %1961 = vrot.lane.b32.xlu0 %v1630, 119
        %v1962 = vpop.permute.xlu0 %1961
        %v1963 = vsel %vm1047, %v1960, %v1962
        %v1964 = vsel %vm1047, %v1958, %v1960
        %v1965 = vsel %vm1047, %v1956, %v1958
        %v1966 = vsel %vm1047, %v1962, %v1956
        %v1967 = vsel %vm1070, %v1965, 0.0
        %v1968 = vsel %vm1071, %v1964, 0.0
        %v1969 = vsel %vm1072, %v1963, 0.0
        %v1970 = vsel %vm1073, %v1966, 0.0
        %1971 = vst [vmem:[#allocation3 + $0x220] sm:$0xff] %v1967
        %1972 = vst [vmem:[#allocation3 + $0x228] sm:$0xff] %v1968
        %1973 = vst [vmem:[#allocation3 + $0x230] sm:$0xff] %v1969
        %1974 = vst [vmem:[#allocation3 + $0x238] sm:$0xff] %v1970
        %v1975 = vsel %vm1101, %v1641, 0.0
        %v1976 = vsel %vm1102, %v1640, 0.0
        %v1977 = vsel %vm1103, %v1639, 0.0
        %v1978 = vsel %vm1104, %v1642, 0.0
        %1979 = vst [vmem:[#allocation3 + $0x240] sm:$0xff] %v1975
        %1980 = vst [vmem:[#allocation3 + $0x248] sm:$0xff] %v1976
        %1981 = vst [vmem:[#allocation3 + $0x250] sm:$0xff] %v1977
        %1982 = vst [vmem:[#allocation3 + $0x258] sm:$0xff] %v1978
        %v1983 = vsel %vm1130, %v1661, 0.0
        %v1984 = vsel %vm1131, %v1660, 0.0
        %v1985 = vsel %vm1132, %v1659, 0.0
        %v1986 = vsel %vm1133, %v1662, 0.0
        %1987 = vst [vmem:[#allocation3 + $0x260] sm:$0xff] %v1983
        %1988 = vst [vmem:[#allocation3 + $0x268] sm:$0xff] %v1984
        %1989 = vst [vmem:[#allocation3 + $0x270] sm:$0xff] %v1985
        %1990 = vst [vmem:[#allocation3 + $0x278] sm:$0xff] %v1986
        %v1991 = vsel %vm1160, %v1681, 0.0
        %v1992 = vsel %vm1161, %v1680, 0.0
        %v1993 = vsel %vm1162, %v1679, 0.0
        %v1994 = vsel %vm1163, %v1682, 0.0
        %1995 = vst [vmem:[#allocation3 + $0x280] sm:$0xff] %v1991
        %1996 = vst [vmem:[#allocation3 + $0x288] sm:$0xff] %v1992
        %1997 = vst [vmem:[#allocation3 + $0x290] sm:$0xff] %v1993
        %1998 = vst [vmem:[#allocation3 + $0x298] sm:$0xff] %v1994
        %v1999 = vsel %vm1190, %v1701, 0.0
        %v2000 = vsel %vm1191, %v1700, 0.0
        %v2001 = vsel %vm1192, %v1699, 0.0
        %v2002 = vsel %vm1193, %v1702, 0.0
        %2003 = vst [vmem:[#allocation3 + $0x2a0] sm:$0xff] %v1999
        %2004 = vst [vmem:[#allocation3 + $0x2a8] sm:$0xff] %v2000
        %2005 = vst [vmem:[#allocation3 + $0x2b0] sm:$0xff] %v2001
        %2006 = vst [vmem:[#allocation3 + $0x2b8] sm:$0xff] %v2002
        %v2007 = vsel %vm1219, %v1721, 0.0
        %v2008 = vsel %vm1220, %v1720, 0.0
        %v2009 = vsel %vm1221, %v1719, 0.0
        %v2010 = vsel %vm1222, %v1722, 0.0
        %2011 = vst [vmem:[#allocation3 + $0x2c0] sm:$0xff] %v2007
        %2012 = vst [vmem:[#allocation3 + $0x2c8] sm:$0xff] %v2008
        %2013 = vst [vmem:[#allocation3 + $0x2d0] sm:$0xff] %v2009
        %2014 = vst [vmem:[#allocation3 + $0x2d8] sm:$0xff] %v2010
        %v2015 = vsel %vm1249, %v1741, 0.0
        %v2016 = vsel %vm1250, %v1740, 0.0
        %v2017 = vsel %vm1251, %v1739, 0.0
        %v2018 = vsel %vm1252, %v1742, 0.0
        %2019 = vst [vmem:[#allocation3 + $0x2e0] sm:$0xff] %v2015
        %2020 = vst [vmem:[#allocation3 + $0x2e8] sm:$0xff] %v2016
        %2021 = vst [vmem:[#allocation3 + $0x2f0] sm:$0xff] %v2017
        %2022 = vst [vmem:[#allocation3 + $0x2f8] sm:$0xff] %v2018
        %v2023 = vsel %vm1280, %v1761, 0.0
        %v2024 = vsel %vm1281, %v1760, 0.0
        %v2025 = vsel %vm1282, %v1759, 0.0
        %v2026 = vsel %vm1283, %v1762, 0.0
        %2027 = vst [vmem:[#allocation3 + $0x300] sm:$0xff] %v2023
        %2028 = vst [vmem:[#allocation3 + $0x308] sm:$0xff] %v2024
        %2029 = vst [vmem:[#allocation3 + $0x310] sm:$0xff] %v2025
        %2030 = vst [vmem:[#allocation3 + $0x318] sm:$0xff] %v2026
        %v2031 = vsel %vm1309, %v1781, 0.0
        %v2032 = vsel %vm1310, %v1780, 0.0
        %v2033 = vsel %vm1311, %v1779, 0.0
        %v2034 = vsel %vm1312, %v1782, 0.0
        %2035 = vst [vmem:[#allocation3 + $0x320] sm:$0xff] %v2031
        %2036 = vst [vmem:[#allocation3 + $0x328] sm:$0xff] %v2032
        %2037 = vst [vmem:[#allocation3 + $0x330] sm:$0xff] %v2033
        %2038 = vst [vmem:[#allocation3 + $0x338] sm:$0xff] %v2034
        %v2039 = vsel %vm1339, %v1801, 0.0
        %v2040 = vsel %vm1340, %v1800, 0.0
        %v2041 = vsel %vm1341, %v1799, 0.0
        %v2042 = vsel %vm1342, %v1802, 0.0
        %2043 = vst [vmem:[#allocation3 + $0x340] sm:$0xff] %v2039
        %2044 = vst [vmem:[#allocation3 + $0x348] sm:$0xff] %v2040
        %2045 = vst [vmem:[#allocation3 + $0x350] sm:$0xff] %v2041
        %2046 = vst [vmem:[#allocation3 + $0x358] sm:$0xff] %v2042
        %v2047 = vld [vmem:[#allocation7] sm:$0xff]
        %v2048 = vld [vmem:[#allocation7 + $0x8] sm:$0xff]
        %v2049 = vld [vmem:[#allocation3] sm:$0xff]
        %v2050 = vld [vmem:[#allocation3 + $0x8] sm:$0xff]
        %v2051 = vld [vmem:[#allocation3 + $0x10] sm:$0xff]
        %v2052 = vld [vmem:[#allocation3 + $0x18] sm:$0xff]
        %v2053 = vld [vmem:[#allocation3 + $0x20] sm:$0xff]
        %v2054 = vld [vmem:[#allocation3 + $0x28] sm:$0xff]
        %v2055 = vld [vmem:[#allocation3 + $0x30] sm:$0xff]
        %v2056 = vld [vmem:[#allocation3 + $0x38] sm:$0xff]
        %v2057 = vld [vmem:[#allocation3 + $0x40] sm:$0xff]
        %v2058 = vld [vmem:[#allocation3 + $0x48] sm:$0xff]
        %v2059 = vld [vmem:[#allocation3 + $0x50] sm:$0xff]
        %v2060 = vld [vmem:[#allocation3 + $0x58] sm:$0xff]
        %v2061 = vld [vmem:[#allocation3 + $0x60] sm:$0xff]
        %v2062 = vld [vmem:[#allocation3 + $0x68] sm:$0xff]
        %v2063 = vld [vmem:[#allocation3 + $0x70] sm:$0xff]
        %v2064 = vld [vmem:[#allocation3 + $0x78] sm:$0xff]
        %v2065 = vld [vmem:[#allocation3 + $0x80] sm:$0xff]
        %v2066 = vld [vmem:[#allocation3 + $0x88] sm:$0xff]
        %v2067 = vld [vmem:[#allocation3 + $0x90] sm:$0xff]
        %v2068 = vld [vmem:[#allocation3 + $0x98] sm:$0xff]
        %v2069 = vld [vmem:[#allocation3 + $0xa0] sm:$0xff]
        %v2070 = vld [vmem:[#allocation3 + $0xa8] sm:$0xff]
        %v2071 = vld [vmem:[#allocation3 + $0xb0] sm:$0xff]
        %v2072 = vld [vmem:[#allocation3 + $0xb8] sm:$0xff]
        %v2073 = vld [vmem:[#allocation3 + $0xc0] sm:$0xff]
        %v2074 = vld [vmem:[#allocation3 + $0xc8] sm:$0xff]
        %v2075 = vld [vmem:[#allocation3 + $0xd0] sm:$0xff]
        %v2076 = vld [vmem:[#allocation3 + $0xd8] sm:$0xff]
        %v2077 = vld [vmem:[#allocation3 + $0xe0] sm:$0xff]
        %v2078 = vld [vmem:[#allocation3 + $0xe8] sm:$0xff]
        %v2079 = vld [vmem:[#allocation3 + $0xf0] sm:$0xff]
        %v2080 = vld [vmem:[#allocation3 + $0xf8] sm:$0xff]
        %v2081 = vld [vmem:[#allocation3 + $0x100] sm:$0xff]
        %v2082 = vld [vmem:[#allocation3 + $0x108] sm:$0xff]
        %v2083 = vld [vmem:[#allocation3 + $0x110] sm:$0xff]
        %v2084 = vld [vmem:[#allocation3 + $0x118] sm:$0xff]
        %v2085 = vld [vmem:[#allocation3 + $0x120] sm:$0xff]
        %v2086 = vld [vmem:[#allocation3 + $0x128] sm:$0xff]
        %v2087 = vld [vmem:[#allocation3 + $0x130] sm:$0xff]
        %v2088 = vld [vmem:[#allocation3 + $0x138] sm:$0xff]
        %v2089 = vld [vmem:[#allocation3 + $0x140] sm:$0xff]
        %v2090 = vld [vmem:[#allocation3 + $0x148] sm:$0xff]
        %v2091 = vld [vmem:[#allocation3 + $0x150] sm:$0xff]
        %v2092 = vld [vmem:[#allocation3 + $0x158] sm:$0xff]
        %v2093 = vld [vmem:[#allocation3 + $0x160] sm:$0xff]
        %v2094 = vld [vmem:[#allocation3 + $0x168] sm:$0xff]
        %v2095 = vld [vmem:[#allocation3 + $0x170] sm:$0xff]
        %v2096 = vld [vmem:[#allocation3 + $0x178] sm:$0xff]
        %v2097 = vld [vmem:[#allocation3 + $0x180] sm:$0xff]
        %v2098 = vld [vmem:[#allocation3 + $0x188] sm:$0xff]
        %v2099 = vld [vmem:[#allocation3 + $0x190] sm:$0xff]
        %v2100 = vld [vmem:[#allocation3 + $0x198] sm:$0xff]
        %v2101 = vld [vmem:[#allocation3 + $0x1a0] sm:$0xff]
        %v2102 = vld [vmem:[#allocation3 + $0x1a8] sm:$0xff]
        %v2103 = vld [vmem:[#allocation3 + $0x1b0] sm:$0xff]
        %v2104 = vld [vmem:[#allocation3 + $0x1b8] sm:$0xff]
        %v2105 = vld [vmem:[#allocation3 + $0x1c0] sm:$0xff]
        %v2106 = vld [vmem:[#allocation3 + $0x1c8] sm:$0xff]
        %v2107 = vld [vmem:[#allocation3 + $0x1d0] sm:$0xff]
        %v2108 = vld [vmem:[#allocation3 + $0x1d8] sm:$0xff]
        %v2109 = vld [vmem:[#allocation3 + $0x1e0] sm:$0xff]
        %v2110 = vld [vmem:[#allocation3 + $0x1e8] sm:$0xff]
        %v2111 = vld [vmem:[#allocation3 + $0x1f0] sm:$0xff]
        %v2112 = vld [vmem:[#allocation3 + $0x1f8] sm:$0xff]
        %v2113 = vld [vmem:[#allocation3 + $0x200] sm:$0xff]
        %v2114 = vld [vmem:[#allocation3 + $0x208] sm:$0xff]
        %v2115 = vld [vmem:[#allocation3 + $0x210] sm:$0xff]
        %v2116 = vld [vmem:[#allocation3 + $0x218] sm:$0xff]
        %v2117 = vld [vmem:[#allocation3 + $0x220] sm:$0xff]
        %v2118 = vld [vmem:[#allocation3 + $0x228] sm:$0xff]
        %v2119 = vld [vmem:[#allocation3 + $0x230] sm:$0xff]
        %v2120 = vld [vmem:[#allocation3 + $0x238] sm:$0xff]
        %v2121 = vld [vmem:[#allocation3 + $0x240] sm:$0xff]
        %v2122 = vld [vmem:[#allocation3 + $0x248] sm:$0xff]
        %v2123 = vld [vmem:[#allocation3 + $0x250] sm:$0xff]
        %v2124 = vld [vmem:[#allocation3 + $0x258] sm:$0xff]
        %v2125 = vld [vmem:[#allocation3 + $0x260] sm:$0xff]
        %v2126 = vld [vmem:[#allocation3 + $0x268] sm:$0xff]
        %v2127 = vld [vmem:[#allocation3 + $0x270] sm:$0xff]
        %v2128 = vld [vmem:[#allocation3 + $0x278] sm:$0xff]
        %v2129 = vld [vmem:[#allocation3 + $0x280] sm:$0xff]
        %v2130 = vld [vmem:[#allocation3 + $0x288] sm:$0xff]
        %v2131 = vld [vmem:[#allocation3 + $0x290] sm:$0xff]
        %v2132 = vld [vmem:[#allocation3 + $0x298] sm:$0xff]
        %v2133 = vld [vmem:[#allocation3 + $0x2a0] sm:$0xff]
        %v2134 = vld [vmem:[#allocation3 + $0x2a8] sm:$0xff]
        %v2135 = vld [vmem:[#allocation3 + $0x2b0] sm:$0xff]
        %v2136 = vld [vmem:[#allocation3 + $0x2b8] sm:$0xff]
        %v2137 = vld [vmem:[#allocation3 + $0x2c0] sm:$0xff]
        %v2138 = vld [vmem:[#allocation3 + $0x2c8] sm:$0xff]
        %v2139 = vld [vmem:[#allocation3 + $0x2d0] sm:$0xff]
        %v2140 = vld [vmem:[#allocation3 + $0x2d8] sm:$0xff]
        %v2141 = vld [vmem:[#allocation3 + $0x2e0] sm:$0xff]
        %v2142 = vld [vmem:[#allocation3 + $0x2e8] sm:$0xff]
        %v2143 = vld [vmem:[#allocation3 + $0x2f0] sm:$0xff]
        %v2144 = vld [vmem:[#allocation3 + $0x2f8] sm:$0xff]
        %v2145 = vld [vmem:[#allocation3 + $0x300] sm:$0xff]
        %v2146 = vld [vmem:[#allocation3 + $0x308] sm:$0xff]
        %v2147 = vld [vmem:[#allocation3 + $0x310] sm:$0xff]
        %v2148 = vld [vmem:[#allocation3 + $0x318] sm:$0xff]
        %v2149 = vld [vmem:[#allocation3 + $0x320] sm:$0xff]
        %v2150 = vld [vmem:[#allocation3 + $0x328] sm:$0xff]
        %v2151 = vld [vmem:[#allocation3 + $0x330] sm:$0xff]
        %v2152 = vld [vmem:[#allocation3 + $0x338] sm:$0xff]
        %v2153 = vld [vmem:[#allocation3 + $0x340] sm:$0xff]
        %v2154 = vld [vmem:[#allocation3 + $0x348] sm:$0xff]
        %v2155 = vld [vmem:[#allocation3 + $0x350] sm:$0xff]
        %v2156 = vld [vmem:[#allocation3 + $0x358] sm:$0xff]
        %v2158 = vsel %vm1461, %v2048, 0
        %2160 = vmatprep.subr.mxu0 %v2110
        %2161 = vmatpush1.msra.mxu0 %v2109
        %2162 = vmatprep.subr.mxu0 %v2106
        %2163 = vmatpush1.msra.mxu0 %v2105
        %2164 = vmatprep.subr.mxu0 %v2102
        %2165 = vmatpush1.msra.mxu0 %v2101
        %2166 = vmatprep.subr.mxu0 %v2098
        %2167 = vmatpush1.msra.mxu0 %v2097
        %2168 = vmatprep.subr.mxu0 %v2094
        %2169 = vmatpush1.msra.mxu0 %v2093
        %2170 = vmatprep.subr.mxu0 %v2090
        %2171 = vmatpush1.msra.mxu0 %v2089
        %2172 = vmatprep.subr.mxu0 %v2086
        %2173 = vmatpush1.msra.mxu0 %v2085
        %2174 = vmatprep.subr.mxu0 %v2082
        %2175 = vmatpush1.msra.mxu0 %v2081
        %2176 = vmatprep.subr.mxu0 %v2078
        %2177 = vmatpush1.msra.mxu0 %v2077
        %2178 = vmatprep.subr.mxu0 %v2074
        %2179 = vmatpush1.msra.mxu0 %v2073
        %2180 = vmatprep.subr.mxu0 %v2070
        %2181 = vmatpush1.msra.mxu0 %v2069
        %2182 = vmatprep.subr.mxu0 %v2066
        %2183 = vmatpush1.msra.mxu0 %v2065
        %2184 = vmatprep.subr.mxu0 %v2062
        %2185 = vmatpush1.msra.mxu0 %v2061
        %2186 = vmatprep.subr.mxu0 %v2058
        %2187 = vmatpush1.msra.mxu0 %v2057
        %2188 = vmatprep.subr.mxu0 %v2054
        %2189 = vmatpush1.msra.mxu0 %v2053
        %2190 = vmatprep.subr.mxu0 %v2050
        %2191 = vmatpush1.msra.mxu0 %v2049
        %2192 = vmatprep.subr.mxu0 0.0
        %2193 = vmatpush2.msra.mxu0 0.0
        %2194 = vmatprep.subr.mxu0 0.0
        %2195 = vmatpush2.msra.mxu0 0.0
        %2196 = vmatprep.subr.mxu0 0.0
        %2197 = vmatpush2.msra.mxu0 0.0
        %2198 = vmatprep.subr.mxu0 0.0
        %2199 = vmatpush2.msra.mxu0 0.0
        %2200 = vmatprep.subr.mxu0 0.0
        %2201 = vmatpush2.msra.mxu0 0.0
        %2202 = vmatprep.subr.mxu0 %v2154
        %2203 = vmatpush2.msra.mxu0 %v2153
        %2204 = vmatprep.subr.mxu0 %v2150
        %2205 = vmatpush2.msra.mxu0 %v2149
        %2206 = vmatprep.subr.mxu0 %v2146
        %2207 = vmatpush2.msra.mxu0 %v2145
        %2208 = vmatprep.subr.mxu0 %v2142
        %2209 = vmatpush2.msra.mxu0 %v2141
        %2210 = vmatprep.subr.mxu0 %v2138
        %2211 = vmatpush2.msra.mxu0 %v2137
        %2212 = vmatprep.subr.mxu0 %v2134
        %2213 = vmatpush2.msra.mxu0 %v2133
        %2214 = vmatprep.subr.mxu0 %v2130
        %2215 = vmatpush2.msra.mxu0 %v2129
        %2216 = vmatprep.subr.mxu0 %v2126
        %2217 = vmatpush2.msra.mxu0 %v2125
        %2218 = vmatprep.subr.mxu0 %v2122
        %2219 = vmatpush2.msra.mxu0 %v2121
        %2220 = vmatprep.subr.mxu0 %v2118
        %2221 = vmatpush2.msra.mxu0 %v2117
        %2222 = vmatprep.subr.mxu0 %v2114
        %2223 = vmatpush2.msra.mxu0 %v2113
        %2224 = vmatprep.mubr.f32.mxu0 %v2158
        %2225 = vmatmul.mubr.f32.gmra.mxu0 %v2047
        %v2226 = vpop.f32.mrf.mxu0
        %v2227 = vadd.f32 0.0, %v2226
        %v2228 = vpop.f32.mrf.mxu0
        %v2229 = vadd.f32 0.0, %v2228
        %2230 = vdwg.mxu0
        %2231 = vmatprep.subr.mxu0 %v2112
        %2232 = vmatpush1.msra.mxu0 %v2111
        %2233 = vmatprep.subr.mxu0 %v2108
        %2234 = vmatpush1.msra.mxu0 %v2107
        %2235 = vmatprep.subr.mxu0 %v2104
        %2236 = vmatpush1.msra.mxu0 %v2103
        %2237 = vmatprep.subr.mxu0 %v2100
        %2238 = vmatpush1.msra.mxu0 %v2099
        %2239 = vmatprep.subr.mxu0 %v2096
        %2240 = vmatpush1.msra.mxu0 %v2095
        %2241 = vmatprep.subr.mxu0 %v2092
        %2242 = vmatpush1.msra.mxu0 %v2091
        %2243 = vmatprep.subr.mxu0 %v2088
        %2244 = vmatpush1.msra.mxu0 %v2087
        %2245 = vmatprep.subr.mxu0 %v2084
        %2246 = vmatpush1.msra.mxu0 %v2083
        %2247 = vmatprep.subr.mxu0 %v2080
        %2248 = vmatpush1.msra.mxu0 %v2079
        %2249 = vmatprep.subr.mxu0 %v2076
        %2250 = vmatpush1.msra.mxu0 %v2075
        %2251 = vmatprep.subr.mxu0 %v2072
        %2252 = vmatpush1.msra.mxu0 %v2071
        %2253 = vmatprep.subr.mxu0 %v2068
        %2254 = vmatpush1.msra.mxu0 %v2067
        %2255 = vmatprep.subr.mxu0 %v2064
        %2256 = vmatpush1.msra.mxu0 %v2063
        %2257 = vmatprep.subr.mxu0 %v2060
        %2258 = vmatpush1.msra.mxu0 %v2059
        %2259 = vmatprep.subr.mxu0 %v2056
        %2260 = vmatpush1.msra.mxu0 %v2055
        %2261 = vmatprep.subr.mxu0 %v2052
        %2262 = vmatpush1.msra.mxu0 %v2051
        %2263 = vmatprep.subr.mxu0 0.0
        %2264 = vmatpush2.msra.mxu0 0.0
        %2265 = vmatprep.subr.mxu0 0.0
        %2266 = vmatpush2.msra.mxu0 0.0
        %2267 = vmatprep.subr.mxu0 0.0
        %2268 = vmatpush2.msra.mxu0 0.0
        %2269 = vmatprep.subr.mxu0 0.0
        %2270 = vmatpush2.msra.mxu0 0.0
        %2271 = vmatprep.subr.mxu0 0.0
        %2272 = vmatpush2.msra.mxu0 0.0
        %2273 = vmatprep.subr.mxu0 %v2156
        %2274 = vmatpush2.msra.mxu0 %v2155
        %2275 = vmatprep.subr.mxu0 %v2152
        %2276 = vmatpush2.msra.mxu0 %v2151
        %2277 = vmatprep.subr.mxu0 %v2148
        %2278 = vmatpush2.msra.mxu0 %v2147
        %2279 = vmatprep.subr.mxu0 %v2144
        %2280 = vmatpush2.msra.mxu0 %v2143
        %2281 = vmatprep.subr.mxu0 %v2140
        %2282 = vmatpush2.msra.mxu0 %v2139
        %2283 = vmatprep.subr.mxu0 %v2136
        %2284 = vmatpush2.msra.mxu0 %v2135
        %2285 = vmatprep.subr.mxu0 %v2132
        %2286 = vmatpush2.msra.mxu0 %v2131
        %2287 = vmatprep.subr.mxu0 %v2128
        %2288 = vmatpush2.msra.mxu0 %v2127
        %2289 = vmatprep.subr.mxu0 %v2124
        %2290 = vmatpush2.msra.mxu0 %v2123
        %2291 = vmatprep.subr.mxu0 %v2120
        %2292 = vmatpush2.msra.mxu0 %v2119
        %2293 = vmatprep.subr.mxu0 %v2116
        %2294 = vmatpush2.msra.mxu0 %v2115
        %2295 = vmatprep.mubr.f32.mxu0 %v2158
        %2296 = vmatmul.mubr.f32.gmra.mxu0 %v2047
        %v2297 = vpop.f32.mrf.mxu0
        %v2298 = vadd.f32 0.0, %v2297
        %v2299 = vpop.f32.mrf.mxu0
        %v2300 = vadd.f32 0.0, %v2299
        %2301 = vdwg.mxu0
        %v2302 = vld [vmem:[%s6] sm:$0xff]
        %2304 = vset.pattern.permute.xlu0 0
        %2305 = vperm.xlu0 %2304, %v2302
        %v2306 = vpop.permute.xlu0 %2305
        %v2308 = vmul.f32 %v2227, %v2306
        %v2309 = vmul.f32 %v2229, %v2306
        %v2310 = vmul.f32 %v2298, %v2306
        %v2311 = vmul.f32 %v2300, %v2306
        %v2312 = vld [vmem:[%s7] sm:$0xff]
        %2314 = vset.pattern.permute.xlu0 0
        %2315 = vperm.xlu0 %2314, %v2312
        %v2316 = vpop.permute.xlu0 %2315
        %v2318 = vadd.f32 %v2308, %v2316
        %v2319 = vadd.f32 %v2309, %v2316
        %v2320 = vadd.f32 %v2310, %v2316
        %v2321 = vadd.f32 %v2311, %v2316
        %v2322 = vmax.f32 %v2318, 0.0
        %v2323 = vmax.f32 %v2319, 0.0
        %v2324 = vmax.f32 %v2320, 0.0
        %v2325 = vmax.f32 %v2321, 0.0
        %2326 = vst [vmem:[%s334] sm:$0xff] %v2322
        %2327 = vst [vmem:[%s334 + $0x8] sm:$0xff] %v2323
        %2328 = vst [vmem:[%s334 + $0x10] sm:$0xff] %v2324
        %2329 = vst [vmem:[%s334 + $0x18] sm:$0xff] %v2325
        %s2330 = sand.u32 %s207, 1
        %s2331 = scalar_lea.sflag [#allocation6], %s2330
        %s2332 = sand.u32 %s207, 1
        %s2333 = smul.addr %s2332, 32
        %s2334 = scalar_lea.vmem [#allocation9], %s2333
        // Predicated region
        $region61: #{tpu_custom_call.1} parent=51 // pred_check
          %p2335 = pneg %p217
        $region62: #{tpu_custom_call.1} parent=51 // pred_check_branch
          %2337 = sbr.rel (%p2335) target = $region64
        $region63: #{tpu_custom_call.1} parent=51 // pred_region
          %s2339 = ssub.s32 512, 512
          %2340 = vsyncadd %s2331, %s2339
          %s2341 = smul.addr %s26, 4
          %s2342 = smul.addr %s2341, 128
          %s2343 = scalar_lea.hbm %s8, %s2342
          %s2345 = sshll.u32 %s2334, 4
          %s2346 = int_to_ptr.vmem [resolvable:$true] %s2345
          %2348 = dma.vmem_to_hbm [thread:$0]  %s2346, 512, %s2343, %s2331
        $region64: #{tpu_custom_call.1} parent=51 // pred_fallthru
          _
      $region52: #{tpu_custom_call.1} parent=5 // pred_fallthru
        _
      %p2349 = scmp.le.s32.totalorder 2, %s21
      // Predicated region
      $region65: #{tpu_custom_call.1} parent=5 // pred_check
        %p2350 = pneg %p2349
      $region66: #{tpu_custom_call.1} parent=5 // pred_check_branch
        %2352 = sbr.rel (%p2350) target = $region68
      $region67: #{tpu_custom_call.1} parent=5 // pred_region
        %s2353 = ssub.s32 %s21, 2
        // Predicated region
        $region69: #{tpu_custom_call.1} parent=67 // pred_check
          %p2354 = pneg %p223
        $region70: #{tpu_custom_call.1} parent=67 // pred_check_branch
          %2356 = sbr.rel (%p2354) target = $region72
        $region71: #{tpu_custom_call.1} parent=67 // pred_region
          %s2357 = sand.u32 %s208, 1
          %s2358 = scalar_lea.sflag [#allocation6], %s2357
          %s2359 = sand.u32 %s208, 1
          %s2360 = smul.addr %s2359, 32
          %s2361 = scalar_lea.vmem [#allocation9], %s2360
          %2362 = dma.done %s2358, 512
        $region72: #{tpu_custom_call.1} parent=67 // pred_fallthru
          _
      $region68: #{tpu_custom_call.1} parent=5 // pred_fallthru
        _
    $region6: #{tpu_custom_call.1} parent=1 // loop_footer
      %s25 = sadd.s32 1, %s21
    $region7: #{tpu_custom_call.1} parent=1 // loop_footer_branch
      %20 = sbr.rel target = $region3
    $region8: #{tpu_custom_call.1} parent=1 // loop_exit
      _
    %2363 = vsyncpa [#allocation5], 1
    %s2364 = scalar_lea.sflag [#allocation5], 1
    %2365 = vsyncpa %s2364, 1
    %2366 = vsyncpa [#allocation8], 1
    %2367 = vsyncpa [#allocation6], 1
    %s2368 = scalar_lea.sflag [#allocation6], 1
    %2369 = vsyncpa %s2368, 1

</llo_original>
